<compile_context>
chip_gen: v7x
topology: tpu7x:2x2x1
jax: 0.10.0
libtpu: 0.0.40
codegen_flags: <defaults>
</compile_context>

<pallas_src>
import functools

import jax
import jax.numpy as jnp
from jax import lax
from jax.experimental import pallas as pl
from jax.experimental.pallas import tpu as pltpu


def mlp_kernel(x_ref,
               w1_ref, b1_ref,
               w2_ref, b2_ref,
               w3_ref, b3_ref,
               w4_ref, b4_ref,
               o_ref, *, act_dtype):
    """All four linears + ReLUs fused; one invocation per batch tile."""
    f32 = jnp.float32
    bf16 = jnp.bfloat16

    def dense_relu(h, w_ref, b_ref):
        a = h if h.dtype == bf16 else h.astype(bf16)
        y = jnp.dot(a, w_ref[...], preferred_element_type=f32)
        # Fused bias + ReLU + (optional) bf16 cast of the stored activation.
        return jnp.maximum(y + b_ref[...], 0.0).astype(act_dtype)

    h = dense_relu(x_ref[...], w1_ref, b1_ref)    # (bt, 256)
    h = dense_relu(h, w2_ref, b2_ref)             # (bt, 256)
    h = dense_relu(h, w3_ref, b3_ref)             # (bt, 128)

    # Dropout(0.25) -> identity at inference time.
    # TODO(synk): training-mode dropout masking/scaling not implemented.

    # Final Linear(128, 1): contract h's last dim against the (1,128) w4 row on
    # the MXU (M=1, K=128, N=bt) -> (1, bt), already lane-dense, no transpose.
    a = h if h.dtype == bf16 else h.astype(bf16)
    h4 = lax.dot_general(w4_ref[...], a,
                         dimension_numbers=(((1,), (1,)), ((), ())),
                         preferred_element_type=f32)          # (1, bt)
    o_ref[...] = (h4 + b4_ref[...]).astype(o_ref.dtype)       # lane-dense store


def _activation_dtype():
    """bf16 activations on chips with a bf16 VPU (v6e/v7x); f32 otherwise."""
    try:
        kind = jax.devices()[0].device_kind.lower()
    except Exception:
        return jnp.float32
    if any(v in kind for v in ("v2", "v3", "v4", "v5")):
        return jnp.float32
    return jnp.bfloat16


def _pick_block_b(B):
    """Largest batch tile (<=4096, multiple of 128) dividing B; keep >=2 grid
    steps on v7x (2 TensorCores share the 'parallel' axis)."""
    kind = ""
    try:
        kind = jax.devices()[0].device_kind.lower()
    except Exception:
        pass
    cap = 4096
    if "v7" in kind:
        cap = min(cap, max(128, B // 2))
    for bb in (4096, 2048, 1024, 512, 256, 128):
        if bb <= cap and B % bb == 0:
            return bb
    return B  # tiny / ragged batch: single full-extent step


@functools.partial(jax.jit, static_argnames=("block_b",))
def mlp_forward(x, params, block_b=None):
    B, F = x.shape
    (w1, b1), (w2, b2), (w3, b3), (w4, b4) = params

    if block_b is None:
        block_b = _pick_block_b(B)
    block_b = min(block_b, B)
    assert B % block_b == 0, "pad the batch to a multiple of block_b"
    assert block_b % 128 == 0 or block_b == B

    bf16 = jnp.bfloat16
    act_dtype = _activation_dtype()

    # MXU-layer weights shipped (and held resident) in bf16: halves the
    # one-time weight DMA and uses the native-rate MXU path on v6e/v7x.
    w1b, w2b, w3b = w1.astype(bf16), w2.astype(bf16), w3.astype(bf16)
    w4row = jnp.transpose(w4).astype(bf16)        # (1, 128) row, pre-transposed

    full = lambda a: pl.BlockSpec(a.shape, lambda i: (0, 0))

    d1, d2, d3 = w1.shape[1], w2.shape[1], w3.shape[1]
    flops = 2 * B * (F * d1 + d1 * d2 + d2 * d3 + d3)
    bytes_accessed = (
        B * F * 4 + B * 4                                  # x in, out
        + (F * d1 + d1 * d2 + d2 * d3 + d3) * 2            # bf16 weights
        + (d1 + d2 + d3 + 1) * 4)                          # f32 biases
    cost = pl.CostEstimate(flops=flops, transcendentals=0,
                           bytes_accessed=bytes_accessed)

    # Only raise the scoped VMEM limit when the tile actually needs it; stay
    # well under v7x's 64 MiB physical budget.
    vmem_limit = 48 * 1024 * 1024 if block_b >= 2048 else None

    out = pl.pallas_call(
        functools.partial(mlp_kernel, act_dtype=act_dtype),
        out_shape=jax.ShapeDtypeStruct((1, B), jnp.float32),
        grid_spec=pltpu.PrefetchScalarGridSpec(
            num_scalar_prefetch=0,
            grid=(B // block_b,),
            in_specs=[
                pl.BlockSpec((block_b, F), lambda i: (i, 0)),   # x tile (no pad)
                full(w1b), full(b1),
                full(w2b), full(b2),
                full(w3b), full(b3),
                full(w4row), full(b4),
            ],
            # Lane-dense output: batch on the lane axis, (1, block_b) per step.
            out_specs=pl.BlockSpec((1, block_b), lambda i: (0, i)),
        ),
        compiler_params=pltpu.CompilerParams(
            dimension_semantics=("parallel",),
            vmem_limit_bytes=vmem_limit),
        cost_estimate=cost,
    )(x, w1b, b1, w2b, b2, w3b, b3, w4row, b4)
    return out.reshape(B, 1)


def init_params(key):
    """Deterministic init mirroring nn.Linear default (U[-1/sqrt(fan_in), ...])."""
    dims = [(21, 256), (256, 256), (256, 128), (128, 1)]
    params = []
    for fan_in, fan_out in dims:
        key, kw, kb = jax.random.split(key, 3)
        bound = 1.0 / jnp.sqrt(fan_in)
        # Stored as (in, out) so the kernel computes x @ W (== x @ W_pt.T).
        w = jax.random.uniform(kw, (fan_in, fan_out), jnp.float32, -bound, bound)
        b = jax.random.uniform(kb, (1, fan_out), jnp.float32, -bound, bound)
        params.append((w, b))
    return params


def mlp_reference(x, params, mirror_bf16=True):
    """Reference forward; mirror_bf16=True mimics the kernel's bf16 MXU operands."""
    (w1, b1), (w2, b2), (w3, b3), (w4, b4) = params
    cast = (lambda a: a.astype(jnp.bfloat16)) if mirror_bf16 else (lambda a: a)
    h = x
    for w, b in ((w1, b1), (w2, b2), (w3, b3)):
        h = jnp.dot(cast(h), cast(w), preferred_element_type=jnp.float32) + b
        h = jnp.maximum(h, 0.0)
    return jnp.dot(cast(h), cast(w4), preferred_element_type=jnp.float32) + b4


if __name__ == "__main__":
    key = jax.random.PRNGKey(0)
    kx, kp = jax.random.split(key)

    B, F = 1024, 21                      # Flatten of (B, 21) is a no-op.
    x = jax.random.normal(kx, (B, F), jnp.float32)
    params = init_params(kp)

    out = mlp_forward(x, params)         # block_b auto-picked per chip
    out = jax.block_until_ready(out)
    assert out.shape == (B, 1)

    # Tight check against a reference mirroring the bf16-at-the-MXU math.
    ref_bf16 = mlp_reference(x, params, mirror_bf16=True)
    assert jnp.allclose(out, ref_bf16, atol=5e-3, rtol=5e-3), "mismatch (bf16-mirrored ref)"

    # Loose sanity check against the pure-f32 reference (bf16 operand rounding).
    ref_f32 = mlp_reference(x, params, mirror_bf16=False)
    assert jnp.allclose(out, ref_f32, atol=1e-1, rtol=1e-1), "mismatch (f32 ref)"

    print("KERNEL_OK")
</pallas_src>

<mosaic_0001>
module attributes {stable_mosaic.version = 11 : i64} {
  func.func @mlp_kernel(%arg0: i32, %arg1: memref<1024x21xf32, #tpu.memory_space<vmem>>, %arg2: memref<21x256xbf16, #tpu.memory_space<vmem>>, %arg3: memref<1x256xf32, #tpu.memory_space<vmem>>, %arg4: memref<256x256xbf16, #tpu.memory_space<vmem>>, %arg5: memref<1x256xf32, #tpu.memory_space<vmem>>, %arg6: memref<256x128xbf16, #tpu.memory_space<vmem>>, %arg7: memref<1x128xf32, #tpu.memory_space<vmem>>, %arg8: memref<1x128xbf16, #tpu.memory_space<vmem>>, %arg9: memref<1x1xf32, #tpu.memory_space<vmem>>, %arg10: memref<1x1024xf32, #tpu.memory_space<vmem>>) attributes {dimension_semantics = [#tpu.dimension_semantics<parallel>], iteration_bounds = array<i64: 1>, scalar_prefetch = 0 : i64, scratch_operands = 0 : i64, tpu.core_type = #tpu.core_type<tc>, window_params = [{transform_indices = @transform_0, window_bounds = array<i64: 1024, 21>}, {pipeline_mode = #tpu.pipeline_mode<synchronous>, transform_indices = @transform_1, window_bounds = array<i64: 21, 256>}, {pipeline_mode = #tpu.pipeline_mode<synchronous>, transform_indices = @transform_2, window_bounds = array<i64: 1, 256>}, {pipeline_mode = #tpu.pipeline_mode<synchronous>, transform_indices = @transform_3, window_bounds = array<i64: 256, 256>}, {pipeline_mode = #tpu.pipeline_mode<synchronous>, transform_indices = @transform_4, window_bounds = array<i64: 1, 256>}, {pipeline_mode = #tpu.pipeline_mode<synchronous>, transform_indices = @transform_5, window_bounds = array<i64: 256, 128>}, {pipeline_mode = #tpu.pipeline_mode<synchronous>, transform_indices = @transform_6, window_bounds = array<i64: 1, 128>}, {pipeline_mode = #tpu.pipeline_mode<synchronous>, transform_indices = @transform_7, window_bounds = array<i64: 1, 128>}, {pipeline_mode = #tpu.pipeline_mode<synchronous>, transform_indices = @transform_8, window_bounds = array<i64: 1, 1>}, {transform_indices = @transform_9, window_bounds = array<i64: 1, 1024>}]} {
    %c0 = arith.constant 0 : index
    %c0_0 = arith.constant 0 : index
    %0 = vector.load %arg1[%c0, %c0_0] : memref<1024x21xf32, #tpu.memory_space<vmem>>, vector<1024x21xf32>
    %1 = arith.truncf %0 : vector<1024x21xf32> to vector<1024x21xbf16>
    %c0_1 = arith.constant 0 : index
    %c0_2 = arith.constant 0 : index
    %2 = vector.load %arg2[%c0_1, %c0_2] : memref<21x256xbf16, #tpu.memory_space<vmem>>, vector<21x256xbf16>
    %cst = arith.constant dense<0.000000e+00> : vector<1024x256xf32>
    %3 = tpu.matmul %1, %2, %cst {dimension_numbers = #tpu.dot_dimension_numbers<[1], [0], [0], [1], [0, 0, 1, 1], [], []>} : vector<1024x21xbf16>, vector<21x256xbf16>, vector<1024x256xf32> -> vector<1024x256xf32>
    %c0_3 = arith.constant 0 : index
    %c0_4 = arith.constant 0 : index
    %4 = vector.load %arg3[%c0_3, %c0_4] : memref<1x256xf32, #tpu.memory_space<vmem>>, vector<1x256xf32>
    %5 = vector.broadcast %4 : vector<1x256xf32> to vector<1024x256xf32>
    %6 = arith.addf %3, %5 : vector<1024x256xf32>
    %cst_5 = arith.constant 0.000000e+00 : f32
    %7 = vector.broadcast %cst_5 : f32 to vector<1024x256xf32>
    %8 = arith.maximumf %6, %7 : vector<1024x256xf32>
    %9 = arith.truncf %8 : vector<1024x256xf32> to vector<1024x256xbf16>
    %c0_6 = arith.constant 0 : index
    %c0_7 = arith.constant 0 : index
    %10 = vector.load %arg4[%c0_6, %c0_7] : memref<256x256xbf16, #tpu.memory_space<vmem>>, vector<256x256xbf16>
    %cst_8 = arith.constant dense<0.000000e+00> : vector<1024x256xf32>
    %11 = tpu.matmul %9, %10, %cst_8 {dimension_numbers = #tpu.dot_dimension_numbers<[1], [0], [0], [1], [0, 0, 1, 1], [], []>} : vector<1024x256xbf16>, vector<256x256xbf16>, vector<1024x256xf32> -> vector<1024x256xf32>
    %c0_9 = arith.constant 0 : index
    %c0_10 = arith.constant 0 : index
    %12 = vector.load %arg5[%c0_9, %c0_10] : memref<1x256xf32, #tpu.memory_space<vmem>>, vector<1x256xf32>
    %13 = vector.broadcast %12 : vector<1x256xf32> to vector<1024x256xf32>
    %14 = arith.addf %11, %13 : vector<1024x256xf32>
    %cst_11 = arith.constant 0.000000e+00 : f32
    %15 = vector.broadcast %cst_11 : f32 to vector<1024x256xf32>
    %16 = arith.maximumf %14, %15 : vector<1024x256xf32>
    %17 = arith.truncf %16 : vector<1024x256xf32> to vector<1024x256xbf16>
    %c0_12 = arith.constant 0 : index
    %c0_13 = arith.constant 0 : index
    %18 = vector.load %arg6[%c0_12, %c0_13] : memref<256x128xbf16, #tpu.memory_space<vmem>>, vector<256x128xbf16>
    %cst_14 = arith.constant dense<0.000000e+00> : vector<1024x128xf32>
    %19 = tpu.matmul %17, %18, %cst_14 {dimension_numbers = #tpu.dot_dimension_numbers<[1], [0], [0], [1], [0, 0, 1, 1], [], []>} : vector<1024x256xbf16>, vector<256x128xbf16>, vector<1024x128xf32> -> vector<1024x128xf32>
    %c0_15 = arith.constant 0 : index
    %c0_16 = arith.constant 0 : index
    %20 = vector.load %arg7[%c0_15, %c0_16] : memref<1x128xf32, #tpu.memory_space<vmem>>, vector<1x128xf32>
    %21 = vector.broadcast %20 : vector<1x128xf32> to vector<1024x128xf32>
    %22 = arith.addf %19, %21 : vector<1024x128xf32>
    %cst_17 = arith.constant 0.000000e+00 : f32
    %23 = vector.broadcast %cst_17 : f32 to vector<1024x128xf32>
    %24 = arith.maximumf %22, %23 : vector<1024x128xf32>
    %25 = arith.truncf %24 : vector<1024x128xf32> to vector<1024x128xbf16>
    %c0_18 = arith.constant 0 : index
    %c0_19 = arith.constant 0 : index
    %26 = vector.load %arg8[%c0_18, %c0_19] : memref<1x128xbf16, #tpu.memory_space<vmem>>, vector<1x128xbf16>
    %cst_20 = arith.constant dense<0.000000e+00> : vector<1x1024xf32>
    %27 = tpu.matmul %26, %25, %cst_20 {dimension_numbers = #tpu.dot_dimension_numbers<[1], [1], [0], [0], [0, 0, 1, 0], [], []>} : vector<1x128xbf16>, vector<1024x128xbf16>, vector<1x1024xf32> -> vector<1x1024xf32>
    %c0_21 = arith.constant 0 : index
    %c0_22 = arith.constant 0 : index
    %28 = vector.load %arg9[%c0_21, %c0_22] : memref<1x1xf32, #tpu.memory_space<vmem>>, vector<1x1xf32>
    %29 = vector.broadcast %28 : vector<1x1xf32> to vector<1x1024xf32>
    %30 = arith.addf %27, %29 : vector<1x1024xf32>
    %c0_23 = arith.constant 0 : index
    %c0_24 = arith.constant 0 : index
    %31 = vector.load %arg10[%c0_23, %c0_24] : memref<1x1024xf32, #tpu.memory_space<vmem>>, vector<1x1024xf32>
    tpu.vector_store %arg10[%c0_23, %c0_24], %30 {strides = array<i32>} : memref<1x1024xf32, #tpu.memory_space<vmem>>, vector<1x1024xf32>,
    return
  }
  func.func @transform_0(%arg0: i32) -> (i32, i32) {
    %c0_i32 = arith.constant 0 : i32
    %c0_i32_0 = arith.constant 0 : i32
    return %arg0, %c0_i32 : i32, i32
  }
  func.func @transform_1(%arg0: i32) -> (i32, i32) {
    %c0_i32 = arith.constant 0 : i32
    %c0_i32_0 = arith.constant 0 : i32
    %c0_i32_1 = arith.constant 0 : i32
    return %c0_i32, %c0_i32_0 : i32, i32
  }
  func.func @transform_2(%arg0: i32) -> (i32, i32) {
    %c0_i32 = arith.constant 0 : i32
    %c0_i32_0 = arith.constant 0 : i32
    %c0_i32_1 = arith.constant 0 : i32
    return %c0_i32, %c0_i32_0 : i32, i32
  }
  func.func @transform_3(%arg0: i32) -> (i32, i32) {
    %c0_i32 = arith.constant 0 : i32
    %c0_i32_0 = arith.constant 0 : i32
    %c0_i32_1 = arith.constant 0 : i32
    return %c0_i32, %c0_i32_0 : i32, i32
  }
  func.func @transform_4(%arg0: i32) -> (i32, i32) {
    %c0_i32 = arith.constant 0 : i32
    %c0_i32_0 = arith.constant 0 : i32
    %c0_i32_1 = arith.constant 0 : i32
    return %c0_i32, %c0_i32_0 : i32, i32
  }
  func.func @transform_5(%arg0: i32) -> (i32, i32) {
    %c0_i32 = arith.constant 0 : i32
    %c0_i32_0 = arith.constant 0 : i32
    %c0_i32_1 = arith.constant 0 : i32
    return %c0_i32, %c0_i32_0 : i32, i32
  }
  func.func @transform_6(%arg0: i32) -> (i32, i32) {
    %c0_i32 = arith.constant 0 : i32
    %c0_i32_0 = arith.constant 0 : i32
    %c0_i32_1 = arith.constant 0 : i32
    return %c0_i32, %c0_i32_0 : i32, i32
  }
  func.func @transform_7(%arg0: i32) -> (i32, i32) {
    %c0_i32 = arith.constant 0 : i32
    %c0_i32_0 = arith.constant 0 : i32
    %c0_i32_1 = arith.constant 0 : i32
    return %c0_i32, %c0_i32_0 : i32, i32
  }
  func.func @transform_8(%arg0: i32) -> (i32, i32) {
    %c0_i32 = arith.constant 0 : i32
    %c0_i32_0 = arith.constant 0 : i32
    %c0_i32_1 = arith.constant 0 : i32
    return %c0_i32, %c0_i32_0 : i32, i32
  }
  func.func @transform_9(%arg0: i32) -> (i32, i32) {
    %c0_i32 = arith.constant 0 : i32
    %c0_i32_0 = arith.constant 0 : i32
    return %c0_i32, %arg0 : i32, i32
  }
}

</mosaic_0001>

<llo_original>
// kernel: mlp_forward.1
$region0: #{mlp_forward.1}
  #allocation0 [shape = 'u32[]', space=smem, size = 0x4, offset = 0x4, fixed_abs, tag = 'smem constant byte address 0x4 - core index']
  #allocation1 [shape = 'u32[144,128]{1,0:T(1,128)}', space=vmem, size = 0x12000, scoped, tag = 'internal scratch']
  #allocation2 [shape = 'f32[1,1]{1,0:T(1,128)S(1)}', space=vmem, size = 0x200, scoped, tag = 'scoped memory for mlp_forward.1']
  %s0 = inlined_call_operand.vmem [shape: f32[1024,21], index: 0, kind: input, shape index: {}]
  %s1 = inlined_call_operand.vmem [shape: bf16[21,256], index: 1, kind: input, shape index: {}]
  %s2 = inlined_call_operand.vmem [shape: f32[1,256], index: 2, kind: input, shape index: {}]
  %s3 = inlined_call_operand.vmem [shape: bf16[256,256], index: 3, kind: input, shape index: {}]
  %s4 = inlined_call_operand.vmem [shape: f32[1,256], index: 4, kind: input, shape index: {}]
  %s5 = inlined_call_operand.vmem [shape: bf16[256,128], index: 5, kind: input, shape index: {}]
  %s6 = inlined_call_operand.vmem [shape: f32[1,128], index: 6, kind: input, shape index: {}]
  %s7 = inlined_call_operand.vmem [shape: bf16[1,128], index: 7, kind: input, shape index: {}]
  %s8 = inlined_call_operand.<no memory space> [shape: f32[1,1], index: 8, kind: input, shape index: {}]
  %s9 = inlined_call_operand.hbm [shape: f32[1,1024], index: 9, kind: output, shape index: {}]
  %s10 = sld [smem:[#allocation0]]
  $region46: #{mlp_forward.1} parent=0
    _
  %s12 = ssub.s32 1, %s10
  %s13 = scalar_select 0, %s12, %s10
  %v14 = vstv %s8
  %15 = vst [vmem:[#allocation2] sm:$0x1] %v14
  $region1: #{mlp_forward.1} parent=0
    #allocation3 [shape = 'u8[4096]{0}', space=vmem, size = 0x1000, scoped, tag = 'output window, operand 0, single buffered']
    #allocation4 [shape = 's32[1]{0}', space=sflag, size = 0x4, scoped, tag = 'scoped memory for mlp_forward.1']
    %16 = vsyncpa [#allocation4], 0
    // Predicated region
    $region2: #{mlp_forward.1} parent=1 // pred_check
      _
    $region3: #{mlp_forward.1} parent=1 // pred_check_branch
      %18 = sbr.rel (0) target = $region5
    $region4: #{mlp_forward.1} parent=1 // pred_region
      _
    $region5: #{mlp_forward.1} parent=1 // pred_fallthru
      _
    // Predicated region
    $region6: #{mlp_forward.1} parent=1 // pred_check
      _
    $region7: #{mlp_forward.1} parent=1 // pred_check_branch
      %20 = sbr.rel (0) target = $region9
    $region8: #{mlp_forward.1} parent=1 // pred_region
      _
    $region9: #{mlp_forward.1} parent=1 // pred_fallthru
      _
    // Predicated region
    $region10: #{mlp_forward.1} parent=1 // pred_check
      _
    $region11: #{mlp_forward.1} parent=1 // pred_check_branch
      %22 = sbr.rel (0) target = $region13
    $region12: #{mlp_forward.1} parent=1 // pred_region
      _
    $region13: #{mlp_forward.1} parent=1 // pred_fallthru
      _
    // Predicated region
    $region14: #{mlp_forward.1} parent=1 // pred_check
      _
    $region15: #{mlp_forward.1} parent=1 // pred_check_branch
      %24 = sbr.rel (0) target = $region17
    $region16: #{mlp_forward.1} parent=1 // pred_region
      _
    $region17: #{mlp_forward.1} parent=1 // pred_fallthru
      _
    // Predicated region
    $region18: #{mlp_forward.1} parent=1 // pred_check
      _
    $region19: #{mlp_forward.1} parent=1 // pred_check_branch
      %26 = sbr.rel (0) target = $region21
    $region20: #{mlp_forward.1} parent=1 // pred_region
      _
    $region21: #{mlp_forward.1} parent=1 // pred_fallthru
      _
    // Predicated region
    $region22: #{mlp_forward.1} parent=1 // pred_check
      _
    $region23: #{mlp_forward.1} parent=1 // pred_check_branch
      %28 = sbr.rel (0) target = $region25
    $region24: #{mlp_forward.1} parent=1 // pred_region
      _
    $region25: #{mlp_forward.1} parent=1 // pred_fallthru
      _
    // Predicated region
    $region26: #{mlp_forward.1} parent=1 // pred_check
      _
    $region27: #{mlp_forward.1} parent=1 // pred_check_branch
      %30 = sbr.rel (0) target = $region29
    $region28: #{mlp_forward.1} parent=1 // pred_region
      _
    $region29: #{mlp_forward.1} parent=1 // pred_fallthru
      _
    // Predicated region
    $region30: #{mlp_forward.1} parent=1 // pred_check
      _
    $region31: #{mlp_forward.1} parent=1 // pred_check_branch
      %32 = sbr.rel (0) target = $region33
    $region32: #{mlp_forward.1} parent=1 // pred_region
      _
    $region33: #{mlp_forward.1} parent=1 // pred_fallthru
      _
    // Predicated region
    $region34: #{mlp_forward.1} parent=1 // pred_check
      _
    $region35: #{mlp_forward.1} parent=1 // pred_check_branch
      %34 = sbr.rel (0) target = $region37
    $region36: #{mlp_forward.1} parent=1 // pred_region
      _
    $region37: #{mlp_forward.1} parent=1 // pred_fallthru
      _
    %v36 = vld [vmem:[%s0] sm:$0xff]
    %v37 = vld [vmem:[%s0 + $0x8] sm:$0xff]
    %v38 = vld [vmem:[%s0 + $0x10] sm:$0xff]
    %v39 = vld [vmem:[%s0 + $0x18] sm:$0xff]
    %v40 = vld [vmem:[%s0 + $0x20] sm:$0xff]
    %v41 = vld [vmem:[%s0 + $0x28] sm:$0xff]
    %v42 = vld [vmem:[%s0 + $0x30] sm:$0xff]
    %v43 = vld [vmem:[%s0 + $0x38] sm:$0xff]
    %v44 = vld [vmem:[%s0 + $0x40] sm:$0xff]
    %v45 = vld [vmem:[%s0 + $0x48] sm:$0xff]
    %v46 = vld [vmem:[%s0 + $0x50] sm:$0xff]
    %v47 = vld [vmem:[%s0 + $0x58] sm:$0xff]
    %v48 = vld [vmem:[%s0 + $0x60] sm:$0xff]
    %v49 = vld [vmem:[%s0 + $0x68] sm:$0xff]
    %v50 = vld [vmem:[%s0 + $0x70] sm:$0xff]
    %v51 = vld [vmem:[%s0 + $0x78] sm:$0xff]
    %v52 = vld [vmem:[%s0 + $0x80] sm:$0xff]
    %v53 = vld [vmem:[%s0 + $0x88] sm:$0xff]
    %v54 = vld [vmem:[%s0 + $0x90] sm:$0xff]
    %v55 = vld [vmem:[%s0 + $0x98] sm:$0xff]
    %v56 = vld [vmem:[%s0 + $0xa0] sm:$0xff]
    %v57 = vld [vmem:[%s0 + $0xa8] sm:$0xff]
    %v58 = vld [vmem:[%s0 + $0xb0] sm:$0xff]
    %v59 = vld [vmem:[%s0 + $0xb8] sm:$0xff]
    %v60 = vld [vmem:[%s0 + $0xc0] sm:$0xff]
    %v61 = vld [vmem:[%s0 + $0xc8] sm:$0xff]
    %v62 = vld [vmem:[%s0 + $0xd0] sm:$0xff]
    %v63 = vld [vmem:[%s0 + $0xd8] sm:$0xff]
    %v64 = vld [vmem:[%s0 + $0xe0] sm:$0xff]
    %v65 = vld [vmem:[%s0 + $0xe8] sm:$0xff]
    %v66 = vld [vmem:[%s0 + $0xf0] sm:$0xff]
    %v67 = vld [vmem:[%s0 + $0xf8] sm:$0xff]
    %v68 = vld [vmem:[%s0 + $0x100] sm:$0xff]
    %v69 = vld [vmem:[%s0 + $0x108] sm:$0xff]
    %v70 = vld [vmem:[%s0 + $0x110] sm:$0xff]
    %v71 = vld [vmem:[%s0 + $0x118] sm:$0xff]
    %v72 = vld [vmem:[%s0 + $0x120] sm:$0xff]
    %v73 = vld [vmem:[%s0 + $0x128] sm:$0xff]
    %v74 = vld [vmem:[%s0 + $0x130] sm:$0xff]
    %v75 = vld [vmem:[%s0 + $0x138] sm:$0xff]
    %v76 = vld [vmem:[%s0 + $0x140] sm:$0xff]
    %v77 = vld [vmem:[%s0 + $0x148] sm:$0xff]
    %v78 = vld [vmem:[%s0 + $0x150] sm:$0xff]
    %v79 = vld [vmem:[%s0 + $0x158] sm:$0xff]
    %v80 = vld [vmem:[%s0 + $0x160] sm:$0xff]
    %v81 = vld [vmem:[%s0 + $0x168] sm:$0xff]
    %v82 = vld [vmem:[%s0 + $0x170] sm:$0xff]
    %v83 = vld [vmem:[%s0 + $0x178] sm:$0xff]
    %v84 = vld [vmem:[%s0 + $0x180] sm:$0xff]
    %v85 = vld [vmem:[%s0 + $0x188] sm:$0xff]
    %v86 = vld [vmem:[%s0 + $0x190] sm:$0xff]
    %v87 = vld [vmem:[%s0 + $0x198] sm:$0xff]
    %v88 = vld [vmem:[%s0 + $0x1a0] sm:$0xff]
    %v89 = vld [vmem:[%s0 + $0x1a8] sm:$0xff]
    %v90 = vld [vmem:[%s0 + $0x1b0] sm:$0xff]
    %v91 = vld [vmem:[%s0 + $0x1b8] sm:$0xff]
    %v92 = vld [vmem:[%s0 + $0x1c0] sm:$0xff]
    %v93 = vld [vmem:[%s0 + $0x1c8] sm:$0xff]
    %v94 = vld [vmem:[%s0 + $0x1d0] sm:$0xff]
    %v95 = vld [vmem:[%s0 + $0x1d8] sm:$0xff]
    %v96 = vld [vmem:[%s0 + $0x1e0] sm:$0xff]
    %v97 = vld [vmem:[%s0 + $0x1e8] sm:$0xff]
    %v98 = vld [vmem:[%s0 + $0x1f0] sm:$0xff]
    %v99 = vld [vmem:[%s0 + $0x1f8] sm:$0xff]
    %v100 = vld [vmem:[%s0 + $0x200] sm:$0xff]
    %v101 = vld [vmem:[%s0 + $0x208] sm:$0xff]
    %v102 = vld [vmem:[%s0 + $0x210] sm:$0xff]
    %v103 = vld [vmem:[%s0 + $0x218] sm:$0xff]
    %v104 = vld [vmem:[%s0 + $0x220] sm:$0xff]
    %v105 = vld [vmem:[%s0 + $0x228] sm:$0xff]
    %v106 = vld [vmem:[%s0 + $0x230] sm:$0xff]
    %v107 = vld [vmem:[%s0 + $0x238] sm:$0xff]
    %v108 = vld [vmem:[%s0 + $0x240] sm:$0xff]
    %v109 = vld [vmem:[%s0 + $0x248] sm:$0xff]
    %v110 = vld [vmem:[%s0 + $0x250] sm:$0xff]
    %v111 = vld [vmem:[%s0 + $0x258] sm:$0xff]
    %v112 = vld [vmem:[%s0 + $0x260] sm:$0xff]
    %v113 = vld [vmem:[%s0 + $0x268] sm:$0xff]
    %v114 = vld [vmem:[%s0 + $0x270] sm:$0xff]
    %v115 = vld [vmem:[%s0 + $0x278] sm:$0xff]
    %v116 = vld [vmem:[%s0 + $0x280] sm:$0xff]
    %v117 = vld [vmem:[%s0 + $0x288] sm:$0xff]
    %v118 = vld [vmem:[%s0 + $0x290] sm:$0xff]
    %v119 = vld [vmem:[%s0 + $0x298] sm:$0xff]
    %v120 = vld [vmem:[%s0 + $0x2a0] sm:$0xff]
    %v121 = vld [vmem:[%s0 + $0x2a8] sm:$0xff]
    %v122 = vld [vmem:[%s0 + $0x2b0] sm:$0xff]
    %v123 = vld [vmem:[%s0 + $0x2b8] sm:$0xff]
    %v124 = vld [vmem:[%s0 + $0x2c0] sm:$0xff]
    %v125 = vld [vmem:[%s0 + $0x2c8] sm:$0xff]
    %v126 = vld [vmem:[%s0 + $0x2d0] sm:$0xff]
    %v127 = vld [vmem:[%s0 + $0x2d8] sm:$0xff]
    %v128 = vld [vmem:[%s0 + $0x2e0] sm:$0xff]
    %v129 = vld [vmem:[%s0 + $0x2e8] sm:$0xff]
    %v130 = vld [vmem:[%s0 + $0x2f0] sm:$0xff]
    %v131 = vld [vmem:[%s0 + $0x2f8] sm:$0xff]
    %v132 = vld [vmem:[%s0 + $0x300] sm:$0xff]
    %v133 = vld [vmem:[%s0 + $0x308] sm:$0xff]
    %v134 = vld [vmem:[%s0 + $0x310] sm:$0xff]
    %v135 = vld [vmem:[%s0 + $0x318] sm:$0xff]
    %v136 = vld [vmem:[%s0 + $0x320] sm:$0xff]
    %v137 = vld [vmem:[%s0 + $0x328] sm:$0xff]
    %v138 = vld [vmem:[%s0 + $0x330] sm:$0xff]
    %v139 = vld [vmem:[%s0 + $0x338] sm:$0xff]
    %v140 = vld [vmem:[%s0 + $0x340] sm:$0xff]
    %v141 = vld [vmem:[%s0 + $0x348] sm:$0xff]
    %v142 = vld [vmem:[%s0 + $0x350] sm:$0xff]
    %v143 = vld [vmem:[%s0 + $0x358] sm:$0xff]
    %v144 = vld [vmem:[%s0 + $0x360] sm:$0xff]
    %v145 = vld [vmem:[%s0 + $0x368] sm:$0xff]
    %v146 = vld [vmem:[%s0 + $0x370] sm:$0xff]
    %v147 = vld [vmem:[%s0 + $0x378] sm:$0xff]
    %v148 = vld [vmem:[%s0 + $0x380] sm:$0xff]
    %v149 = vld [vmem:[%s0 + $0x388] sm:$0xff]
    %v150 = vld [vmem:[%s0 + $0x390] sm:$0xff]
    %v151 = vld [vmem:[%s0 + $0x398] sm:$0xff]
    %v152 = vld [vmem:[%s0 + $0x3a0] sm:$0xff]
    %v153 = vld [vmem:[%s0 + $0x3a8] sm:$0xff]
    %v154 = vld [vmem:[%s0 + $0x3b0] sm:$0xff]
    %v155 = vld [vmem:[%s0 + $0x3b8] sm:$0xff]
    %v156 = vld [vmem:[%s0 + $0x3c0] sm:$0xff]
    %v157 = vld [vmem:[%s0 + $0x3c8] sm:$0xff]
    %v158 = vld [vmem:[%s0 + $0x3d0] sm:$0xff]
    %v159 = vld [vmem:[%s0 + $0x3d8] sm:$0xff]
    %v160 = vld [vmem:[%s0 + $0x3e0] sm:$0xff]
    %v161 = vld [vmem:[%s0 + $0x3e8] sm:$0xff]
    %v162 = vld [vmem:[%s0 + $0x3f0] sm:$0xff]
    %v163 = vld [vmem:[%s0 + $0x3f8] sm:$0xff]
    %v164 = vpack.c.bf16 %v37, %v36
    %v165 = vpack.c.bf16 %v39, %v38
    %v166 = vpack.c.bf16 %v41, %v40
    %v167 = vpack.c.bf16 %v43, %v42
    %v168 = vpack.c.bf16 %v45, %v44
    %v169 = vpack.c.bf16 %v47, %v46
    %v170 = vpack.c.bf16 %v49, %v48
    %v171 = vpack.c.bf16 %v51, %v50
    %v172 = vpack.c.bf16 %v53, %v52
    %v173 = vpack.c.bf16 %v55, %v54
    %v174 = vpack.c.bf16 %v57, %v56
    %v175 = vpack.c.bf16 %v59, %v58
    %v176 = vpack.c.bf16 %v61, %v60
    %v177 = vpack.c.bf16 %v63, %v62
    %v178 = vpack.c.bf16 %v65, %v64
    %v179 = vpack.c.bf16 %v67, %v66
    %v180 = vpack.c.bf16 %v69, %v68
    %v181 = vpack.c.bf16 %v71, %v70
    %v182 = vpack.c.bf16 %v73, %v72
    %v183 = vpack.c.bf16 %v75, %v74
    %v184 = vpack.c.bf16 %v77, %v76
    %v185 = vpack.c.bf16 %v79, %v78
    %v186 = vpack.c.bf16 %v81, %v80
    %v187 = vpack.c.bf16 %v83, %v82
    %v188 = vpack.c.bf16 %v85, %v84
    %v189 = vpack.c.bf16 %v87, %v86
    %v190 = vpack.c.bf16 %v89, %v88
    %v191 = vpack.c.bf16 %v91, %v90
    %v192 = vpack.c.bf16 %v93, %v92
    %v193 = vpack.c.bf16 %v95, %v94
    %v194 = vpack.c.bf16 %v97, %v96
    %v195 = vpack.c.bf16 %v99, %v98
    %v196 = vpack.c.bf16 %v101, %v100
    %v197 = vpack.c.bf16 %v103, %v102
    %v198 = vpack.c.bf16 %v105, %v104
    %v199 = vpack.c.bf16 %v107, %v106
    %v200 = vpack.c.bf16 %v109, %v108
    %v201 = vpack.c.bf16 %v111, %v110
    %v202 = vpack.c.bf16 %v113, %v112
    %v203 = vpack.c.bf16 %v115, %v114
    %v204 = vpack.c.bf16 %v117, %v116
    %v205 = vpack.c.bf16 %v119, %v118
    %v206 = vpack.c.bf16 %v121, %v120
    %v207 = vpack.c.bf16 %v123, %v122
    %v208 = vpack.c.bf16 %v125, %v124
    %v209 = vpack.c.bf16 %v127, %v126
    %v210 = vpack.c.bf16 %v129, %v128
    %v211 = vpack.c.bf16 %v131, %v130
    %v212 = vpack.c.bf16 %v133, %v132
    %v213 = vpack.c.bf16 %v135, %v134
    %v214 = vpack.c.bf16 %v137, %v136
    %v215 = vpack.c.bf16 %v139, %v138
    %v216 = vpack.c.bf16 %v141, %v140
    %v217 = vpack.c.bf16 %v143, %v142
    %v218 = vpack.c.bf16 %v145, %v144
    %v219 = vpack.c.bf16 %v147, %v146
    %v220 = vpack.c.bf16 %v149, %v148
    %v221 = vpack.c.bf16 %v151, %v150
    %v222 = vpack.c.bf16 %v153, %v152
    %v223 = vpack.c.bf16 %v155, %v154
    %v224 = vpack.c.bf16 %v157, %v156
    %v225 = vpack.c.bf16 %v159, %v158
    %v226 = vpack.c.bf16 %v161, %v160
    %v227 = vpack.c.bf16 %v163, %v162
    %v228 = vld [vmem:[%s1] sm:$0xff]
    %v229 = vld [vmem:[%s1 + $0x8] sm:$0xff]
    %v230 = vld [vmem:[%s1 + $0x10] sm:$0x77]
    %v231 = vld [vmem:[%s2] sm:$0x3]
    %v233 = vlaneseq
    %v234 = vshrl.u32 %v233, 7
    %v235 = vsub.s32 0, %v234
    %v236 = vrot.slane %v231, %v235
    %v237 = vlaneseq
    %v238 = vshrl.u32 %v237, 7
    %v239 = vsub.s32 1, %v238
    %v240 = vrot.slane %v231, %v239
    %v246 = vunpack.c.l.b16 %v228
    %v247 = vunpack.c.h.b16 %v228
    %v248 = vunpack.c.l.b16 %v229
    %v249 = vunpack.c.h.b16 %v229
    %v250 = vunpack.c.l.b16 %v230
    %v251 = vunpack.c.h.b16 %v230
    %v252 = vpack.c.b16 %v248, %v246
    %v253 = vpack.c.b16 %v249, %v247
    %v254 = vpack.c.b16 %v250, %v250
    %v255 = vpack.c.b16 %v251, %v251
    %vm258 = vcmask 171008
    %v260 = vsel %vm258, %v164, 0
    %v263 = vsel %vm258, %v165, 0
    %v266 = vsel %vm258, %v166, 0
    %v269 = vsel %vm258, %v167, 0
    %v272 = vsel %vm258, %v168, 0
    %v275 = vsel %vm258, %v169, 0
    %v278 = vsel %vm258, %v170, 0
    %v281 = vsel %vm258, %v171, 0
    %v284 = vsel %vm258, %v172, 0
    %v287 = vsel %vm258, %v173, 0
    %v290 = vsel %vm258, %v174, 0
    %v293 = vsel %vm258, %v175, 0
    %v296 = vsel %vm258, %v176, 0
    %v299 = vsel %vm258, %v177, 0
    %v302 = vsel %vm258, %v178, 0
    %v305 = vsel %vm258, %v179, 0
    %v308 = vsel %vm258, %v180, 0
    %v311 = vsel %vm258, %v181, 0
    %v314 = vsel %vm258, %v182, 0
    %v317 = vsel %vm258, %v183, 0
    %v320 = vsel %vm258, %v184, 0
    %v323 = vsel %vm258, %v185, 0
    %v326 = vsel %vm258, %v186, 0
    %v329 = vsel %vm258, %v187, 0
    %v332 = vsel %vm258, %v188, 0
    %v335 = vsel %vm258, %v189, 0
    %v338 = vsel %vm258, %v190, 0
    %v341 = vsel %vm258, %v191, 0
    %v344 = vsel %vm258, %v192, 0
    %v347 = vsel %vm258, %v193, 0
    %v350 = vsel %vm258, %v194, 0
    %v353 = vsel %vm258, %v195, 0
    %v356 = vsel %vm258, %v196, 0
    %v359 = vsel %vm258, %v197, 0
    %v362 = vsel %vm258, %v198, 0
    %v365 = vsel %vm258, %v199, 0
    %v368 = vsel %vm258, %v200, 0
    %v371 = vsel %vm258, %v201, 0
    %v374 = vsel %vm258, %v202, 0
    %v377 = vsel %vm258, %v203, 0
    %v380 = vsel %vm258, %v204, 0
    %v383 = vsel %vm258, %v205, 0
    %v386 = vsel %vm258, %v206, 0
    %v389 = vsel %vm258, %v207, 0
    %v392 = vsel %vm258, %v208, 0
    %v395 = vsel %vm258, %v209, 0
    %v398 = vsel %vm258, %v210, 0
    %v401 = vsel %vm258, %v211, 0
    %v404 = vsel %vm258, %v212, 0
    %v407 = vsel %vm258, %v213, 0
    %v410 = vsel %vm258, %v214, 0
    %v413 = vsel %vm258, %v215, 0
    %v416 = vsel %vm258, %v216, 0
    %v419 = vsel %vm258, %v217, 0
    %v422 = vsel %vm258, %v218, 0
    %v425 = vsel %vm258, %v219, 0
    %v428 = vsel %vm258, %v220, 0
    %v431 = vsel %vm258, %v221, 0
    %v434 = vsel %vm258, %v222, 0
    %v437 = vsel %vm258, %v223, 0
    %v440 = vsel %vm258, %v224, 0
    %v443 = vsel %vm258, %v225, 0
    %v446 = vsel %vm258, %v226, 0
    %v449 = vsel %vm258, %v227, 0
    %vm451 = vcmask 1041408
    %vm452 = vcmask 1042432
    %v453 = vsel %vm451, 4294967295, 65535
    %v454 = vsel %vm452, %v453, 0
    %v456 = vand.u32 %v254, %v454
    %v459 = vand.u32 %v255, %v454
    %461 = vmatprep.subr.bf16.mxu0 %v253
    %462 = vmatpush1.bf16.msra.mxu0 %v252
    %463 = vmatprep.subr.bf16.mxu0 %v459
    %464 = vmatpush1.bf16.msra.mxu0 %v456
    %465 = vmatprep.subr.bf16.mxu0 0
    %466 = vmatpush1.bf16.msra.mxu0 0
    %467 = vmatprep.subr.bf16.mxu0 0
    %468 = vmatpush1.bf16.msra.mxu0 0
    %469 = vmatprep.subr.bf16.mxu0 0
    %470 = vmatpush1.bf16.msra.mxu0 0
    %471 = vmatprep.subr.bf16.mxu0 0
    %472 = vmatpush1.bf16.msra.mxu0 0
    %473 = vmatprep.subr.bf16.mxu0 0
    %474 = vmatpush1.bf16.msra.mxu0 0
    %475 = vmatprep.subr.bf16.mxu0 0
    %476 = vmatpush1.bf16.msra.mxu0 0
    %477 = vmatprep.subr.bf16.mxu0 0
    %478 = vmatpush1.bf16.msra.mxu0 0
    %479 = vmatprep.subr.bf16.mxu0 0
    %480 = vmatpush1.bf16.msra.mxu0 0
    %481 = vmatprep.subr.bf16.mxu0 0
    %482 = vmatpush1.bf16.msra.mxu0 0
    %483 = vmatprep.subr.bf16.mxu0 0
    %484 = vmatpush1.bf16.msra.mxu0 0
    %485 = vmatprep.subr.bf16.mxu0 0
    %486 = vmatpush1.bf16.msra.mxu0 0
    %487 = vmatprep.subr.bf16.mxu0 0
    %488 = vmatpush1.bf16.msra.mxu0 0
    %489 = vmatprep.subr.bf16.mxu0 0
    %490 = vmatpush1.bf16.msra.mxu0 0
    %491 = vmatprep.subr.bf16.mxu0 0
    %492 = vmatpush1.bf16.msra.mxu0 0
    %493 = vmatprep.mubr.bf16.mxu0 0
    %494 = vmatmul.mubr.bf16.gmra.mrb[0].mxu0 %v260
    %v495 = vpop.f32.mrb[0].mxu0
    %v496 = vadd.f32 %v236, %v495
    %v497 = vpop.f32.mrb[0].mxu0
    %v498 = vadd.f32 %v240, %v497
    %v499 = vpop.f32.mrb[0].mxu0
    %v500 = vadd.f32 %v236, %v499
    %v501 = vpop.f32.mrb[0].mxu0
    %v502 = vadd.f32 %v240, %v501
    %503 = vmatprep.mubr.bf16.mxu0 0
    %504 = vmatmul.mubr.bf16.gmra.mrb[0].mxu0 %v263
    %v505 = vpop.f32.mrb[0].mxu0
    %v506 = vadd.f32 %v236, %v505
    %v507 = vpop.f32.mrb[0].mxu0
    %v508 = vadd.f32 %v240, %v507
    %v509 = vpop.f32.mrb[0].mxu0
    %v510 = vadd.f32 %v236, %v509
    %v511 = vpop.f32.mrb[0].mxu0
    %v512 = vadd.f32 %v240, %v511
    %513 = vmatprep.mubr.bf16.mxu0 0
    %514 = vmatmul.mubr.bf16.gmra.mrb[0].mxu0 %v266
    %v515 = vpop.f32.mrb[0].mxu0
    %v516 = vadd.f32 %v236, %v515
    %v517 = vpop.f32.mrb[0].mxu0
    %v518 = vadd.f32 %v240, %v517
    %v519 = vpop.f32.mrb[0].mxu0
    %v520 = vadd.f32 %v236, %v519
    %v521 = vpop.f32.mrb[0].mxu0
    %v522 = vadd.f32 %v240, %v521
    %523 = vmatprep.mubr.bf16.mxu0 0
    %524 = vmatmul.mubr.bf16.gmra.mrb[0].mxu0 %v269
    %v525 = vpop.f32.mrb[0].mxu0
    %v526 = vadd.f32 %v236, %v525
    %v527 = vpop.f32.mrb[0].mxu0
    %v528 = vadd.f32 %v240, %v527
    %v529 = vpop.f32.mrb[0].mxu0
    %v530 = vadd.f32 %v236, %v529
    %v531 = vpop.f32.mrb[0].mxu0
    %v532 = vadd.f32 %v240, %v531
    %533 = vmatprep.mubr.bf16.mxu0 0
    %534 = vmatmul.mubr.bf16.gmra.mrb[0].mxu0 %v272
    %v535 = vpop.f32.mrb[0].mxu0
    %v536 = vadd.f32 %v236, %v535
    %v537 = vpop.f32.mrb[0].mxu0
    %v538 = vadd.f32 %v240, %v537
    %v539 = vpop.f32.mrb[0].mxu0
    %v540 = vadd.f32 %v236, %v539
    %v541 = vpop.f32.mrb[0].mxu0
    %v542 = vadd.f32 %v240, %v541
    %543 = vmatprep.mubr.bf16.mxu0 0
    %544 = vmatmul.mubr.bf16.gmra.mrb[0].mxu0 %v275
    %v545 = vpop.f32.mrb[0].mxu0
    %v546 = vadd.f32 %v236, %v545
    %v547 = vpop.f32.mrb[0].mxu0
    %v548 = vadd.f32 %v240, %v547
    %v549 = vpop.f32.mrb[0].mxu0
    %v550 = vadd.f32 %v236, %v549
    %v551 = vpop.f32.mrb[0].mxu0
    %v552 = vadd.f32 %v240, %v551
    %553 = vmatprep.mubr.bf16.mxu0 0
    %554 = vmatmul.mubr.bf16.gmra.mrb[0].mxu0 %v278
    %v555 = vpop.f32.mrb[0].mxu0
    %v556 = vadd.f32 %v236, %v555
    %v557 = vpop.f32.mrb[0].mxu0
    %v558 = vadd.f32 %v240, %v557
    %v559 = vpop.f32.mrb[0].mxu0
    %v560 = vadd.f32 %v236, %v559
    %v561 = vpop.f32.mrb[0].mxu0
    %v562 = vadd.f32 %v240, %v561
    %563 = vmatprep.mubr.bf16.mxu0 0
    %564 = vmatmul.mubr.bf16.gmra.mrb[0].mxu0 %v281
    %v565 = vpop.f32.mrb[0].mxu0
    %v566 = vadd.f32 %v236, %v565
    %v567 = vpop.f32.mrb[0].mxu0
    %v568 = vadd.f32 %v240, %v567
    %v569 = vpop.f32.mrb[0].mxu0
    %v570 = vadd.f32 %v236, %v569
    %v571 = vpop.f32.mrb[0].mxu0
    %v572 = vadd.f32 %v240, %v571
    %573 = vmatprep.mubr.bf16.mxu0 0
    %574 = vmatmul.mubr.bf16.gmra.mrb[0].mxu0 %v284
    %v575 = vpop.f32.mrb[0].mxu0
    %v576 = vadd.f32 %v236, %v575
    %v577 = vpop.f32.mrb[0].mxu0
    %v578 = vadd.f32 %v240, %v577
    %v579 = vpop.f32.mrb[0].mxu0
    %v580 = vadd.f32 %v236, %v579
    %v581 = vpop.f32.mrb[0].mxu0
    %v582 = vadd.f32 %v240, %v581
    %583 = vmatprep.mubr.bf16.mxu0 0
    %584 = vmatmul.mubr.bf16.gmra.mrb[0].mxu0 %v287
    %v585 = vpop.f32.mrb[0].mxu0
    %v586 = vadd.f32 %v236, %v585
    %v587 = vpop.f32.mrb[0].mxu0
    %v588 = vadd.f32 %v240, %v587
    %v589 = vpop.f32.mrb[0].mxu0
    %v590 = vadd.f32 %v236, %v589
    %v591 = vpop.f32.mrb[0].mxu0
    %v592 = vadd.f32 %v240, %v591
    %593 = vmatprep.mubr.bf16.mxu0 0
    %594 = vmatmul.mubr.bf16.gmra.mrb[0].mxu0 %v290
    %v595 = vpop.f32.mrb[0].mxu0
    %v596 = vadd.f32 %v236, %v595
    %v597 = vpop.f32.mrb[0].mxu0
    %v598 = vadd.f32 %v240, %v597
    %v599 = vpop.f32.mrb[0].mxu0
    %v600 = vadd.f32 %v236, %v599
    %v601 = vpop.f32.mrb[0].mxu0
    %v602 = vadd.f32 %v240, %v601
    %603 = vmatprep.mubr.bf16.mxu0 0
    %604 = vmatmul.mubr.bf16.gmra.mrb[0].mxu0 %v293
    %v605 = vpop.f32.mrb[0].mxu0
    %v606 = vadd.f32 %v236, %v605
    %v607 = vpop.f32.mrb[0].mxu0
    %v608 = vadd.f32 %v240, %v607
    %v609 = vpop.f32.mrb[0].mxu0
    %v610 = vadd.f32 %v236, %v609
    %v611 = vpop.f32.mrb[0].mxu0
    %v612 = vadd.f32 %v240, %v611
    %613 = vmatprep.mubr.bf16.mxu0 0
    %614 = vmatmul.mubr.bf16.gmra.mrb[0].mxu0 %v296
    %v615 = vpop.f32.mrb[0].mxu0
    %v616 = vadd.f32 %v236, %v615
    %v617 = vpop.f32.mrb[0].mxu0
    %v618 = vadd.f32 %v240, %v617
    %v619 = vpop.f32.mrb[0].mxu0
    %v620 = vadd.f32 %v236, %v619
    %v621 = vpop.f32.mrb[0].mxu0
    %v622 = vadd.f32 %v240, %v621
    %623 = vmatprep.mubr.bf16.mxu0 0
    %624 = vmatmul.mubr.bf16.gmra.mrb[0].mxu0 %v299
    %v625 = vpop.f32.mrb[0].mxu0
    %v626 = vadd.f32 %v236, %v625
    %v627 = vpop.f32.mrb[0].mxu0
    %v628 = vadd.f32 %v240, %v627
    %v629 = vpop.f32.mrb[0].mxu0
    %v630 = vadd.f32 %v236, %v629
    %v631 = vpop.f32.mrb[0].mxu0
    %v632 = vadd.f32 %v240, %v631
    %633 = vmatprep.mubr.bf16.mxu0 0
    %634 = vmatmul.mubr.bf16.gmra.mrb[0].mxu0 %v302
    %v635 = vpop.f32.mrb[0].mxu0
    %v636 = vadd.f32 %v236, %v635
    %v637 = vpop.f32.mrb[0].mxu0
    %v638 = vadd.f32 %v240, %v637
    %v639 = vpop.f32.mrb[0].mxu0
    %v640 = vadd.f32 %v236, %v639
    %v641 = vpop.f32.mrb[0].mxu0
    %v642 = vadd.f32 %v240, %v641
    %643 = vmatprep.mubr.bf16.mxu0 0
    %644 = vmatmul.mubr.bf16.gmra.mrb[0].mxu0 %v305
    %v645 = vpop.f32.mrb[0].mxu0
    %v646 = vadd.f32 %v236, %v645
    %v647 = vpop.f32.mrb[0].mxu0
    %v648 = vadd.f32 %v240, %v647
    %v649 = vpop.f32.mrb[0].mxu0
    %v650 = vadd.f32 %v236, %v649
    %v651 = vpop.f32.mrb[0].mxu0
    %v652 = vadd.f32 %v240, %v651
    %653 = vmatprep.mubr.bf16.mxu0 0
    %654 = vmatmul.mubr.bf16.gmra.mrb[0].mxu0 %v308
    %v655 = vpop.f32.mrb[0].mxu0
    %v656 = vadd.f32 %v236, %v655
    %v657 = vpop.f32.mrb[0].mxu0
    %v658 = vadd.f32 %v240, %v657
    %v659 = vpop.f32.mrb[0].mxu0
    %v660 = vadd.f32 %v236, %v659
    %v661 = vpop.f32.mrb[0].mxu0
    %v662 = vadd.f32 %v240, %v661
    %663 = vmatprep.mubr.bf16.mxu0 0
    %664 = vmatmul.mubr.bf16.gmra.mrb[0].mxu0 %v311
    %v665 = vpop.f32.mrb[0].mxu0
    %v666 = vadd.f32 %v236, %v665
    %v667 = vpop.f32.mrb[0].mxu0
    %v668 = vadd.f32 %v240, %v667
    %v669 = vpop.f32.mrb[0].mxu0
    %v670 = vadd.f32 %v236, %v669
    %v671 = vpop.f32.mrb[0].mxu0
    %v672 = vadd.f32 %v240, %v671
    %673 = vmatprep.mubr.bf16.mxu0 0
    %674 = vmatmul.mubr.bf16.gmra.mrb[0].mxu0 %v314
    %v675 = vpop.f32.mrb[0].mxu0
    %v676 = vadd.f32 %v236, %v675
    %v677 = vpop.f32.mrb[0].mxu0
    %v678 = vadd.f32 %v240, %v677
    %v679 = vpop.f32.mrb[0].mxu0
    %v680 = vadd.f32 %v236, %v679
    %v681 = vpop.f32.mrb[0].mxu0
    %v682 = vadd.f32 %v240, %v681
    %683 = vmatprep.mubr.bf16.mxu0 0
    %684 = vmatmul.mubr.bf16.gmra.mrb[0].mxu0 %v317
    %v685 = vpop.f32.mrb[0].mxu0
    %v686 = vadd.f32 %v236, %v685
    %v687 = vpop.f32.mrb[0].mxu0
    %v688 = vadd.f32 %v240, %v687
    %v689 = vpop.f32.mrb[0].mxu0
    %v690 = vadd.f32 %v236, %v689
    %v691 = vpop.f32.mrb[0].mxu0
    %v692 = vadd.f32 %v240, %v691
    %693 = vmatprep.mubr.bf16.mxu0 0
    %694 = vmatmul.mubr.bf16.gmra.mrb[0].mxu0 %v320
    %v695 = vpop.f32.mrb[0].mxu0
    %v696 = vadd.f32 %v236, %v695
    %v697 = vpop.f32.mrb[0].mxu0
    %v698 = vadd.f32 %v240, %v697
    %v699 = vpop.f32.mrb[0].mxu0
    %v700 = vadd.f32 %v236, %v699
    %v701 = vpop.f32.mrb[0].mxu0
    %v702 = vadd.f32 %v240, %v701
    %703 = vmatprep.mubr.bf16.mxu0 0
    %704 = vmatmul.mubr.bf16.gmra.mrb[0].mxu0 %v323
    %v705 = vpop.f32.mrb[0].mxu0
    %v706 = vadd.f32 %v236, %v705
    %v707 = vpop.f32.mrb[0].mxu0
    %v708 = vadd.f32 %v240, %v707
    %v709 = vpop.f32.mrb[0].mxu0
    %v710 = vadd.f32 %v236, %v709
    %v711 = vpop.f32.mrb[0].mxu0
    %v712 = vadd.f32 %v240, %v711
    %713 = vmatprep.mubr.bf16.mxu0 0
    %714 = vmatmul.mubr.bf16.gmra.mrb[0].mxu0 %v326
    %v715 = vpop.f32.mrb[0].mxu0
    %v716 = vadd.f32 %v236, %v715
    %v717 = vpop.f32.mrb[0].mxu0
    %v718 = vadd.f32 %v240, %v717
    %v719 = vpop.f32.mrb[0].mxu0
    %v720 = vadd.f32 %v236, %v719
    %v721 = vpop.f32.mrb[0].mxu0
    %v722 = vadd.f32 %v240, %v721
    %723 = vmatprep.mubr.bf16.mxu0 0
    %724 = vmatmul.mubr.bf16.gmra.mrb[0].mxu0 %v329
    %v725 = vpop.f32.mrb[0].mxu0
    %v726 = vadd.f32 %v236, %v725
    %v727 = vpop.f32.mrb[0].mxu0
    %v728 = vadd.f32 %v240, %v727
    %v729 = vpop.f32.mrb[0].mxu0
    %v730 = vadd.f32 %v236, %v729
    %v731 = vpop.f32.mrb[0].mxu0
    %v732 = vadd.f32 %v240, %v731
    %733 = vmatprep.mubr.bf16.mxu0 0
    %734 = vmatmul.mubr.bf16.gmra.mrb[0].mxu0 %v332
    %v735 = vpop.f32.mrb[0].mxu0
    %v736 = vadd.f32 %v236, %v735
    %v737 = vpop.f32.mrb[0].mxu0
    %v738 = vadd.f32 %v240, %v737
    %v739 = vpop.f32.mrb[0].mxu0
    %v740 = vadd.f32 %v236, %v739
    %v741 = vpop.f32.mrb[0].mxu0
    %v742 = vadd.f32 %v240, %v741
    %743 = vmatprep.mubr.bf16.mxu0 0
    %744 = vmatmul.mubr.bf16.gmra.mrb[0].mxu0 %v335
    %v745 = vpop.f32.mrb[0].mxu0
    %v746 = vadd.f32 %v236, %v745
    %v747 = vpop.f32.mrb[0].mxu0
    %v748 = vadd.f32 %v240, %v747
    %v749 = vpop.f32.mrb[0].mxu0
    %v750 = vadd.f32 %v236, %v749
    %v751 = vpop.f32.mrb[0].mxu0
    %v752 = vadd.f32 %v240, %v751
    %753 = vmatprep.mubr.bf16.mxu0 0
    %754 = vmatmul.mubr.bf16.gmra.mrb[0].mxu0 %v338
    %v755 = vpop.f32.mrb[0].mxu0
    %v756 = vadd.f32 %v236, %v755
    %v757 = vpop.f32.mrb[0].mxu0
    %v758 = vadd.f32 %v240, %v757
    %v759 = vpop.f32.mrb[0].mxu0
    %v760 = vadd.f32 %v236, %v759
    %v761 = vpop.f32.mrb[0].mxu0
    %v762 = vadd.f32 %v240, %v761
    %763 = vmatprep.mubr.bf16.mxu0 0
    %764 = vmatmul.mubr.bf16.gmra.mrb[0].mxu0 %v341
    %v765 = vpop.f32.mrb[0].mxu0
    %v766 = vadd.f32 %v236, %v765
    %v767 = vpop.f32.mrb[0].mxu0
    %v768 = vadd.f32 %v240, %v767
    %v769 = vpop.f32.mrb[0].mxu0
    %v770 = vadd.f32 %v236, %v769
    %v771 = vpop.f32.mrb[0].mxu0
    %v772 = vadd.f32 %v240, %v771
    %773 = vmatprep.mubr.bf16.mxu0 0
    %774 = vmatmul.mubr.bf16.gmra.mrb[0].mxu0 %v344
    %v775 = vpop.f32.mrb[0].mxu0
    %v776 = vadd.f32 %v236, %v775
    %v777 = vpop.f32.mrb[0].mxu0
    %v778 = vadd.f32 %v240, %v777
    %v779 = vpop.f32.mrb[0].mxu0
    %v780 = vadd.f32 %v236, %v779
    %v781 = vpop.f32.mrb[0].mxu0
    %v782 = vadd.f32 %v240, %v781
    %783 = vmatprep.mubr.bf16.mxu0 0
    %784 = vmatmul.mubr.bf16.gmra.mrb[0].mxu0 %v347
    %v785 = vpop.f32.mrb[0].mxu0
    %v786 = vadd.f32 %v236, %v785
    %v787 = vpop.f32.mrb[0].mxu0
    %v788 = vadd.f32 %v240, %v787
    %v789 = vpop.f32.mrb[0].mxu0
    %v790 = vadd.f32 %v236, %v789
    %v791 = vpop.f32.mrb[0].mxu0
    %v792 = vadd.f32 %v240, %v791
    %793 = vmatprep.mubr.bf16.mxu0 0
    %794 = vmatmul.mubr.bf16.gmra.mrb[0].mxu0 %v350
    %v795 = vpop.f32.mrb[0].mxu0
    %v796 = vadd.f32 %v236, %v795
    %v797 = vpop.f32.mrb[0].mxu0
    %v798 = vadd.f32 %v240, %v797
    %v799 = vpop.f32.mrb[0].mxu0
    %v800 = vadd.f32 %v236, %v799
    %v801 = vpop.f32.mrb[0].mxu0
    %v802 = vadd.f32 %v240, %v801
    %803 = vmatprep.mubr.bf16.mxu0 0
    %804 = vmatmul.mubr.bf16.gmra.mrb[0].mxu0 %v353
    %v805 = vpop.f32.mrb[0].mxu0
    %v806 = vadd.f32 %v236, %v805
    %v807 = vpop.f32.mrb[0].mxu0
    %v808 = vadd.f32 %v240, %v807
    %v809 = vpop.f32.mrb[0].mxu0
    %v810 = vadd.f32 %v236, %v809
    %v811 = vpop.f32.mrb[0].mxu0
    %v812 = vadd.f32 %v240, %v811
    %813 = vmatprep.mubr.bf16.mxu0 0
    %814 = vmatmul.mubr.bf16.gmra.mrb[0].mxu0 %v356
    %v815 = vpop.f32.mrb[0].mxu0
    %v816 = vadd.f32 %v236, %v815
    %v817 = vpop.f32.mrb[0].mxu0
    %v818 = vadd.f32 %v240, %v817
    %v819 = vpop.f32.mrb[0].mxu0
    %v820 = vadd.f32 %v236, %v819
    %v821 = vpop.f32.mrb[0].mxu0
    %v822 = vadd.f32 %v240, %v821
    %823 = vmatprep.mubr.bf16.mxu0 0
    %824 = vmatmul.mubr.bf16.gmra.mrb[0].mxu0 %v359
    %v825 = vpop.f32.mrb[0].mxu0
    %v826 = vadd.f32 %v236, %v825
    %v827 = vpop.f32.mrb[0].mxu0
    %v828 = vadd.f32 %v240, %v827
    %v829 = vpop.f32.mrb[0].mxu0
    %v830 = vadd.f32 %v236, %v829
    %v831 = vpop.f32.mrb[0].mxu0
    %v832 = vadd.f32 %v240, %v831
    %833 = vmatprep.mubr.bf16.mxu0 0
    %834 = vmatmul.mubr.bf16.gmra.mrb[0].mxu0 %v362
    %v835 = vpop.f32.mrb[0].mxu0
    %v836 = vadd.f32 %v236, %v835
    %v837 = vpop.f32.mrb[0].mxu0
    %v838 = vadd.f32 %v240, %v837
    %v839 = vpop.f32.mrb[0].mxu0
    %v840 = vadd.f32 %v236, %v839
    %v841 = vpop.f32.mrb[0].mxu0
    %v842 = vadd.f32 %v240, %v841
    %843 = vmatprep.mubr.bf16.mxu0 0
    %844 = vmatmul.mubr.bf16.gmra.mrb[0].mxu0 %v365
    %v845 = vpop.f32.mrb[0].mxu0
    %v846 = vadd.f32 %v236, %v845
    %v847 = vpop.f32.mrb[0].mxu0
    %v848 = vadd.f32 %v240, %v847
    %v849 = vpop.f32.mrb[0].mxu0
    %v850 = vadd.f32 %v236, %v849
    %v851 = vpop.f32.mrb[0].mxu0
    %v852 = vadd.f32 %v240, %v851
    %853 = vmatprep.mubr.bf16.mxu0 0
    %854 = vmatmul.mubr.bf16.gmra.mrb[0].mxu0 %v368
    %v855 = vpop.f32.mrb[0].mxu0
    %v856 = vadd.f32 %v236, %v855
    %v857 = vpop.f32.mrb[0].mxu0
    %v858 = vadd.f32 %v240, %v857
    %v859 = vpop.f32.mrb[0].mxu0
    %v860 = vadd.f32 %v236, %v859
    %v861 = vpop.f32.mrb[0].mxu0
    %v862 = vadd.f32 %v240, %v861
    %863 = vmatprep.mubr.bf16.mxu0 0
    %864 = vmatmul.mubr.bf16.gmra.mrb[0].mxu0 %v371
    %v865 = vpop.f32.mrb[0].mxu0
    %v866 = vadd.f32 %v236, %v865
    %v867 = vpop.f32.mrb[0].mxu0
    %v868 = vadd.f32 %v240, %v867
    %v869 = vpop.f32.mrb[0].mxu0
    %v870 = vadd.f32 %v236, %v869
    %v871 = vpop.f32.mrb[0].mxu0
    %v872 = vadd.f32 %v240, %v871
    %873 = vmatprep.mubr.bf16.mxu0 0
    %874 = vmatmul.mubr.bf16.gmra.mrb[0].mxu0 %v374
    %v875 = vpop.f32.mrb[0].mxu0
    %v876 = vadd.f32 %v236, %v875
    %v877 = vpop.f32.mrb[0].mxu0
    %v878 = vadd.f32 %v240, %v877
    %v879 = vpop.f32.mrb[0].mxu0
    %v880 = vadd.f32 %v236, %v879
    %v881 = vpop.f32.mrb[0].mxu0
    %v882 = vadd.f32 %v240, %v881
    %883 = vmatprep.mubr.bf16.mxu0 0
    %884 = vmatmul.mubr.bf16.gmra.mrb[0].mxu0 %v377
    %v885 = vpop.f32.mrb[0].mxu0
    %v886 = vadd.f32 %v236, %v885
    %v887 = vpop.f32.mrb[0].mxu0
    %v888 = vadd.f32 %v240, %v887
    %v889 = vpop.f32.mrb[0].mxu0
    %v890 = vadd.f32 %v236, %v889
    %v891 = vpop.f32.mrb[0].mxu0
    %v892 = vadd.f32 %v240, %v891
    %893 = vmatprep.mubr.bf16.mxu0 0
    %894 = vmatmul.mubr.bf16.gmra.mrb[0].mxu0 %v380
    %v895 = vpop.f32.mrb[0].mxu0
    %v896 = vadd.f32 %v236, %v895
    %v897 = vpop.f32.mrb[0].mxu0
    %v898 = vadd.f32 %v240, %v897
    %v899 = vpop.f32.mrb[0].mxu0
    %v900 = vadd.f32 %v236, %v899
    %v901 = vpop.f32.mrb[0].mxu0
    %v902 = vadd.f32 %v240, %v901
    %903 = vmatprep.mubr.bf16.mxu0 0
    %904 = vmatmul.mubr.bf16.gmra.mrb[0].mxu0 %v383
    %v905 = vpop.f32.mrb[0].mxu0
    %v906 = vadd.f32 %v236, %v905
    %v907 = vpop.f32.mrb[0].mxu0
    %v908 = vadd.f32 %v240, %v907
    %v909 = vpop.f32.mrb[0].mxu0
    %v910 = vadd.f32 %v236, %v909
    %v911 = vpop.f32.mrb[0].mxu0
    %v912 = vadd.f32 %v240, %v911
    %913 = vmatprep.mubr.bf16.mxu0 0
    %914 = vmatmul.mubr.bf16.gmra.mrb[0].mxu0 %v386
    %v915 = vpop.f32.mrb[0].mxu0
    %v916 = vadd.f32 %v236, %v915
    %v917 = vpop.f32.mrb[0].mxu0
    %v918 = vadd.f32 %v240, %v917
    %v919 = vpop.f32.mrb[0].mxu0
    %v920 = vadd.f32 %v236, %v919
    %v921 = vpop.f32.mrb[0].mxu0
    %v922 = vadd.f32 %v240, %v921
    %923 = vmatprep.mubr.bf16.mxu0 0
    %924 = vmatmul.mubr.bf16.gmra.mrb[0].mxu0 %v389
    %v925 = vpop.f32.mrb[0].mxu0
    %v926 = vadd.f32 %v236, %v925
    %v927 = vpop.f32.mrb[0].mxu0
    %v928 = vadd.f32 %v240, %v927
    %v929 = vpop.f32.mrb[0].mxu0
    %v930 = vadd.f32 %v236, %v929
    %v931 = vpop.f32.mrb[0].mxu0
    %v932 = vadd.f32 %v240, %v931
    %933 = vmatprep.mubr.bf16.mxu0 0
    %934 = vmatmul.mubr.bf16.gmra.mrb[0].mxu0 %v392
    %v935 = vpop.f32.mrb[0].mxu0
    %v936 = vadd.f32 %v236, %v935
    %v937 = vpop.f32.mrb[0].mxu0
    %v938 = vadd.f32 %v240, %v937
    %v939 = vpop.f32.mrb[0].mxu0
    %v940 = vadd.f32 %v236, %v939
    %v941 = vpop.f32.mrb[0].mxu0
    %v942 = vadd.f32 %v240, %v941
    %943 = vmatprep.mubr.bf16.mxu0 0
    %944 = vmatmul.mubr.bf16.gmra.mrb[0].mxu0 %v395
    %v945 = vpop.f32.mrb[0].mxu0
    %v946 = vadd.f32 %v236, %v945
    %v947 = vpop.f32.mrb[0].mxu0
    %v948 = vadd.f32 %v240, %v947
    %v949 = vpop.f32.mrb[0].mxu0
    %v950 = vadd.f32 %v236, %v949
    %v951 = vpop.f32.mrb[0].mxu0
    %v952 = vadd.f32 %v240, %v951
    %953 = vmatprep.mubr.bf16.mxu0 0
    %954 = vmatmul.mubr.bf16.gmra.mrb[0].mxu0 %v398
    %v955 = vpop.f32.mrb[0].mxu0
    %v956 = vadd.f32 %v236, %v955
    %v957 = vpop.f32.mrb[0].mxu0
    %v958 = vadd.f32 %v240, %v957
    %v959 = vpop.f32.mrb[0].mxu0
    %v960 = vadd.f32 %v236, %v959
    %v961 = vpop.f32.mrb[0].mxu0
    %v962 = vadd.f32 %v240, %v961
    %963 = vmatprep.mubr.bf16.mxu0 0
    %964 = vmatmul.mubr.bf16.gmra.mrb[0].mxu0 %v401
    %v965 = vpop.f32.mrb[0].mxu0
    %v966 = vadd.f32 %v236, %v965
    %v967 = vpop.f32.mrb[0].mxu0
    %v968 = vadd.f32 %v240, %v967
    %v969 = vpop.f32.mrb[0].mxu0
    %v970 = vadd.f32 %v236, %v969
    %v971 = vpop.f32.mrb[0].mxu0
    %v972 = vadd.f32 %v240, %v971
    %973 = vmatprep.mubr.bf16.mxu0 0
    %974 = vmatmul.mubr.bf16.gmra.mrb[0].mxu0 %v404
    %v975 = vpop.f32.mrb[0].mxu0
    %v976 = vadd.f32 %v236, %v975
    %v977 = vpop.f32.mrb[0].mxu0
    %v978 = vadd.f32 %v240, %v977
    %v979 = vpop.f32.mrb[0].mxu0
    %v980 = vadd.f32 %v236, %v979
    %v981 = vpop.f32.mrb[0].mxu0
    %v982 = vadd.f32 %v240, %v981
    %983 = vmatprep.mubr.bf16.mxu0 0
    %984 = vmatmul.mubr.bf16.gmra.mrb[0].mxu0 %v407
    %v985 = vpop.f32.mrb[0].mxu0
    %v986 = vadd.f32 %v236, %v985
    %v987 = vpop.f32.mrb[0].mxu0
    %v988 = vadd.f32 %v240, %v987
    %v989 = vpop.f32.mrb[0].mxu0
    %v990 = vadd.f32 %v236, %v989
    %v991 = vpop.f32.mrb[0].mxu0
    %v992 = vadd.f32 %v240, %v991
    %993 = vmatprep.mubr.bf16.mxu0 0
    %994 = vmatmul.mubr.bf16.gmra.mrb[0].mxu0 %v410
    %v995 = vpop.f32.mrb[0].mxu0
    %v996 = vadd.f32 %v236, %v995
    %v997 = vpop.f32.mrb[0].mxu0
    %v998 = vadd.f32 %v240, %v997
    %v999 = vpop.f32.mrb[0].mxu0
    %v1000 = vadd.f32 %v236, %v999
    %v1001 = vpop.f32.mrb[0].mxu0
    %v1002 = vadd.f32 %v240, %v1001
    %1003 = vmatprep.mubr.bf16.mxu0 0
    %1004 = vmatmul.mubr.bf16.gmra.mrb[0].mxu0 %v413
    %v1005 = vpop.f32.mrb[0].mxu0
    %v1006 = vadd.f32 %v236, %v1005
    %v1007 = vpop.f32.mrb[0].mxu0
    %v1008 = vadd.f32 %v240, %v1007
    %v1009 = vpop.f32.mrb[0].mxu0
    %v1010 = vadd.f32 %v236, %v1009
    %v1011 = vpop.f32.mrb[0].mxu0
    %v1012 = vadd.f32 %v240, %v1011
    %1013 = vmatprep.mubr.bf16.mxu0 0
    %1014 = vmatmul.mubr.bf16.gmra.mrb[0].mxu0 %v416
    %v1015 = vpop.f32.mrb[0].mxu0
    %v1016 = vadd.f32 %v236, %v1015
    %v1017 = vpop.f32.mrb[0].mxu0
    %v1018 = vadd.f32 %v240, %v1017
    %v1019 = vpop.f32.mrb[0].mxu0
    %v1020 = vadd.f32 %v236, %v1019
    %v1021 = vpop.f32.mrb[0].mxu0
    %v1022 = vadd.f32 %v240, %v1021
    %1023 = vmatprep.mubr.bf16.mxu0 0
    %1024 = vmatmul.mubr.bf16.gmra.mrb[0].mxu0 %v419
    %v1025 = vpop.f32.mrb[0].mxu0
    %v1026 = vadd.f32 %v236, %v1025
    %v1027 = vpop.f32.mrb[0].mxu0
    %v1028 = vadd.f32 %v240, %v1027
    %v1029 = vpop.f32.mrb[0].mxu0
    %v1030 = vadd.f32 %v236, %v1029
    %v1031 = vpop.f32.mrb[0].mxu0
    %v1032 = vadd.f32 %v240, %v1031
    %1033 = vmatprep.mubr.bf16.mxu0 0
    %1034 = vmatmul.mubr.bf16.gmra.mrb[0].mxu0 %v422
    %v1035 = vpop.f32.mrb[0].mxu0
    %v1036 = vadd.f32 %v236, %v1035
    %v1037 = vpop.f32.mrb[0].mxu0
    %v1038 = vadd.f32 %v240, %v1037
    %v1039 = vpop.f32.mrb[0].mxu0
    %v1040 = vadd.f32 %v236, %v1039
    %v1041 = vpop.f32.mrb[0].mxu0
    %v1042 = vadd.f32 %v240, %v1041
    %1043 = vmatprep.mubr.bf16.mxu0 0
    %1044 = vmatmul.mubr.bf16.gmra.mrb[0].mxu0 %v425
    %v1045 = vpop.f32.mrb[0].mxu0
    %v1046 = vadd.f32 %v236, %v1045
    %v1047 = vpop.f32.mrb[0].mxu0
    %v1048 = vadd.f32 %v240, %v1047
    %v1049 = vpop.f32.mrb[0].mxu0
    %v1050 = vadd.f32 %v236, %v1049
    %v1051 = vpop.f32.mrb[0].mxu0
    %v1052 = vadd.f32 %v240, %v1051
    %1053 = vmatprep.mubr.bf16.mxu0 0
    %1054 = vmatmul.mubr.bf16.gmra.mrb[0].mxu0 %v428
    %v1055 = vpop.f32.mrb[0].mxu0
    %v1056 = vadd.f32 %v236, %v1055
    %v1057 = vpop.f32.mrb[0].mxu0
    %v1058 = vadd.f32 %v240, %v1057
    %v1059 = vpop.f32.mrb[0].mxu0
    %v1060 = vadd.f32 %v236, %v1059
    %v1061 = vpop.f32.mrb[0].mxu0
    %v1062 = vadd.f32 %v240, %v1061
    %1063 = vmatprep.mubr.bf16.mxu0 0
    %1064 = vmatmul.mubr.bf16.gmra.mrb[0].mxu0 %v431
    %v1065 = vpop.f32.mrb[0].mxu0
    %v1066 = vadd.f32 %v236, %v1065
    %v1067 = vpop.f32.mrb[0].mxu0
    %v1068 = vadd.f32 %v240, %v1067
    %v1069 = vpop.f32.mrb[0].mxu0
    %v1070 = vadd.f32 %v236, %v1069
    %v1071 = vpop.f32.mrb[0].mxu0
    %v1072 = vadd.f32 %v240, %v1071
    %1073 = vmatprep.mubr.bf16.mxu0 0
    %1074 = vmatmul.mubr.bf16.gmra.mrb[0].mxu0 %v434
    %v1075 = vpop.f32.mrb[0].mxu0
    %v1076 = vadd.f32 %v236, %v1075
    %v1077 = vpop.f32.mrb[0].mxu0
    %v1078 = vadd.f32 %v240, %v1077
    %v1079 = vpop.f32.mrb[0].mxu0
    %v1080 = vadd.f32 %v236, %v1079
    %v1081 = vpop.f32.mrb[0].mxu0
    %v1082 = vadd.f32 %v240, %v1081
    %1083 = vmatprep.mubr.bf16.mxu0 0
    %1084 = vmatmul.mubr.bf16.gmra.mrb[0].mxu0 %v437
    %v1085 = vpop.f32.mrb[0].mxu0
    %v1086 = vadd.f32 %v236, %v1085
    %v1087 = vpop.f32.mrb[0].mxu0
    %v1088 = vadd.f32 %v240, %v1087
    %v1089 = vpop.f32.mrb[0].mxu0
    %v1090 = vadd.f32 %v236, %v1089
    %v1091 = vpop.f32.mrb[0].mxu0
    %v1092 = vadd.f32 %v240, %v1091
    %1093 = vmatprep.mubr.bf16.mxu0 0
    %1094 = vmatmul.mubr.bf16.gmra.mrb[0].mxu0 %v440
    %v1095 = vpop.f32.mrb[0].mxu0
    %v1096 = vadd.f32 %v236, %v1095
    %v1097 = vpop.f32.mrb[0].mxu0
    %v1098 = vadd.f32 %v240, %v1097
    %v1099 = vpop.f32.mrb[0].mxu0
    %v1100 = vadd.f32 %v236, %v1099
    %v1101 = vpop.f32.mrb[0].mxu0
    %v1102 = vadd.f32 %v240, %v1101
    %1103 = vmatprep.mubr.bf16.mxu0 0
    %1104 = vmatmul.mubr.bf16.gmra.mrb[0].mxu0 %v443
    %v1105 = vpop.f32.mrb[0].mxu0
    %v1106 = vadd.f32 %v236, %v1105
    %v1107 = vpop.f32.mrb[0].mxu0
    %v1108 = vadd.f32 %v240, %v1107
    %v1109 = vpop.f32.mrb[0].mxu0
    %v1110 = vadd.f32 %v236, %v1109
    %v1111 = vpop.f32.mrb[0].mxu0
    %v1112 = vadd.f32 %v240, %v1111
    %1113 = vmatprep.mubr.bf16.mxu0 0
    %1114 = vmatmul.mubr.bf16.gmra.mrb[0].mxu0 %v446
    %v1115 = vpop.f32.mrb[0].mxu0
    %v1116 = vadd.f32 %v236, %v1115
    %v1117 = vpop.f32.mrb[0].mxu0
    %v1118 = vadd.f32 %v240, %v1117
    %v1119 = vpop.f32.mrb[0].mxu0
    %v1120 = vadd.f32 %v236, %v1119
    %v1121 = vpop.f32.mrb[0].mxu0
    %v1122 = vadd.f32 %v240, %v1121
    %1123 = vmatprep.mubr.bf16.mxu0 0
    %1124 = vmatmul.mubr.bf16.gmra.mrb[0].mxu0 %v449
    %v1125 = vpop.f32.mrb[0].mxu0
    %v1126 = vadd.f32 %v236, %v1125
    %v1127 = vpop.f32.mrb[0].mxu0
    %v1128 = vadd.f32 %v240, %v1127
    %v1129 = vpop.f32.mrb[0].mxu0
    %v1130 = vadd.f32 %v236, %v1129
    %v1131 = vpop.f32.mrb[0].mxu0
    %v1132 = vadd.f32 %v240, %v1131
    %1133 = vdwg.mxu0
    %v1134 = vmax.f32 %v496, 0.0
    %v1135 = vmax.f32 %v498, 0.0
    %v1136 = vmax.f32 %v500, 0.0
    %v1137 = vmax.f32 %v502, 0.0
    %v1138 = vmax.f32 %v506, 0.0
    %v1139 = vmax.f32 %v508, 0.0
    %v1140 = vmax.f32 %v510, 0.0
    %v1141 = vmax.f32 %v512, 0.0
    %v1142 = vmax.f32 %v516, 0.0
    %v1143 = vmax.f32 %v518, 0.0
    %v1144 = vmax.f32 %v520, 0.0
    %v1145 = vmax.f32 %v522, 0.0
    %v1146 = vmax.f32 %v526, 0.0
    %v1147 = vmax.f32 %v528, 0.0
    %v1148 = vmax.f32 %v530, 0.0
    %v1149 = vmax.f32 %v532, 0.0
    %v1150 = vmax.f32 %v536, 0.0
    %v1151 = vmax.f32 %v538, 0.0
    %v1152 = vmax.f32 %v540, 0.0
    %v1153 = vmax.f32 %v542, 0.0
    %v1154 = vmax.f32 %v546, 0.0
    %v1155 = vmax.f32 %v548, 0.0
    %v1156 = vmax.f32 %v550, 0.0
    %v1157 = vmax.f32 %v552, 0.0
    %v1158 = vmax.f32 %v556, 0.0
    %v1159 = vmax.f32 %v558, 0.0
    %v1160 = vmax.f32 %v560, 0.0
    %v1161 = vmax.f32 %v562, 0.0
    %v1162 = vmax.f32 %v566, 0.0
    %v1163 = vmax.f32 %v568, 0.0
    %v1164 = vmax.f32 %v570, 0.0
    %v1165 = vmax.f32 %v572, 0.0
    %v1166 = vmax.f32 %v576, 0.0
    %v1167 = vmax.f32 %v578, 0.0
    %v1168 = vmax.f32 %v580, 0.0
    %v1169 = vmax.f32 %v582, 0.0
    %v1170 = vmax.f32 %v586, 0.0
    %v1171 = vmax.f32 %v588, 0.0
    %v1172 = vmax.f32 %v590, 0.0
    %v1173 = vmax.f32 %v592, 0.0
    %v1174 = vmax.f32 %v596, 0.0
    %v1175 = vmax.f32 %v598, 0.0
    %v1176 = vmax.f32 %v600, 0.0
    %v1177 = vmax.f32 %v602, 0.0
    %v1178 = vmax.f32 %v606, 0.0
    %v1179 = vmax.f32 %v608, 0.0
    %v1180 = vmax.f32 %v610, 0.0
    %v1181 = vmax.f32 %v612, 0.0
    %v1182 = vmax.f32 %v616, 0.0
    %v1183 = vmax.f32 %v618, 0.0
    %v1184 = vmax.f32 %v620, 0.0
    %v1185 = vmax.f32 %v622, 0.0
    %v1186 = vmax.f32 %v626, 0.0
    %v1187 = vmax.f32 %v628, 0.0
    %v1188 = vmax.f32 %v630, 0.0
    %v1189 = vmax.f32 %v632, 0.0
    %v1190 = vmax.f32 %v636, 0.0
    %v1191 = vmax.f32 %v638, 0.0
    %v1192 = vmax.f32 %v640, 0.0
    %v1193 = vmax.f32 %v642, 0.0
    %v1194 = vmax.f32 %v646, 0.0
    %v1195 = vmax.f32 %v648, 0.0
    %v1196 = vmax.f32 %v650, 0.0
    %v1197 = vmax.f32 %v652, 0.0
    %v1198 = vmax.f32 %v656, 0.0
    %v1199 = vmax.f32 %v658, 0.0
    %v1200 = vmax.f32 %v660, 0.0
    %v1201 = vmax.f32 %v662, 0.0
    %v1202 = vmax.f32 %v666, 0.0
    %v1203 = vmax.f32 %v668, 0.0
    %v1204 = vmax.f32 %v670, 0.0
    %v1205 = vmax.f32 %v672, 0.0
    %v1206 = vmax.f32 %v676, 0.0
    %v1207 = vmax.f32 %v678, 0.0
    %v1208 = vmax.f32 %v680, 0.0
    %v1209 = vmax.f32 %v682, 0.0
    %v1210 = vmax.f32 %v686, 0.0
    %v1211 = vmax.f32 %v688, 0.0
    %v1212 = vmax.f32 %v690, 0.0
    %v1213 = vmax.f32 %v692, 0.0
    %v1214 = vmax.f32 %v696, 0.0
    %v1215 = vmax.f32 %v698, 0.0
    %v1216 = vmax.f32 %v700, 0.0
    %v1217 = vmax.f32 %v702, 0.0
    %v1218 = vmax.f32 %v706, 0.0
    %v1219 = vmax.f32 %v708, 0.0
    %v1220 = vmax.f32 %v710, 0.0
    %v1221 = vmax.f32 %v712, 0.0
    %v1222 = vmax.f32 %v716, 0.0
    %v1223 = vmax.f32 %v718, 0.0
    %v1224 = vmax.f32 %v720, 0.0
    %v1225 = vmax.f32 %v722, 0.0
    %v1226 = vmax.f32 %v726, 0.0
    %v1227 = vmax.f32 %v728, 0.0
    %v1228 = vmax.f32 %v730, 0.0
    %v1229 = vmax.f32 %v732, 0.0
    %v1230 = vmax.f32 %v736, 0.0
    %v1231 = vmax.f32 %v738, 0.0
    %v1232 = vmax.f32 %v740, 0.0
    %v1233 = vmax.f32 %v742, 0.0
    %v1234 = vmax.f32 %v746, 0.0
    %v1235 = vmax.f32 %v748, 0.0
    %v1236 = vmax.f32 %v750, 0.0
    %v1237 = vmax.f32 %v752, 0.0
    %v1238 = vmax.f32 %v756, 0.0
    %v1239 = vmax.f32 %v758, 0.0
    %v1240 = vmax.f32 %v760, 0.0
    %v1241 = vmax.f32 %v762, 0.0
    %v1242 = vmax.f32 %v766, 0.0
    %v1243 = vmax.f32 %v768, 0.0
    %v1244 = vmax.f32 %v770, 0.0
    %v1245 = vmax.f32 %v772, 0.0
    %v1246 = vmax.f32 %v776, 0.0
    %v1247 = vmax.f32 %v778, 0.0
    %v1248 = vmax.f32 %v780, 0.0
    %v1249 = vmax.f32 %v782, 0.0
    %v1250 = vmax.f32 %v786, 0.0
    %v1251 = vmax.f32 %v788, 0.0
    %v1252 = vmax.f32 %v790, 0.0
    %v1253 = vmax.f32 %v792, 0.0
    %v1254 = vmax.f32 %v796, 0.0
    %v1255 = vmax.f32 %v798, 0.0
    %v1256 = vmax.f32 %v800, 0.0
    %v1257 = vmax.f32 %v802, 0.0
    %v1258 = vmax.f32 %v806, 0.0
    %v1259 = vmax.f32 %v808, 0.0
    %v1260 = vmax.f32 %v810, 0.0
    %v1261 = vmax.f32 %v812, 0.0
    %v1262 = vmax.f32 %v816, 0.0
    %v1263 = vmax.f32 %v818, 0.0
    %v1264 = vmax.f32 %v820, 0.0
    %v1265 = vmax.f32 %v822, 0.0
    %v1266 = vmax.f32 %v826, 0.0
    %v1267 = vmax.f32 %v828, 0.0
    %v1268 = vmax.f32 %v830, 0.0
    %v1269 = vmax.f32 %v832, 0.0
    %v1270 = vmax.f32 %v836, 0.0
    %v1271 = vmax.f32 %v838, 0.0
    %v1272 = vmax.f32 %v840, 0.0
    %v1273 = vmax.f32 %v842, 0.0
    %v1274 = vmax.f32 %v846, 0.0
    %v1275 = vmax.f32 %v848, 0.0
    %v1276 = vmax.f32 %v850, 0.0
    %v1277 = vmax.f32 %v852, 0.0
    %v1278 = vmax.f32 %v856, 0.0
    %v1279 = vmax.f32 %v858, 0.0
    %v1280 = vmax.f32 %v860, 0.0
    %v1281 = vmax.f32 %v862, 0.0
    %v1282 = vmax.f32 %v866, 0.0
    %v1283 = vmax.f32 %v868, 0.0
    %v1284 = vmax.f32 %v870, 0.0
    %v1285 = vmax.f32 %v872, 0.0
    %v1286 = vmax.f32 %v876, 0.0
    %v1287 = vmax.f32 %v878, 0.0
    %v1288 = vmax.f32 %v880, 0.0
    %v1289 = vmax.f32 %v882, 0.0
    %v1290 = vmax.f32 %v886, 0.0
    %v1291 = vmax.f32 %v888, 0.0
    %v1292 = vmax.f32 %v890, 0.0
    %v1293 = vmax.f32 %v892, 0.0
    %v1294 = vmax.f32 %v896, 0.0
    %v1295 = vmax.f32 %v898, 0.0
    %v1296 = vmax.f32 %v900, 0.0
    %v1297 = vmax.f32 %v902, 0.0
    %v1298 = vmax.f32 %v906, 0.0
    %v1299 = vmax.f32 %v908, 0.0
    %v1300 = vmax.f32 %v910, 0.0
    %v1301 = vmax.f32 %v912, 0.0
    %v1302 = vmax.f32 %v916, 0.0
    %v1303 = vmax.f32 %v918, 0.0
    %v1304 = vmax.f32 %v920, 0.0
    %v1305 = vmax.f32 %v922, 0.0
    %v1306 = vmax.f32 %v926, 0.0
    %v1307 = vmax.f32 %v928, 0.0
    %v1308 = vmax.f32 %v930, 0.0
    %v1309 = vmax.f32 %v932, 0.0
    %v1310 = vmax.f32 %v936, 0.0
    %v1311 = vmax.f32 %v938, 0.0
    %v1312 = vmax.f32 %v940, 0.0
    %v1313 = vmax.f32 %v942, 0.0
    %v1314 = vmax.f32 %v946, 0.0
    %v1315 = vmax.f32 %v948, 0.0
    %v1316 = vmax.f32 %v950, 0.0
    %v1317 = vmax.f32 %v952, 0.0
    %v1318 = vmax.f32 %v956, 0.0
    %v1319 = vmax.f32 %v958, 0.0
    %v1320 = vmax.f32 %v960, 0.0
    %v1321 = vmax.f32 %v962, 0.0
    %v1322 = vmax.f32 %v966, 0.0
    %v1323 = vmax.f32 %v968, 0.0
    %v1324 = vmax.f32 %v970, 0.0
    %v1325 = vmax.f32 %v972, 0.0
    %v1326 = vmax.f32 %v976, 0.0
    %v1327 = vmax.f32 %v978, 0.0
    %v1328 = vmax.f32 %v980, 0.0
    %v1329 = vmax.f32 %v982, 0.0
    %v1330 = vmax.f32 %v986, 0.0
    %v1331 = vmax.f32 %v988, 0.0
    %v1332 = vmax.f32 %v990, 0.0
    %v1333 = vmax.f32 %v992, 0.0
    %v1334 = vmax.f32 %v996, 0.0
    %v1335 = vmax.f32 %v998, 0.0
    %v1336 = vmax.f32 %v1000, 0.0
    %v1337 = vmax.f32 %v1002, 0.0
    %v1338 = vmax.f32 %v1006, 0.0
    %v1339 = vmax.f32 %v1008, 0.0
    %v1340 = vmax.f32 %v1010, 0.0
    %v1341 = vmax.f32 %v1012, 0.0
    %v1342 = vmax.f32 %v1016, 0.0
    %v1343 = vmax.f32 %v1018, 0.0
    %v1344 = vmax.f32 %v1020, 0.0
    %v1345 = vmax.f32 %v1022, 0.0
    %v1346 = vmax.f32 %v1026, 0.0
    %v1347 = vmax.f32 %v1028, 0.0
    %v1348 = vmax.f32 %v1030, 0.0
    %v1349 = vmax.f32 %v1032, 0.0
    %v1350 = vmax.f32 %v1036, 0.0
    %v1351 = vmax.f32 %v1038, 0.0
    %v1352 = vmax.f32 %v1040, 0.0
    %v1353 = vmax.f32 %v1042, 0.0
    %v1354 = vmax.f32 %v1046, 0.0
    %v1355 = vmax.f32 %v1048, 0.0
    %v1356 = vmax.f32 %v1050, 0.0
    %v1357 = vmax.f32 %v1052, 0.0
    %v1358 = vmax.f32 %v1056, 0.0
    %v1359 = vmax.f32 %v1058, 0.0
    %v1360 = vmax.f32 %v1060, 0.0
    %v1361 = vmax.f32 %v1062, 0.0
    %v1362 = vmax.f32 %v1066, 0.0
    %v1363 = vmax.f32 %v1068, 0.0
    %v1364 = vmax.f32 %v1070, 0.0
    %v1365 = vmax.f32 %v1072, 0.0
    %v1366 = vmax.f32 %v1076, 0.0
    %v1367 = vmax.f32 %v1078, 0.0
    %v1368 = vmax.f32 %v1080, 0.0
    %v1369 = vmax.f32 %v1082, 0.0
    %v1370 = vmax.f32 %v1086, 0.0
    %v1371 = vmax.f32 %v1088, 0.0
    %v1372 = vmax.f32 %v1090, 0.0
    %v1373 = vmax.f32 %v1092, 0.0
    %v1374 = vmax.f32 %v1096, 0.0
    %v1375 = vmax.f32 %v1098, 0.0
    %v1376 = vmax.f32 %v1100, 0.0
    %v1377 = vmax.f32 %v1102, 0.0
    %v1378 = vmax.f32 %v1106, 0.0
    %v1379 = vmax.f32 %v1108, 0.0
    %v1380 = vmax.f32 %v1110, 0.0
    %v1381 = vmax.f32 %v1112, 0.0
    %v1382 = vmax.f32 %v1116, 0.0
    %v1383 = vmax.f32 %v1118, 0.0
    %v1384 = vmax.f32 %v1120, 0.0
    %v1385 = vmax.f32 %v1122, 0.0
    %v1386 = vmax.f32 %v1126, 0.0
    %v1387 = vmax.f32 %v1128, 0.0
    %v1388 = vmax.f32 %v1130, 0.0
    %v1389 = vmax.f32 %v1132, 0.0
    %v1390 = vpack.c.bf16 %v1136, %v1134
    %v1391 = vpack.c.bf16 %v1137, %v1135
    %v1392 = vpack.c.bf16 %v1140, %v1138
    %v1393 = vpack.c.bf16 %v1141, %v1139
    %v1394 = vpack.c.bf16 %v1144, %v1142
    %v1395 = vpack.c.bf16 %v1145, %v1143
    %v1396 = vpack.c.bf16 %v1148, %v1146
    %v1397 = vpack.c.bf16 %v1149, %v1147
    %v1398 = vpack.c.bf16 %v1152, %v1150
    %v1399 = vpack.c.bf16 %v1153, %v1151
    %v1400 = vpack.c.bf16 %v1156, %v1154
    %v1401 = vpack.c.bf16 %v1157, %v1155
    %v1402 = vpack.c.bf16 %v1160, %v1158
    %v1403 = vpack.c.bf16 %v1161, %v1159
    %v1404 = vpack.c.bf16 %v1164, %v1162
    %v1405 = vpack.c.bf16 %v1165, %v1163
    %v1406 = vpack.c.bf16 %v1168, %v1166
    %v1407 = vpack.c.bf16 %v1169, %v1167
    %v1408 = vpack.c.bf16 %v1172, %v1170
    %v1409 = vpack.c.bf16 %v1173, %v1171
    %v1410 = vpack.c.bf16 %v1176, %v1174
    %v1411 = vpack.c.bf16 %v1177, %v1175
    %v1412 = vpack.c.bf16 %v1180, %v1178
    %v1413 = vpack.c.bf16 %v1181, %v1179
    %v1414 = vpack.c.bf16 %v1184, %v1182
    %v1415 = vpack.c.bf16 %v1185, %v1183
    %v1416 = vpack.c.bf16 %v1188, %v1186
    %v1417 = vpack.c.bf16 %v1189, %v1187
    %v1418 = vpack.c.bf16 %v1192, %v1190
    %v1419 = vpack.c.bf16 %v1193, %v1191
    %v1420 = vpack.c.bf16 %v1196, %v1194
    %v1421 = vpack.c.bf16 %v1197, %v1195
    %v1422 = vpack.c.bf16 %v1200, %v1198
    %v1423 = vpack.c.bf16 %v1201, %v1199
    %v1424 = vpack.c.bf16 %v1204, %v1202
    %v1425 = vpack.c.bf16 %v1205, %v1203
    %v1426 = vpack.c.bf16 %v1208, %v1206
    %v1427 = vpack.c.bf16 %v1209, %v1207
    %v1428 = vpack.c.bf16 %v1212, %v1210
    %v1429 = vpack.c.bf16 %v1213, %v1211
    %v1430 = vpack.c.bf16 %v1216, %v1214
    %v1431 = vpack.c.bf16 %v1217, %v1215
    %v1432 = vpack.c.bf16 %v1220, %v1218
    %v1433 = vpack.c.bf16 %v1221, %v1219
    %v1434 = vpack.c.bf16 %v1224, %v1222
    %v1435 = vpack.c.bf16 %v1225, %v1223
    %v1436 = vpack.c.bf16 %v1228, %v1226
    %v1437 = vpack.c.bf16 %v1229, %v1227
    %v1438 = vpack.c.bf16 %v1232, %v1230
    %v1439 = vpack.c.bf16 %v1233, %v1231
    %v1440 = vpack.c.bf16 %v1236, %v1234
    %v1441 = vpack.c.bf16 %v1237, %v1235
    %v1442 = vpack.c.bf16 %v1240, %v1238
    %v1443 = vpack.c.bf16 %v1241, %v1239
    %v1444 = vpack.c.bf16 %v1244, %v1242
    %v1445 = vpack.c.bf16 %v1245, %v1243
    %v1446 = vpack.c.bf16 %v1248, %v1246
    %v1447 = vpack.c.bf16 %v1249, %v1247
    %v1448 = vpack.c.bf16 %v1252, %v1250
    %v1449 = vpack.c.bf16 %v1253, %v1251
    %v1450 = vpack.c.bf16 %v1256, %v1254
    %v1451 = vpack.c.bf16 %v1257, %v1255
    %v1452 = vpack.c.bf16 %v1260, %v1258
    %v1453 = vpack.c.bf16 %v1261, %v1259
    %v1454 = vpack.c.bf16 %v1264, %v1262
    %v1455 = vpack.c.bf16 %v1265, %v1263
    %v1456 = vpack.c.bf16 %v1268, %v1266
    %v1457 = vpack.c.bf16 %v1269, %v1267
    %v1458 = vpack.c.bf16 %v1272, %v1270
    %v1459 = vpack.c.bf16 %v1273, %v1271
    %v1460 = vpack.c.bf16 %v1276, %v1274
    %v1461 = vpack.c.bf16 %v1277, %v1275
    %v1462 = vpack.c.bf16 %v1280, %v1278
    %v1463 = vpack.c.bf16 %v1281, %v1279
    %v1464 = vpack.c.bf16 %v1284, %v1282
    %v1465 = vpack.c.bf16 %v1285, %v1283
    %v1466 = vpack.c.bf16 %v1288, %v1286
    %v1467 = vpack.c.bf16 %v1289, %v1287
    %v1468 = vpack.c.bf16 %v1292, %v1290
    %v1469 = vpack.c.bf16 %v1293, %v1291
    %v1470 = vpack.c.bf16 %v1296, %v1294
    %v1471 = vpack.c.bf16 %v1297, %v1295
    %v1472 = vpack.c.bf16 %v1300, %v1298
    %v1473 = vpack.c.bf16 %v1301, %v1299
    %v1474 = vpack.c.bf16 %v1304, %v1302
    %v1475 = vpack.c.bf16 %v1305, %v1303
    %v1476 = vpack.c.bf16 %v1308, %v1306
    %v1477 = vpack.c.bf16 %v1309, %v1307
    %v1478 = vpack.c.bf16 %v1312, %v1310
    %v1479 = vpack.c.bf16 %v1313, %v1311
    %v1480 = vpack.c.bf16 %v1316, %v1314
    %v1481 = vpack.c.bf16 %v1317, %v1315
    %v1482 = vpack.c.bf16 %v1320, %v1318
    %v1483 = vpack.c.bf16 %v1321, %v1319
    %v1484 = vpack.c.bf16 %v1324, %v1322
    %v1485 = vpack.c.bf16 %v1325, %v1323
    %v1486 = vpack.c.bf16 %v1328, %v1326
    %v1487 = vpack.c.bf16 %v1329, %v1327
    %v1488 = vpack.c.bf16 %v1332, %v1330
    %v1489 = vpack.c.bf16 %v1333, %v1331
    %v1490 = vpack.c.bf16 %v1336, %v1334
    %v1491 = vpack.c.bf16 %v1337, %v1335
    %v1492 = vpack.c.bf16 %v1340, %v1338
    %v1493 = vpack.c.bf16 %v1341, %v1339
    %v1494 = vpack.c.bf16 %v1344, %v1342
    %v1495 = vpack.c.bf16 %v1345, %v1343
    %v1496 = vpack.c.bf16 %v1348, %v1346
    %v1497 = vpack.c.bf16 %v1349, %v1347
    %v1498 = vpack.c.bf16 %v1352, %v1350
    %v1499 = vpack.c.bf16 %v1353, %v1351
    %v1500 = vpack.c.bf16 %v1356, %v1354
    %v1501 = vpack.c.bf16 %v1357, %v1355
    %v1502 = vpack.c.bf16 %v1360, %v1358
    %v1503 = vpack.c.bf16 %v1361, %v1359
    %v1504 = vpack.c.bf16 %v1364, %v1362
    %v1505 = vpack.c.bf16 %v1365, %v1363
    %v1506 = vpack.c.bf16 %v1368, %v1366
    %v1507 = vpack.c.bf16 %v1369, %v1367
    %v1508 = vpack.c.bf16 %v1372, %v1370
    %v1509 = vpack.c.bf16 %v1373, %v1371
    %v1510 = vpack.c.bf16 %v1376, %v1374
    %v1511 = vpack.c.bf16 %v1377, %v1375
    %v1512 = vpack.c.bf16 %v1380, %v1378
    %v1513 = vpack.c.bf16 %v1381, %v1379
    %v1514 = vpack.c.bf16 %v1384, %v1382
    %v1515 = vpack.c.bf16 %v1385, %v1383
    %v1516 = vpack.c.bf16 %v1388, %v1386
    %v1517 = vpack.c.bf16 %v1389, %v1387
    %v1518 = vld [vmem:[%s3] sm:$0xff]
    %v1519 = vld [vmem:[%s3 + $0x8] sm:$0xff]
    %v1520 = vld [vmem:[%s3 + $0x10] sm:$0xff]
    %v1521 = vld [vmem:[%s3 + $0x18] sm:$0xff]
    %v1522 = vld [vmem:[%s3 + $0x20] sm:$0xff]
    %v1523 = vld [vmem:[%s3 + $0x28] sm:$0xff]
    %v1524 = vld [vmem:[%s3 + $0x30] sm:$0xff]
    %v1525 = vld [vmem:[%s3 + $0x38] sm:$0xff]
    %v1526 = vld [vmem:[%s3 + $0x40] sm:$0xff]
    %v1527 = vld [vmem:[%s3 + $0x48] sm:$0xff]
    %v1528 = vld [vmem:[%s3 + $0x50] sm:$0xff]
    %v1529 = vld [vmem:[%s3 + $0x58] sm:$0xff]
    %v1530 = vld [vmem:[%s3 + $0x60] sm:$0xff]
    %v1531 = vld [vmem:[%s3 + $0x68] sm:$0xff]
    %v1532 = vld [vmem:[%s3 + $0x70] sm:$0xff]
    %v1533 = vld [vmem:[%s3 + $0x78] sm:$0xff]
    %v1534 = vld [vmem:[%s3 + $0x80] sm:$0xff]
    %v1535 = vld [vmem:[%s3 + $0x88] sm:$0xff]
    %v1536 = vld [vmem:[%s3 + $0x90] sm:$0xff]
    %v1537 = vld [vmem:[%s3 + $0x98] sm:$0xff]
    %v1538 = vld [vmem:[%s3 + $0xa0] sm:$0xff]
    %v1539 = vld [vmem:[%s3 + $0xa8] sm:$0xff]
    %v1540 = vld [vmem:[%s3 + $0xb0] sm:$0xff]
    %v1541 = vld [vmem:[%s3 + $0xb8] sm:$0xff]
    %v1542 = vld [vmem:[%s3 + $0xc0] sm:$0xff]
    %v1543 = vld [vmem:[%s3 + $0xc8] sm:$0xff]
    %v1544 = vld [vmem:[%s3 + $0xd0] sm:$0xff]
    %v1545 = vld [vmem:[%s3 + $0xd8] sm:$0xff]
    %v1546 = vld [vmem:[%s3 + $0xe0] sm:$0xff]
    %v1547 = vld [vmem:[%s3 + $0xe8] sm:$0xff]
    %v1548 = vld [vmem:[%s3 + $0xf0] sm:$0xff]
    %v1549 = vld [vmem:[%s3 + $0xf8] sm:$0xff]
    %v1550 = vld [vmem:[%s4] sm:$0x3]
    %v1552 = vlaneseq
    %v1553 = vshrl.u32 %v1552, 7
    %v1554 = vsub.s32 0, %v1553
    %v1555 = vrot.slane %v1550, %v1554
    %v1556 = vlaneseq
    %v1557 = vshrl.u32 %v1556, 7
    %v1558 = vsub.s32 1, %v1557
    %v1559 = vrot.slane %v1550, %v1558
    %v1594 = vunpack.c.l.b16 %v1518
    %v1595 = vunpack.c.h.b16 %v1518
    %v1596 = vunpack.c.l.b16 %v1519
    %v1597 = vunpack.c.h.b16 %v1519
    %v1598 = vunpack.c.l.b16 %v1520
    %v1599 = vunpack.c.h.b16 %v1520
    %v1600 = vunpack.c.l.b16 %v1521
    %v1601 = vunpack.c.h.b16 %v1521
    %v1602 = vunpack.c.l.b16 %v1522
    %v1603 = vunpack.c.h.b16 %v1522
    %v1604 = vunpack.c.l.b16 %v1523
    %v1605 = vunpack.c.h.b16 %v1523
    %v1606 = vunpack.c.l.b16 %v1524
    %v1607 = vunpack.c.h.b16 %v1524
    %v1608 = vunpack.c.l.b16 %v1525
    %v1609 = vunpack.c.h.b16 %v1525
    %v1610 = vunpack.c.l.b16 %v1526
    %v1611 = vunpack.c.h.b16 %v1526
    %v1612 = vunpack.c.l.b16 %v1527
    %v1613 = vunpack.c.h.b16 %v1527
    %v1614 = vunpack.c.l.b16 %v1528
    %v1615 = vunpack.c.h.b16 %v1528
    %v1616 = vunpack.c.l.b16 %v1529
    %v1617 = vunpack.c.h.b16 %v1529
    %v1618 = vunpack.c.l.b16 %v1530
    %v1619 = vunpack.c.h.b16 %v1530
    %v1620 = vunpack.c.l.b16 %v1531
    %v1621 = vunpack.c.h.b16 %v1531
    %v1622 = vunpack.c.l.b16 %v1532
    %v1623 = vunpack.c.h.b16 %v1532
    %v1624 = vunpack.c.l.b16 %v1533
    %v1625 = vunpack.c.h.b16 %v1533
    %v1626 = vunpack.c.l.b16 %v1534
    %v1627 = vunpack.c.h.b16 %v1534
    %v1628 = vunpack.c.l.b16 %v1535
    %v1629 = vunpack.c.h.b16 %v1535
    %v1630 = vunpack.c.l.b16 %v1536
    %v1631 = vunpack.c.h.b16 %v1536
    %v1632 = vunpack.c.l.b16 %v1537
    %v1633 = vunpack.c.h.b16 %v1537
    %v1634 = vunpack.c.l.b16 %v1538
    %v1635 = vunpack.c.h.b16 %v1538
    %v1636 = vunpack.c.l.b16 %v1539
    %v1637 = vunpack.c.h.b16 %v1539
    %v1638 = vunpack.c.l.b16 %v1540
    %v1639 = vunpack.c.h.b16 %v1540
    %v1640 = vunpack.c.l.b16 %v1541
    %v1641 = vunpack.c.h.b16 %v1541
    %v1642 = vunpack.c.l.b16 %v1542
    %v1643 = vunpack.c.h.b16 %v1542
    %v1644 = vunpack.c.l.b16 %v1543
    %v1645 = vunpack.c.h.b16 %v1543
    %v1646 = vunpack.c.l.b16 %v1544
    %v1647 = vunpack.c.h.b16 %v1544
    %v1648 = vunpack.c.l.b16 %v1545
    %v1649 = vunpack.c.h.b16 %v1545
    %v1650 = vunpack.c.l.b16 %v1546
    %v1651 = vunpack.c.h.b16 %v1546
    %v1652 = vunpack.c.l.b16 %v1547
    %v1653 = vunpack.c.h.b16 %v1547
    %v1654 = vunpack.c.l.b16 %v1548
    %v1655 = vunpack.c.h.b16 %v1548
    %v1656 = vunpack.c.l.b16 %v1549
    %v1657 = vunpack.c.h.b16 %v1549
    %v1658 = vpack.c.b16 %v1596, %v1594
    %v1659 = vpack.c.b16 %v1597, %v1595
    %v1660 = vpack.c.b16 %v1600, %v1598
    %v1661 = vpack.c.b16 %v1601, %v1599
    %v1662 = vpack.c.b16 %v1604, %v1602
    %v1663 = vpack.c.b16 %v1605, %v1603
    %v1664 = vpack.c.b16 %v1608, %v1606
    %v1665 = vpack.c.b16 %v1609, %v1607
    %v1666 = vpack.c.b16 %v1612, %v1610
    %v1667 = vpack.c.b16 %v1613, %v1611
    %v1668 = vpack.c.b16 %v1616, %v1614
    %v1669 = vpack.c.b16 %v1617, %v1615
    %v1670 = vpack.c.b16 %v1620, %v1618
    %v1671 = vpack.c.b16 %v1621, %v1619
    %v1672 = vpack.c.b16 %v1624, %v1622
    %v1673 = vpack.c.b16 %v1625, %v1623
    %v1674 = vpack.c.b16 %v1628, %v1626
    %v1675 = vpack.c.b16 %v1629, %v1627
    %v1676 = vpack.c.b16 %v1632, %v1630
    %v1677 = vpack.c.b16 %v1633, %v1631
    %v1678 = vpack.c.b16 %v1636, %v1634
    %v1679 = vpack.c.b16 %v1637, %v1635
    %v1680 = vpack.c.b16 %v1640, %v1638
    %v1681 = vpack.c.b16 %v1641, %v1639
    %v1682 = vpack.c.b16 %v1644, %v1642
    %v1683 = vpack.c.b16 %v1645, %v1643
    %v1684 = vpack.c.b16 %v1648, %v1646
    %v1685 = vpack.c.b16 %v1649, %v1647
    %v1686 = vpack.c.b16 %v1652, %v1650
    %v1687 = vpack.c.b16 %v1653, %v1651
    %v1688 = vpack.c.b16 %v1656, %v1654
    %v1689 = vpack.c.b16 %v1657, %v1655
    %1722 = vmatprep.subr.bf16.mxu0 %v1659
    %1723 = vmatpush1.bf16.msra.mxu0 %v1658
    %1724 = vmatprep.subr.bf16.mxu0 %v1661
    %1725 = vmatpush1.bf16.msra.mxu0 %v1660
    %1726 = vmatprep.subr.bf16.mxu0 %v1663
    %1727 = vmatpush1.bf16.msra.mxu0 %v1662
    %1728 = vmatprep.subr.bf16.mxu0 %v1665
    %1729 = vmatpush1.bf16.msra.mxu0 %v1664
    %1730 = vmatprep.subr.bf16.mxu0 %v1667
    %1731 = vmatpush1.bf16.msra.mxu0 %v1666
    %1732 = vmatprep.subr.bf16.mxu0 %v1669
    %1733 = vmatpush1.bf16.msra.mxu0 %v1668
    %1734 = vmatprep.subr.bf16.mxu0 %v1671
    %1735 = vmatpush1.bf16.msra.mxu0 %v1670
    %1736 = vmatprep.subr.bf16.mxu0 %v1673
    %1737 = vmatpush1.bf16.msra.mxu0 %v1672
    %1738 = vmatprep.subr.bf16.mxu0 %v1675
    %1739 = vmatpush1.bf16.msra.mxu0 %v1674
    %1740 = vmatprep.subr.bf16.mxu0 %v1677
    %1741 = vmatpush1.bf16.msra.mxu0 %v1676
    %1742 = vmatprep.subr.bf16.mxu0 %v1679
    %1743 = vmatpush1.bf16.msra.mxu0 %v1678
    %1744 = vmatprep.subr.bf16.mxu0 %v1681
    %1745 = vmatpush1.bf16.msra.mxu0 %v1680
    %1746 = vmatprep.subr.bf16.mxu0 %v1683
    %1747 = vmatpush1.bf16.msra.mxu0 %v1682
    %1748 = vmatprep.subr.bf16.mxu0 %v1685
    %1749 = vmatpush1.bf16.msra.mxu0 %v1684
    %1750 = vmatprep.subr.bf16.mxu0 %v1687
    %1751 = vmatpush1.bf16.msra.mxu0 %v1686
    %1752 = vmatprep.subr.bf16.mxu0 %v1689
    %1753 = vmatpush1.bf16.msra.mxu0 %v1688
    %1754 = vmatprep.mubr.bf16.mxu0 %v1391
    %1755 = vmatmul.mubr.bf16.gmra.mrb[0].mxu0 %v1390
    %v1756 = vpop.f32.mrb[0].mxu0
    %v1757 = vadd.f32 %v1555, %v1756
    %v1758 = vpop.f32.mrb[0].mxu0
    %v1759 = vadd.f32 %v1559, %v1758
    %v1760 = vpop.f32.mrb[0].mxu0
    %v1761 = vadd.f32 %v1555, %v1760
    %v1762 = vpop.f32.mrb[0].mxu0
    %v1763 = vadd.f32 %v1559, %v1762
    %1764 = vmatprep.mubr.bf16.mxu0 %v1393
    %1765 = vmatmul.mubr.bf16.gmra.mrb[0].mxu0 %v1392
    %v1766 = vpop.f32.mrb[0].mxu0
    %v1767 = vadd.f32 %v1555, %v1766
    %v1768 = vpop.f32.mrb[0].mxu0
    %v1769 = vadd.f32 %v1559, %v1768
    %v1770 = vpop.f32.mrb[0].mxu0
    %v1771 = vadd.f32 %v1555, %v1770
    %v1772 = vpop.f32.mrb[0].mxu0
    %v1773 = vadd.f32 %v1559, %v1772
    %1774 = vmatprep.mubr.bf16.mxu0 %v1395
    %1775 = vmatmul.mubr.bf16.gmra.mrb[0].mxu0 %v1394
    %v1776 = vpop.f32.mrb[0].mxu0
    %v1777 = vadd.f32 %v1555, %v1776
    %v1778 = vpop.f32.mrb[0].mxu0
    %v1779 = vadd.f32 %v1559, %v1778
    %v1780 = vpop.f32.mrb[0].mxu0
    %v1781 = vadd.f32 %v1555, %v1780
    %v1782 = vpop.f32.mrb[0].mxu0
    %v1783 = vadd.f32 %v1559, %v1782
    %1784 = vmatprep.mubr.bf16.mxu0 %v1397
    %1785 = vmatmul.mubr.bf16.gmra.mrb[0].mxu0 %v1396
    %v1786 = vpop.f32.mrb[0].mxu0
    %v1787 = vadd.f32 %v1555, %v1786
    %v1788 = vpop.f32.mrb[0].mxu0
    %v1789 = vadd.f32 %v1559, %v1788
    %v1790 = vpop.f32.mrb[0].mxu0
    %v1791 = vadd.f32 %v1555, %v1790
    %v1792 = vpop.f32.mrb[0].mxu0
    %v1793 = vadd.f32 %v1559, %v1792
    %1794 = vmatprep.mubr.bf16.mxu0 %v1399
    %1795 = vmatmul.mubr.bf16.gmra.mrb[0].mxu0 %v1398
    %v1796 = vpop.f32.mrb[0].mxu0
    %v1797 = vadd.f32 %v1555, %v1796
    %v1798 = vpop.f32.mrb[0].mxu0
    %v1799 = vadd.f32 %v1559, %v1798
    %v1800 = vpop.f32.mrb[0].mxu0
    %v1801 = vadd.f32 %v1555, %v1800
    %v1802 = vpop.f32.mrb[0].mxu0
    %v1803 = vadd.f32 %v1559, %v1802
    %1804 = vmatprep.mubr.bf16.mxu0 %v1401
    %1805 = vmatmul.mubr.bf16.gmra.mrb[0].mxu0 %v1400
    %v1806 = vpop.f32.mrb[0].mxu0
    %v1807 = vadd.f32 %v1555, %v1806
    %v1808 = vpop.f32.mrb[0].mxu0
    %v1809 = vadd.f32 %v1559, %v1808
    %v1810 = vpop.f32.mrb[0].mxu0
    %v1811 = vadd.f32 %v1555, %v1810
    %v1812 = vpop.f32.mrb[0].mxu0
    %v1813 = vadd.f32 %v1559, %v1812
    %1814 = vmatprep.mubr.bf16.mxu0 %v1403
    %1815 = vmatmul.mubr.bf16.gmra.mrb[0].mxu0 %v1402
    %v1816 = vpop.f32.mrb[0].mxu0
    %v1817 = vadd.f32 %v1555, %v1816
    %v1818 = vpop.f32.mrb[0].mxu0
    %v1819 = vadd.f32 %v1559, %v1818
    %v1820 = vpop.f32.mrb[0].mxu0
    %v1821 = vadd.f32 %v1555, %v1820
    %v1822 = vpop.f32.mrb[0].mxu0
    %v1823 = vadd.f32 %v1559, %v1822
    %1824 = vmatprep.mubr.bf16.mxu0 %v1405
    %1825 = vmatmul.mubr.bf16.gmra.mrb[0].mxu0 %v1404
    %v1826 = vpop.f32.mrb[0].mxu0
    %v1827 = vadd.f32 %v1555, %v1826
    %v1828 = vpop.f32.mrb[0].mxu0
    %v1829 = vadd.f32 %v1559, %v1828
    %v1830 = vpop.f32.mrb[0].mxu0
    %v1831 = vadd.f32 %v1555, %v1830
    %v1832 = vpop.f32.mrb[0].mxu0
    %v1833 = vadd.f32 %v1559, %v1832
    %1834 = vmatprep.mubr.bf16.mxu0 %v1407
    %1835 = vmatmul.mubr.bf16.gmra.mrb[0].mxu0 %v1406
    %v1836 = vpop.f32.mrb[0].mxu0
    %v1837 = vadd.f32 %v1555, %v1836
    %v1838 = vpop.f32.mrb[0].mxu0
    %v1839 = vadd.f32 %v1559, %v1838
    %v1840 = vpop.f32.mrb[0].mxu0
    %v1841 = vadd.f32 %v1555, %v1840
    %v1842 = vpop.f32.mrb[0].mxu0
    %v1843 = vadd.f32 %v1559, %v1842
    %1844 = vmatprep.mubr.bf16.mxu0 %v1409
    %1845 = vmatmul.mubr.bf16.gmra.mrb[0].mxu0 %v1408
    %v1846 = vpop.f32.mrb[0].mxu0
    %v1847 = vadd.f32 %v1555, %v1846
    %v1848 = vpop.f32.mrb[0].mxu0
    %v1849 = vadd.f32 %v1559, %v1848
    %v1850 = vpop.f32.mrb[0].mxu0
    %v1851 = vadd.f32 %v1555, %v1850
    %v1852 = vpop.f32.mrb[0].mxu0
    %v1853 = vadd.f32 %v1559, %v1852
    %1854 = vmatprep.mubr.bf16.mxu0 %v1411
    %1855 = vmatmul.mubr.bf16.gmra.mrb[0].mxu0 %v1410
    %v1856 = vpop.f32.mrb[0].mxu0
    %v1857 = vadd.f32 %v1555, %v1856
    %v1858 = vpop.f32.mrb[0].mxu0
    %v1859 = vadd.f32 %v1559, %v1858
    %v1860 = vpop.f32.mrb[0].mxu0
    %v1861 = vadd.f32 %v1555, %v1860
    %v1862 = vpop.f32.mrb[0].mxu0
    %v1863 = vadd.f32 %v1559, %v1862
    %1864 = vmatprep.mubr.bf16.mxu0 %v1413
    %1865 = vmatmul.mubr.bf16.gmra.mrb[0].mxu0 %v1412
    %v1866 = vpop.f32.mrb[0].mxu0
    %v1867 = vadd.f32 %v1555, %v1866
    %v1868 = vpop.f32.mrb[0].mxu0
    %v1869 = vadd.f32 %v1559, %v1868
    %v1870 = vpop.f32.mrb[0].mxu0
    %v1871 = vadd.f32 %v1555, %v1870
    %v1872 = vpop.f32.mrb[0].mxu0
    %v1873 = vadd.f32 %v1559, %v1872
    %1874 = vmatprep.mubr.bf16.mxu0 %v1415
    %1875 = vmatmul.mubr.bf16.gmra.mrb[0].mxu0 %v1414
    %v1876 = vpop.f32.mrb[0].mxu0
    %v1877 = vadd.f32 %v1555, %v1876
    %v1878 = vpop.f32.mrb[0].mxu0
    %v1879 = vadd.f32 %v1559, %v1878
    %v1880 = vpop.f32.mrb[0].mxu0
    %v1881 = vadd.f32 %v1555, %v1880
    %v1882 = vpop.f32.mrb[0].mxu0
    %v1883 = vadd.f32 %v1559, %v1882
    %1884 = vmatprep.mubr.bf16.mxu0 %v1417
    %1885 = vmatmul.mubr.bf16.gmra.mrb[0].mxu0 %v1416
    %v1886 = vpop.f32.mrb[0].mxu0
    %v1887 = vadd.f32 %v1555, %v1886
    %v1888 = vpop.f32.mrb[0].mxu0
    %v1889 = vadd.f32 %v1559, %v1888
    %v1890 = vpop.f32.mrb[0].mxu0
    %v1891 = vadd.f32 %v1555, %v1890
    %v1892 = vpop.f32.mrb[0].mxu0
    %v1893 = vadd.f32 %v1559, %v1892
    %1894 = vmatprep.mubr.bf16.mxu0 %v1419
    %1895 = vmatmul.mubr.bf16.gmra.mrb[0].mxu0 %v1418
    %v1896 = vpop.f32.mrb[0].mxu0
    %v1897 = vadd.f32 %v1555, %v1896
    %v1898 = vpop.f32.mrb[0].mxu0
    %v1899 = vadd.f32 %v1559, %v1898
    %v1900 = vpop.f32.mrb[0].mxu0
    %v1901 = vadd.f32 %v1555, %v1900
    %v1902 = vpop.f32.mrb[0].mxu0
    %v1903 = vadd.f32 %v1559, %v1902
    %1904 = vmatprep.mubr.bf16.mxu0 %v1421
    %1905 = vmatmul.mubr.bf16.gmra.mrb[0].mxu0 %v1420
    %v1906 = vpop.f32.mrb[0].mxu0
    %v1907 = vadd.f32 %v1555, %v1906
    %v1908 = vpop.f32.mrb[0].mxu0
    %v1909 = vadd.f32 %v1559, %v1908
    %v1910 = vpop.f32.mrb[0].mxu0
    %v1911 = vadd.f32 %v1555, %v1910
    %v1912 = vpop.f32.mrb[0].mxu0
    %v1913 = vadd.f32 %v1559, %v1912
    %1914 = vmatprep.mubr.bf16.mxu0 %v1423
    %1915 = vmatmul.mubr.bf16.gmra.mrb[0].mxu0 %v1422
    %v1916 = vpop.f32.mrb[0].mxu0
    %v1917 = vadd.f32 %v1555, %v1916
    %v1918 = vpop.f32.mrb[0].mxu0
    %v1919 = vadd.f32 %v1559, %v1918
    %v1920 = vpop.f32.mrb[0].mxu0
    %v1921 = vadd.f32 %v1555, %v1920
    %v1922 = vpop.f32.mrb[0].mxu0
    %v1923 = vadd.f32 %v1559, %v1922
    %1924 = vmatprep.mubr.bf16.mxu0 %v1425
    %1925 = vmatmul.mubr.bf16.gmra.mrb[0].mxu0 %v1424
    %v1926 = vpop.f32.mrb[0].mxu0
    %v1927 = vadd.f32 %v1555, %v1926
    %v1928 = vpop.f32.mrb[0].mxu0
    %v1929 = vadd.f32 %v1559, %v1928
    %v1930 = vpop.f32.mrb[0].mxu0
    %v1931 = vadd.f32 %v1555, %v1930
    %v1932 = vpop.f32.mrb[0].mxu0
    %v1933 = vadd.f32 %v1559, %v1932
    %1934 = vmatprep.mubr.bf16.mxu0 %v1427
    %1935 = vmatmul.mubr.bf16.gmra.mrb[0].mxu0 %v1426
    %v1936 = vpop.f32.mrb[0].mxu0
    %v1937 = vadd.f32 %v1555, %v1936
    %v1938 = vpop.f32.mrb[0].mxu0
    %v1939 = vadd.f32 %v1559, %v1938
    %v1940 = vpop.f32.mrb[0].mxu0
    %v1941 = vadd.f32 %v1555, %v1940
    %v1942 = vpop.f32.mrb[0].mxu0
    %v1943 = vadd.f32 %v1559, %v1942
    %1944 = vmatprep.mubr.bf16.mxu0 %v1429
    %1945 = vmatmul.mubr.bf16.gmra.mrb[0].mxu0 %v1428
    %v1946 = vpop.f32.mrb[0].mxu0
    %v1947 = vadd.f32 %v1555, %v1946
    %v1948 = vpop.f32.mrb[0].mxu0
    %v1949 = vadd.f32 %v1559, %v1948
    %v1950 = vpop.f32.mrb[0].mxu0
    %v1951 = vadd.f32 %v1555, %v1950
    %v1952 = vpop.f32.mrb[0].mxu0
    %v1953 = vadd.f32 %v1559, %v1952
    %1954 = vmatprep.mubr.bf16.mxu0 %v1431
    %1955 = vmatmul.mubr.bf16.gmra.mrb[0].mxu0 %v1430
    %v1956 = vpop.f32.mrb[0].mxu0
    %v1957 = vadd.f32 %v1555, %v1956
    %v1958 = vpop.f32.mrb[0].mxu0
    %v1959 = vadd.f32 %v1559, %v1958
    %v1960 = vpop.f32.mrb[0].mxu0
    %v1961 = vadd.f32 %v1555, %v1960
    %v1962 = vpop.f32.mrb[0].mxu0
    %v1963 = vadd.f32 %v1559, %v1962
    %1964 = vmatprep.mubr.bf16.mxu0 %v1433
    %1965 = vmatmul.mubr.bf16.gmra.mrb[0].mxu0 %v1432
    %v1966 = vpop.f32.mrb[0].mxu0
    %v1967 = vadd.f32 %v1555, %v1966
    %v1968 = vpop.f32.mrb[0].mxu0
    %v1969 = vadd.f32 %v1559, %v1968
    %v1970 = vpop.f32.mrb[0].mxu0
    %v1971 = vadd.f32 %v1555, %v1970
    %v1972 = vpop.f32.mrb[0].mxu0
    %v1973 = vadd.f32 %v1559, %v1972
    %1974 = vmatprep.mubr.bf16.mxu0 %v1435
    %1975 = vmatmul.mubr.bf16.gmra.mrb[0].mxu0 %v1434
    %v1976 = vpop.f32.mrb[0].mxu0
    %v1977 = vadd.f32 %v1555, %v1976
    %v1978 = vpop.f32.mrb[0].mxu0
    %v1979 = vadd.f32 %v1559, %v1978
    %v1980 = vpop.f32.mrb[0].mxu0
    %v1981 = vadd.f32 %v1555, %v1980
    %v1982 = vpop.f32.mrb[0].mxu0
    %v1983 = vadd.f32 %v1559, %v1982
    %1984 = vmatprep.mubr.bf16.mxu0 %v1437
    %1985 = vmatmul.mubr.bf16.gmra.mrb[0].mxu0 %v1436
    %v1986 = vpop.f32.mrb[0].mxu0
    %v1987 = vadd.f32 %v1555, %v1986
    %v1988 = vpop.f32.mrb[0].mxu0
    %v1989 = vadd.f32 %v1559, %v1988
    %v1990 = vpop.f32.mrb[0].mxu0
    %v1991 = vadd.f32 %v1555, %v1990
    %v1992 = vpop.f32.mrb[0].mxu0
    %v1993 = vadd.f32 %v1559, %v1992
    %1994 = vmatprep.mubr.bf16.mxu0 %v1439
    %1995 = vmatmul.mubr.bf16.gmra.mrb[0].mxu0 %v1438
    %v1996 = vpop.f32.mrb[0].mxu0
    %v1997 = vadd.f32 %v1555, %v1996
    %v1998 = vpop.f32.mrb[0].mxu0
    %v1999 = vadd.f32 %v1559, %v1998
    %v2000 = vpop.f32.mrb[0].mxu0
    %v2001 = vadd.f32 %v1555, %v2000
    %v2002 = vpop.f32.mrb[0].mxu0
    %v2003 = vadd.f32 %v1559, %v2002
    %2004 = vmatprep.mubr.bf16.mxu0 %v1441
    %2005 = vmatmul.mubr.bf16.gmra.mrb[0].mxu0 %v1440
    %v2006 = vpop.f32.mrb[0].mxu0
    %v2007 = vadd.f32 %v1555, %v2006
    %v2008 = vpop.f32.mrb[0].mxu0
    %v2009 = vadd.f32 %v1559, %v2008
    %v2010 = vpop.f32.mrb[0].mxu0
    %v2011 = vadd.f32 %v1555, %v2010
    %v2012 = vpop.f32.mrb[0].mxu0
    %v2013 = vadd.f32 %v1559, %v2012
    %2014 = vmatprep.mubr.bf16.mxu0 %v1443
    %2015 = vmatmul.mubr.bf16.gmra.mrb[0].mxu0 %v1442
    %v2016 = vpop.f32.mrb[0].mxu0
    %v2017 = vadd.f32 %v1555, %v2016
    %v2018 = vpop.f32.mrb[0].mxu0
    %v2019 = vadd.f32 %v1559, %v2018
    %v2020 = vpop.f32.mrb[0].mxu0
    %v2021 = vadd.f32 %v1555, %v2020
    %v2022 = vpop.f32.mrb[0].mxu0
    %v2023 = vadd.f32 %v1559, %v2022
    %2024 = vmatprep.mubr.bf16.mxu0 %v1445
    %2025 = vmatmul.mubr.bf16.gmra.mrb[0].mxu0 %v1444
    %v2026 = vpop.f32.mrb[0].mxu0
    %v2027 = vadd.f32 %v1555, %v2026
    %v2028 = vpop.f32.mrb[0].mxu0
    %v2029 = vadd.f32 %v1559, %v2028
    %v2030 = vpop.f32.mrb[0].mxu0
    %v2031 = vadd.f32 %v1555, %v2030
    %v2032 = vpop.f32.mrb[0].mxu0
    %v2033 = vadd.f32 %v1559, %v2032
    %2034 = vmatprep.mubr.bf16.mxu0 %v1447
    %2035 = vmatmul.mubr.bf16.gmra.mrb[0].mxu0 %v1446
    %v2036 = vpop.f32.mrb[0].mxu0
    %v2037 = vadd.f32 %v1555, %v2036
    %v2038 = vpop.f32.mrb[0].mxu0
    %v2039 = vadd.f32 %v1559, %v2038
    %v2040 = vpop.f32.mrb[0].mxu0
    %v2041 = vadd.f32 %v1555, %v2040
    %v2042 = vpop.f32.mrb[0].mxu0
    %v2043 = vadd.f32 %v1559, %v2042
    %2044 = vmatprep.mubr.bf16.mxu0 %v1449
    %2045 = vmatmul.mubr.bf16.gmra.mrb[0].mxu0 %v1448
    %v2046 = vpop.f32.mrb[0].mxu0
    %v2047 = vadd.f32 %v1555, %v2046
    %v2048 = vpop.f32.mrb[0].mxu0
    %v2049 = vadd.f32 %v1559, %v2048
    %v2050 = vpop.f32.mrb[0].mxu0
    %v2051 = vadd.f32 %v1555, %v2050
    %v2052 = vpop.f32.mrb[0].mxu0
    %v2053 = vadd.f32 %v1559, %v2052
    %2054 = vmatprep.mubr.bf16.mxu0 %v1451
    %2055 = vmatmul.mubr.bf16.gmra.mrb[0].mxu0 %v1450
    %v2056 = vpop.f32.mrb[0].mxu0
    %v2057 = vadd.f32 %v1555, %v2056
    %v2058 = vpop.f32.mrb[0].mxu0
    %v2059 = vadd.f32 %v1559, %v2058
    %v2060 = vpop.f32.mrb[0].mxu0
    %v2061 = vadd.f32 %v1555, %v2060
    %v2062 = vpop.f32.mrb[0].mxu0
    %v2063 = vadd.f32 %v1559, %v2062
    %2064 = vmatprep.mubr.bf16.mxu0 %v1453
    %2065 = vmatmul.mubr.bf16.gmra.mrb[0].mxu0 %v1452
    %v2066 = vpop.f32.mrb[0].mxu0
    %v2067 = vadd.f32 %v1555, %v2066
    %v2068 = vpop.f32.mrb[0].mxu0
    %v2069 = vadd.f32 %v1559, %v2068
    %v2070 = vpop.f32.mrb[0].mxu0
    %v2071 = vadd.f32 %v1555, %v2070
    %v2072 = vpop.f32.mrb[0].mxu0
    %v2073 = vadd.f32 %v1559, %v2072
    %2074 = vmatprep.mubr.bf16.mxu0 %v1455
    %2075 = vmatmul.mubr.bf16.gmra.mrb[0].mxu0 %v1454
    %v2076 = vpop.f32.mrb[0].mxu0
    %v2077 = vadd.f32 %v1555, %v2076
    %v2078 = vpop.f32.mrb[0].mxu0
    %v2079 = vadd.f32 %v1559, %v2078
    %v2080 = vpop.f32.mrb[0].mxu0
    %v2081 = vadd.f32 %v1555, %v2080
    %v2082 = vpop.f32.mrb[0].mxu0
    %v2083 = vadd.f32 %v1559, %v2082
    %2084 = vmatprep.mubr.bf16.mxu0 %v1457
    %2085 = vmatmul.mubr.bf16.gmra.mrb[0].mxu0 %v1456
    %v2086 = vpop.f32.mrb[0].mxu0
    %v2087 = vadd.f32 %v1555, %v2086
    %v2088 = vpop.f32.mrb[0].mxu0
    %v2089 = vadd.f32 %v1559, %v2088
    %v2090 = vpop.f32.mrb[0].mxu0
    %v2091 = vadd.f32 %v1555, %v2090
    %v2092 = vpop.f32.mrb[0].mxu0
    %v2093 = vadd.f32 %v1559, %v2092
    %2094 = vmatprep.mubr.bf16.mxu0 %v1459
    %2095 = vmatmul.mubr.bf16.gmra.mrb[0].mxu0 %v1458
    %v2096 = vpop.f32.mrb[0].mxu0
    %v2097 = vadd.f32 %v1555, %v2096
    %v2098 = vpop.f32.mrb[0].mxu0
    %v2099 = vadd.f32 %v1559, %v2098
    %v2100 = vpop.f32.mrb[0].mxu0
    %v2101 = vadd.f32 %v1555, %v2100
    %v2102 = vpop.f32.mrb[0].mxu0
    %v2103 = vadd.f32 %v1559, %v2102
    %2104 = vmatprep.mubr.bf16.mxu0 %v1461
    %2105 = vmatmul.mubr.bf16.gmra.mrb[0].mxu0 %v1460
    %v2106 = vpop.f32.mrb[0].mxu0
    %v2107 = vadd.f32 %v1555, %v2106
    %v2108 = vpop.f32.mrb[0].mxu0
    %v2109 = vadd.f32 %v1559, %v2108
    %v2110 = vpop.f32.mrb[0].mxu0
    %v2111 = vadd.f32 %v1555, %v2110
    %v2112 = vpop.f32.mrb[0].mxu0
    %v2113 = vadd.f32 %v1559, %v2112
    %2114 = vmatprep.mubr.bf16.mxu0 %v1463
    %2115 = vmatmul.mubr.bf16.gmra.mrb[0].mxu0 %v1462
    %v2116 = vpop.f32.mrb[0].mxu0
    %v2117 = vadd.f32 %v1555, %v2116
    %v2118 = vpop.f32.mrb[0].mxu0
    %v2119 = vadd.f32 %v1559, %v2118
    %v2120 = vpop.f32.mrb[0].mxu0
    %v2121 = vadd.f32 %v1555, %v2120
    %v2122 = vpop.f32.mrb[0].mxu0
    %v2123 = vadd.f32 %v1559, %v2122
    %2124 = vmatprep.mubr.bf16.mxu0 %v1465
    %2125 = vmatmul.mubr.bf16.gmra.mrb[0].mxu0 %v1464
    %v2126 = vpop.f32.mrb[0].mxu0
    %v2127 = vadd.f32 %v1555, %v2126
    %v2128 = vpop.f32.mrb[0].mxu0
    %v2129 = vadd.f32 %v1559, %v2128
    %v2130 = vpop.f32.mrb[0].mxu0
    %v2131 = vadd.f32 %v1555, %v2130
    %v2132 = vpop.f32.mrb[0].mxu0
    %v2133 = vadd.f32 %v1559, %v2132
    %2134 = vmatprep.mubr.bf16.mxu0 %v1467
    %2135 = vmatmul.mubr.bf16.gmra.mrb[0].mxu0 %v1466
    %v2136 = vpop.f32.mrb[0].mxu0
    %v2137 = vadd.f32 %v1555, %v2136
    %v2138 = vpop.f32.mrb[0].mxu0
    %v2139 = vadd.f32 %v1559, %v2138
    %v2140 = vpop.f32.mrb[0].mxu0
    %v2141 = vadd.f32 %v1555, %v2140
    %v2142 = vpop.f32.mrb[0].mxu0
    %v2143 = vadd.f32 %v1559, %v2142
    %2144 = vmatprep.mubr.bf16.mxu0 %v1469
    %2145 = vmatmul.mubr.bf16.gmra.mrb[0].mxu0 %v1468
    %v2146 = vpop.f32.mrb[0].mxu0
    %v2147 = vadd.f32 %v1555, %v2146
    %v2148 = vpop.f32.mrb[0].mxu0
    %v2149 = vadd.f32 %v1559, %v2148
    %v2150 = vpop.f32.mrb[0].mxu0
    %v2151 = vadd.f32 %v1555, %v2150
    %v2152 = vpop.f32.mrb[0].mxu0
    %v2153 = vadd.f32 %v1559, %v2152
    %2154 = vmatprep.mubr.bf16.mxu0 %v1471
    %2155 = vmatmul.mubr.bf16.gmra.mrb[0].mxu0 %v1470
    %v2156 = vpop.f32.mrb[0].mxu0
    %v2157 = vadd.f32 %v1555, %v2156
    %v2158 = vpop.f32.mrb[0].mxu0
    %v2159 = vadd.f32 %v1559, %v2158
    %v2160 = vpop.f32.mrb[0].mxu0
    %v2161 = vadd.f32 %v1555, %v2160
    %v2162 = vpop.f32.mrb[0].mxu0
    %v2163 = vadd.f32 %v1559, %v2162
    %2164 = vmatprep.mubr.bf16.mxu0 %v1473
    %2165 = vmatmul.mubr.bf16.gmra.mrb[0].mxu0 %v1472
    %v2166 = vpop.f32.mrb[0].mxu0
    %v2167 = vadd.f32 %v1555, %v2166
    %v2168 = vpop.f32.mrb[0].mxu0
    %v2169 = vadd.f32 %v1559, %v2168
    %v2170 = vpop.f32.mrb[0].mxu0
    %v2171 = vadd.f32 %v1555, %v2170
    %v2172 = vpop.f32.mrb[0].mxu0
    %v2173 = vadd.f32 %v1559, %v2172
    %2174 = vmatprep.mubr.bf16.mxu0 %v1475
    %2175 = vmatmul.mubr.bf16.gmra.mrb[0].mxu0 %v1474
    %v2176 = vpop.f32.mrb[0].mxu0
    %v2177 = vadd.f32 %v1555, %v2176
    %v2178 = vpop.f32.mrb[0].mxu0
    %v2179 = vadd.f32 %v1559, %v2178
    %v2180 = vpop.f32.mrb[0].mxu0
    %v2181 = vadd.f32 %v1555, %v2180
    %v2182 = vpop.f32.mrb[0].mxu0
    %v2183 = vadd.f32 %v1559, %v2182
    %2184 = vmatprep.mubr.bf16.mxu0 %v1477
    %2185 = vmatmul.mubr.bf16.gmra.mrb[0].mxu0 %v1476
    %v2186 = vpop.f32.mrb[0].mxu0
    %v2187 = vadd.f32 %v1555, %v2186
    %v2188 = vpop.f32.mrb[0].mxu0
    %v2189 = vadd.f32 %v1559, %v2188
    %v2190 = vpop.f32.mrb[0].mxu0
    %v2191 = vadd.f32 %v1555, %v2190
    %v2192 = vpop.f32.mrb[0].mxu0
    %v2193 = vadd.f32 %v1559, %v2192
    %2194 = vmatprep.mubr.bf16.mxu0 %v1479
    %2195 = vmatmul.mubr.bf16.gmra.mrb[0].mxu0 %v1478
    %v2196 = vpop.f32.mrb[0].mxu0
    %v2197 = vadd.f32 %v1555, %v2196
    %v2198 = vpop.f32.mrb[0].mxu0
    %v2199 = vadd.f32 %v1559, %v2198
    %v2200 = vpop.f32.mrb[0].mxu0
    %v2201 = vadd.f32 %v1555, %v2200
    %v2202 = vpop.f32.mrb[0].mxu0
    %v2203 = vadd.f32 %v1559, %v2202
    %2204 = vmatprep.mubr.bf16.mxu0 %v1481
    %2205 = vmatmul.mubr.bf16.gmra.mrb[0].mxu0 %v1480
    %v2206 = vpop.f32.mrb[0].mxu0
    %v2207 = vadd.f32 %v1555, %v2206
    %v2208 = vpop.f32.mrb[0].mxu0
    %v2209 = vadd.f32 %v1559, %v2208
    %v2210 = vpop.f32.mrb[0].mxu0
    %v2211 = vadd.f32 %v1555, %v2210
    %v2212 = vpop.f32.mrb[0].mxu0
    %v2213 = vadd.f32 %v1559, %v2212
    %2214 = vmatprep.mubr.bf16.mxu0 %v1483
    %2215 = vmatmul.mubr.bf16.gmra.mrb[0].mxu0 %v1482
    %v2216 = vpop.f32.mrb[0].mxu0
    %v2217 = vadd.f32 %v1555, %v2216
    %v2218 = vpop.f32.mrb[0].mxu0
    %v2219 = vadd.f32 %v1559, %v2218
    %v2220 = vpop.f32.mrb[0].mxu0
    %v2221 = vadd.f32 %v1555, %v2220
    %v2222 = vpop.f32.mrb[0].mxu0
    %v2223 = vadd.f32 %v1559, %v2222
    %2224 = vmatprep.mubr.bf16.mxu0 %v1485
    %2225 = vmatmul.mubr.bf16.gmra.mrb[0].mxu0 %v1484
    %v2226 = vpop.f32.mrb[0].mxu0
    %v2227 = vadd.f32 %v1555, %v2226
    %v2228 = vpop.f32.mrb[0].mxu0
    %v2229 = vadd.f32 %v1559, %v2228
    %v2230 = vpop.f32.mrb[0].mxu0
    %v2231 = vadd.f32 %v1555, %v2230
    %v2232 = vpop.f32.mrb[0].mxu0
    %v2233 = vadd.f32 %v1559, %v2232
    %2234 = vmatprep.mubr.bf16.mxu0 %v1487
    %2235 = vmatmul.mubr.bf16.gmra.mrb[0].mxu0 %v1486
    %v2236 = vpop.f32.mrb[0].mxu0
    %v2237 = vadd.f32 %v1555, %v2236
    %v2238 = vpop.f32.mrb[0].mxu0
    %v2239 = vadd.f32 %v1559, %v2238
    %v2240 = vpop.f32.mrb[0].mxu0
    %v2241 = vadd.f32 %v1555, %v2240
    %v2242 = vpop.f32.mrb[0].mxu0
    %v2243 = vadd.f32 %v1559, %v2242
    %2244 = vmatprep.mubr.bf16.mxu0 %v1489
    %2245 = vmatmul.mubr.bf16.gmra.mrb[0].mxu0 %v1488
    %v2246 = vpop.f32.mrb[0].mxu0
    %v2247 = vadd.f32 %v1555, %v2246
    %v2248 = vpop.f32.mrb[0].mxu0
    %v2249 = vadd.f32 %v1559, %v2248
    %v2250 = vpop.f32.mrb[0].mxu0
    %v2251 = vadd.f32 %v1555, %v2250
    %v2252 = vpop.f32.mrb[0].mxu0
    %v2253 = vadd.f32 %v1559, %v2252
    %2254 = vmatprep.mubr.bf16.mxu0 %v1491
    %2255 = vmatmul.mubr.bf16.gmra.mrb[0].mxu0 %v1490
    %v2256 = vpop.f32.mrb[0].mxu0
    %v2257 = vadd.f32 %v1555, %v2256
    %v2258 = vpop.f32.mrb[0].mxu0
    %v2259 = vadd.f32 %v1559, %v2258
    %v2260 = vpop.f32.mrb[0].mxu0
    %v2261 = vadd.f32 %v1555, %v2260
    %v2262 = vpop.f32.mrb[0].mxu0
    %v2263 = vadd.f32 %v1559, %v2262
    %2264 = vmatprep.mubr.bf16.mxu0 %v1493
    %2265 = vmatmul.mubr.bf16.gmra.mrb[0].mxu0 %v1492
    %v2266 = vpop.f32.mrb[0].mxu0
    %v2267 = vadd.f32 %v1555, %v2266
    %v2268 = vpop.f32.mrb[0].mxu0
    %v2269 = vadd.f32 %v1559, %v2268
    %v2270 = vpop.f32.mrb[0].mxu0
    %v2271 = vadd.f32 %v1555, %v2270
    %v2272 = vpop.f32.mrb[0].mxu0
    %v2273 = vadd.f32 %v1559, %v2272
    %2274 = vmatprep.mubr.bf16.mxu0 %v1495
    %2275 = vmatmul.mubr.bf16.gmra.mrb[0].mxu0 %v1494
    %v2276 = vpop.f32.mrb[0].mxu0
    %v2277 = vadd.f32 %v1555, %v2276
    %v2278 = vpop.f32.mrb[0].mxu0
    %v2279 = vadd.f32 %v1559, %v2278
    %v2280 = vpop.f32.mrb[0].mxu0
    %v2281 = vadd.f32 %v1555, %v2280
    %v2282 = vpop.f32.mrb[0].mxu0
    %v2283 = vadd.f32 %v1559, %v2282
    %2284 = vmatprep.mubr.bf16.mxu0 %v1497
    %2285 = vmatmul.mubr.bf16.gmra.mrb[0].mxu0 %v1496
    %v2286 = vpop.f32.mrb[0].mxu0
    %v2287 = vadd.f32 %v1555, %v2286
    %v2288 = vpop.f32.mrb[0].mxu0
    %v2289 = vadd.f32 %v1559, %v2288
    %v2290 = vpop.f32.mrb[0].mxu0
    %v2291 = vadd.f32 %v1555, %v2290
    %v2292 = vpop.f32.mrb[0].mxu0
    %v2293 = vadd.f32 %v1559, %v2292
    %2294 = vmatprep.mubr.bf16.mxu0 %v1499
    %2295 = vmatmul.mubr.bf16.gmra.mrb[0].mxu0 %v1498
    %v2296 = vpop.f32.mrb[0].mxu0
    %v2297 = vadd.f32 %v1555, %v2296
    %v2298 = vpop.f32.mrb[0].mxu0
    %v2299 = vadd.f32 %v1559, %v2298
    %v2300 = vpop.f32.mrb[0].mxu0
    %v2301 = vadd.f32 %v1555, %v2300
    %v2302 = vpop.f32.mrb[0].mxu0
    %v2303 = vadd.f32 %v1559, %v2302
    %2304 = vmatprep.mubr.bf16.mxu0 %v1501
    %2305 = vmatmul.mubr.bf16.gmra.mrb[0].mxu0 %v1500
    %v2306 = vpop.f32.mrb[0].mxu0
    %v2307 = vadd.f32 %v1555, %v2306
    %v2308 = vpop.f32.mrb[0].mxu0
    %v2309 = vadd.f32 %v1559, %v2308
    %v2310 = vpop.f32.mrb[0].mxu0
    %v2311 = vadd.f32 %v1555, %v2310
    %v2312 = vpop.f32.mrb[0].mxu0
    %v2313 = vadd.f32 %v1559, %v2312
    %2314 = vmatprep.mubr.bf16.mxu0 %v1503
    %2315 = vmatmul.mubr.bf16.gmra.mrb[0].mxu0 %v1502
    %v2316 = vpop.f32.mrb[0].mxu0
    %v2317 = vadd.f32 %v1555, %v2316
    %v2318 = vpop.f32.mrb[0].mxu0
    %v2319 = vadd.f32 %v1559, %v2318
    %v2320 = vpop.f32.mrb[0].mxu0
    %v2321 = vadd.f32 %v1555, %v2320
    %v2322 = vpop.f32.mrb[0].mxu0
    %v2323 = vadd.f32 %v1559, %v2322
    %2324 = vmatprep.mubr.bf16.mxu0 %v1505
    %2325 = vmatmul.mubr.bf16.gmra.mrb[0].mxu0 %v1504
    %v2326 = vpop.f32.mrb[0].mxu0
    %v2327 = vadd.f32 %v1555, %v2326
    %v2328 = vpop.f32.mrb[0].mxu0
    %v2329 = vadd.f32 %v1559, %v2328
    %v2330 = vpop.f32.mrb[0].mxu0
    %v2331 = vadd.f32 %v1555, %v2330
    %v2332 = vpop.f32.mrb[0].mxu0
    %v2333 = vadd.f32 %v1559, %v2332
    %2334 = vmatprep.mubr.bf16.mxu0 %v1507
    %2335 = vmatmul.mubr.bf16.gmra.mrb[0].mxu0 %v1506
    %v2336 = vpop.f32.mrb[0].mxu0
    %v2337 = vadd.f32 %v1555, %v2336
    %v2338 = vpop.f32.mrb[0].mxu0
    %v2339 = vadd.f32 %v1559, %v2338
    %v2340 = vpop.f32.mrb[0].mxu0
    %v2341 = vadd.f32 %v1555, %v2340
    %v2342 = vpop.f32.mrb[0].mxu0
    %v2343 = vadd.f32 %v1559, %v2342
    %2344 = vmatprep.mubr.bf16.mxu0 %v1509
    %2345 = vmatmul.mubr.bf16.gmra.mrb[0].mxu0 %v1508
    %v2346 = vpop.f32.mrb[0].mxu0
    %v2347 = vadd.f32 %v1555, %v2346
    %v2348 = vpop.f32.mrb[0].mxu0
    %v2349 = vadd.f32 %v1559, %v2348
    %v2350 = vpop.f32.mrb[0].mxu0
    %v2351 = vadd.f32 %v1555, %v2350
    %v2352 = vpop.f32.mrb[0].mxu0
    %v2353 = vadd.f32 %v1559, %v2352
    %2354 = vmatprep.mubr.bf16.mxu0 %v1511
    %2355 = vmatmul.mubr.bf16.gmra.mrb[0].mxu0 %v1510
    %v2356 = vpop.f32.mrb[0].mxu0
    %v2357 = vadd.f32 %v1555, %v2356
    %v2358 = vpop.f32.mrb[0].mxu0
    %v2359 = vadd.f32 %v1559, %v2358
    %v2360 = vpop.f32.mrb[0].mxu0
    %v2361 = vadd.f32 %v1555, %v2360
    %v2362 = vpop.f32.mrb[0].mxu0
    %v2363 = vadd.f32 %v1559, %v2362
    %2364 = vmatprep.mubr.bf16.mxu0 %v1513
    %2365 = vmatmul.mubr.bf16.gmra.mrb[0].mxu0 %v1512
    %v2366 = vpop.f32.mrb[0].mxu0
    %v2367 = vadd.f32 %v1555, %v2366
    %v2368 = vpop.f32.mrb[0].mxu0
    %v2369 = vadd.f32 %v1559, %v2368
    %v2370 = vpop.f32.mrb[0].mxu0
    %v2371 = vadd.f32 %v1555, %v2370
    %v2372 = vpop.f32.mrb[0].mxu0
    %v2373 = vadd.f32 %v1559, %v2372
    %2374 = vmatprep.mubr.bf16.mxu0 %v1515
    %2375 = vmatmul.mubr.bf16.gmra.mrb[0].mxu0 %v1514
    %v2376 = vpop.f32.mrb[0].mxu0
    %v2377 = vadd.f32 %v1555, %v2376
    %v2378 = vpop.f32.mrb[0].mxu0
    %v2379 = vadd.f32 %v1559, %v2378
    %v2380 = vpop.f32.mrb[0].mxu0
    %v2381 = vadd.f32 %v1555, %v2380
    %v2382 = vpop.f32.mrb[0].mxu0
    %v2383 = vadd.f32 %v1559, %v2382
    %2384 = vmatprep.mubr.bf16.mxu0 %v1517
    %2385 = vmatmul.mubr.bf16.gmra.mrb[0].mxu0 %v1516
    %v2386 = vpop.f32.mrb[0].mxu0
    %v2387 = vadd.f32 %v1555, %v2386
    %v2388 = vpop.f32.mrb[0].mxu0
    %v2389 = vadd.f32 %v1559, %v2388
    %v2390 = vpop.f32.mrb[0].mxu0
    %v2391 = vadd.f32 %v1555, %v2390
    %v2392 = vpop.f32.mrb[0].mxu0
    %v2393 = vadd.f32 %v1559, %v2392
    %2394 = vdwg.mxu0
    %v2395 = vmax.f32 %v1757, 0.0
    %v2396 = vmax.f32 %v1759, 0.0
    %v2397 = vmax.f32 %v1761, 0.0
    %v2398 = vmax.f32 %v1763, 0.0
    %v2399 = vmax.f32 %v1767, 0.0
    %v2400 = vmax.f32 %v1769, 0.0
    %v2401 = vmax.f32 %v1771, 0.0
    %v2402 = vmax.f32 %v1773, 0.0
    %v2403 = vmax.f32 %v1777, 0.0
    %v2404 = vmax.f32 %v1779, 0.0
    %v2405 = vmax.f32 %v1781, 0.0
    %v2406 = vmax.f32 %v1783, 0.0
    %v2407 = vmax.f32 %v1787, 0.0
    %v2408 = vmax.f32 %v1789, 0.0
    %v2409 = vmax.f32 %v1791, 0.0
    %v2410 = vmax.f32 %v1793, 0.0
    %v2411 = vmax.f32 %v1797, 0.0
    %v2412 = vmax.f32 %v1799, 0.0
    %v2413 = vmax.f32 %v1801, 0.0
    %v2414 = vmax.f32 %v1803, 0.0
    %v2415 = vmax.f32 %v1807, 0.0
    %v2416 = vmax.f32 %v1809, 0.0
    %v2417 = vmax.f32 %v1811, 0.0
    %v2418 = vmax.f32 %v1813, 0.0
    %v2419 = vmax.f32 %v1817, 0.0
    %v2420 = vmax.f32 %v1819, 0.0
    %v2421 = vmax.f32 %v1821, 0.0
    %v2422 = vmax.f32 %v1823, 0.0
    %v2423 = vmax.f32 %v1827, 0.0
    %v2424 = vmax.f32 %v1829, 0.0
    %v2425 = vmax.f32 %v1831, 0.0
    %v2426 = vmax.f32 %v1833, 0.0
    %v2427 = vmax.f32 %v1837, 0.0
    %v2428 = vmax.f32 %v1839, 0.0
    %v2429 = vmax.f32 %v1841, 0.0
    %v2430 = vmax.f32 %v1843, 0.0
    %v2431 = vmax.f32 %v1847, 0.0
    %v2432 = vmax.f32 %v1849, 0.0
    %v2433 = vmax.f32 %v1851, 0.0
    %v2434 = vmax.f32 %v1853, 0.0
    %v2435 = vmax.f32 %v1857, 0.0
    %v2436 = vmax.f32 %v1859, 0.0
    %v2437 = vmax.f32 %v1861, 0.0
    %v2438 = vmax.f32 %v1863, 0.0
    %v2439 = vmax.f32 %v1867, 0.0
    %v2440 = vmax.f32 %v1869, 0.0
    %v2441 = vmax.f32 %v1871, 0.0
    %v2442 = vmax.f32 %v1873, 0.0
    %v2443 = vmax.f32 %v1877, 0.0
    %v2444 = vmax.f32 %v1879, 0.0
    %v2445 = vmax.f32 %v1881, 0.0
    %v2446 = vmax.f32 %v1883, 0.0
    %v2447 = vmax.f32 %v1887, 0.0
    %v2448 = vmax.f32 %v1889, 0.0
    %v2449 = vmax.f32 %v1891, 0.0
    %v2450 = vmax.f32 %v1893, 0.0
    %v2451 = vmax.f32 %v1897, 0.0
    %v2452 = vmax.f32 %v1899, 0.0
    %v2453 = vmax.f32 %v1901, 0.0
    %v2454 = vmax.f32 %v1903, 0.0
    %v2455 = vmax.f32 %v1907, 0.0
    %v2456 = vmax.f32 %v1909, 0.0
    %v2457 = vmax.f32 %v1911, 0.0
    %v2458 = vmax.f32 %v1913, 0.0
    %v2459 = vmax.f32 %v1917, 0.0
    %v2460 = vmax.f32 %v1919, 0.0
    %v2461 = vmax.f32 %v1921, 0.0
    %v2462 = vmax.f32 %v1923, 0.0
    %v2463 = vmax.f32 %v1927, 0.0
    %v2464 = vmax.f32 %v1929, 0.0
    %v2465 = vmax.f32 %v1931, 0.0
    %v2466 = vmax.f32 %v1933, 0.0
    %v2467 = vmax.f32 %v1937, 0.0
    %v2468 = vmax.f32 %v1939, 0.0
    %v2469 = vmax.f32 %v1941, 0.0
    %v2470 = vmax.f32 %v1943, 0.0
    %v2471 = vmax.f32 %v1947, 0.0
    %v2472 = vmax.f32 %v1949, 0.0
    %v2473 = vmax.f32 %v1951, 0.0
    %v2474 = vmax.f32 %v1953, 0.0
    %v2475 = vmax.f32 %v1957, 0.0
    %v2476 = vmax.f32 %v1959, 0.0
    %v2477 = vmax.f32 %v1961, 0.0
    %v2478 = vmax.f32 %v1963, 0.0
    %v2479 = vmax.f32 %v1967, 0.0
    %v2480 = vmax.f32 %v1969, 0.0
    %v2481 = vmax.f32 %v1971, 0.0
    %v2482 = vmax.f32 %v1973, 0.0
    %v2483 = vmax.f32 %v1977, 0.0
    %v2484 = vmax.f32 %v1979, 0.0
    %v2485 = vmax.f32 %v1981, 0.0
    %v2486 = vmax.f32 %v1983, 0.0
    %v2487 = vmax.f32 %v1987, 0.0
    %v2488 = vmax.f32 %v1989, 0.0
    %v2489 = vmax.f32 %v1991, 0.0
    %v2490 = vmax.f32 %v1993, 0.0
    %v2491 = vmax.f32 %v1997, 0.0
    %v2492 = vmax.f32 %v1999, 0.0
    %v2493 = vmax.f32 %v2001, 0.0
    %v2494 = vmax.f32 %v2003, 0.0
    %v2495 = vmax.f32 %v2007, 0.0
    %v2496 = vmax.f32 %v2009, 0.0
    %v2497 = vmax.f32 %v2011, 0.0
    %v2498 = vmax.f32 %v2013, 0.0
    %v2499 = vmax.f32 %v2017, 0.0
    %v2500 = vmax.f32 %v2019, 0.0
    %v2501 = vmax.f32 %v2021, 0.0
    %v2502 = vmax.f32 %v2023, 0.0
    %v2503 = vmax.f32 %v2027, 0.0
    %v2504 = vmax.f32 %v2029, 0.0
    %v2505 = vmax.f32 %v2031, 0.0
    %v2506 = vmax.f32 %v2033, 0.0
    %v2507 = vmax.f32 %v2037, 0.0
    %v2508 = vmax.f32 %v2039, 0.0
    %v2509 = vmax.f32 %v2041, 0.0
    %v2510 = vmax.f32 %v2043, 0.0
    %v2511 = vmax.f32 %v2047, 0.0
    %v2512 = vmax.f32 %v2049, 0.0
    %v2513 = vmax.f32 %v2051, 0.0
    %v2514 = vmax.f32 %v2053, 0.0
    %v2515 = vmax.f32 %v2057, 0.0
    %v2516 = vmax.f32 %v2059, 0.0
    %v2517 = vmax.f32 %v2061, 0.0
    %v2518 = vmax.f32 %v2063, 0.0
    %v2519 = vmax.f32 %v2067, 0.0
    %v2520 = vmax.f32 %v2069, 0.0
    %v2521 = vmax.f32 %v2071, 0.0
    %v2522 = vmax.f32 %v2073, 0.0
    %v2523 = vmax.f32 %v2077, 0.0
    %v2524 = vmax.f32 %v2079, 0.0
    %v2525 = vmax.f32 %v2081, 0.0
    %v2526 = vmax.f32 %v2083, 0.0
    %v2527 = vmax.f32 %v2087, 0.0
    %v2528 = vmax.f32 %v2089, 0.0
    %v2529 = vmax.f32 %v2091, 0.0
    %v2530 = vmax.f32 %v2093, 0.0
    %v2531 = vmax.f32 %v2097, 0.0
    %v2532 = vmax.f32 %v2099, 0.0
    %v2533 = vmax.f32 %v2101, 0.0
    %v2534 = vmax.f32 %v2103, 0.0
    %v2535 = vmax.f32 %v2107, 0.0
    %v2536 = vmax.f32 %v2109, 0.0
    %v2537 = vmax.f32 %v2111, 0.0
    %v2538 = vmax.f32 %v2113, 0.0
    %v2539 = vmax.f32 %v2117, 0.0
    %v2540 = vmax.f32 %v2119, 0.0
    %v2541 = vmax.f32 %v2121, 0.0
    %v2542 = vmax.f32 %v2123, 0.0
    %v2543 = vmax.f32 %v2127, 0.0
    %v2544 = vmax.f32 %v2129, 0.0
    %v2545 = vmax.f32 %v2131, 0.0
    %v2546 = vmax.f32 %v2133, 0.0
    %v2547 = vmax.f32 %v2137, 0.0
    %v2548 = vmax.f32 %v2139, 0.0
    %v2549 = vmax.f32 %v2141, 0.0
    %v2550 = vmax.f32 %v2143, 0.0
    %v2551 = vmax.f32 %v2147, 0.0
    %v2552 = vmax.f32 %v2149, 0.0
    %v2553 = vmax.f32 %v2151, 0.0
    %v2554 = vmax.f32 %v2153, 0.0
    %v2555 = vmax.f32 %v2157, 0.0
    %v2556 = vmax.f32 %v2159, 0.0
    %v2557 = vmax.f32 %v2161, 0.0
    %v2558 = vmax.f32 %v2163, 0.0
    %v2559 = vmax.f32 %v2167, 0.0
    %v2560 = vmax.f32 %v2169, 0.0
    %v2561 = vmax.f32 %v2171, 0.0
    %v2562 = vmax.f32 %v2173, 0.0
    %v2563 = vmax.f32 %v2177, 0.0
    %v2564 = vmax.f32 %v2179, 0.0
    %v2565 = vmax.f32 %v2181, 0.0
    %v2566 = vmax.f32 %v2183, 0.0
    %v2567 = vmax.f32 %v2187, 0.0
    %v2568 = vmax.f32 %v2189, 0.0
    %v2569 = vmax.f32 %v2191, 0.0
    %v2570 = vmax.f32 %v2193, 0.0
    %v2571 = vmax.f32 %v2197, 0.0
    %v2572 = vmax.f32 %v2199, 0.0
    %v2573 = vmax.f32 %v2201, 0.0
    %v2574 = vmax.f32 %v2203, 0.0
    %v2575 = vmax.f32 %v2207, 0.0
    %v2576 = vmax.f32 %v2209, 0.0
    %v2577 = vmax.f32 %v2211, 0.0
    %v2578 = vmax.f32 %v2213, 0.0
    %v2579 = vmax.f32 %v2217, 0.0
    %v2580 = vmax.f32 %v2219, 0.0
    %v2581 = vmax.f32 %v2221, 0.0
    %v2582 = vmax.f32 %v2223, 0.0
    %v2583 = vmax.f32 %v2227, 0.0
    %v2584 = vmax.f32 %v2229, 0.0
    %v2585 = vmax.f32 %v2231, 0.0
    %v2586 = vmax.f32 %v2233, 0.0
    %v2587 = vmax.f32 %v2237, 0.0
    %v2588 = vmax.f32 %v2239, 0.0
    %v2589 = vmax.f32 %v2241, 0.0
    %v2590 = vmax.f32 %v2243, 0.0
    %v2591 = vmax.f32 %v2247, 0.0
    %v2592 = vmax.f32 %v2249, 0.0
    %v2593 = vmax.f32 %v2251, 0.0
    %v2594 = vmax.f32 %v2253, 0.0
    %v2595 = vmax.f32 %v2257, 0.0
    %v2596 = vmax.f32 %v2259, 0.0
    %v2597 = vmax.f32 %v2261, 0.0
    %v2598 = vmax.f32 %v2263, 0.0
    %v2599 = vmax.f32 %v2267, 0.0
    %v2600 = vmax.f32 %v2269, 0.0
    %v2601 = vmax.f32 %v2271, 0.0
    %v2602 = vmax.f32 %v2273, 0.0
    %v2603 = vmax.f32 %v2277, 0.0
    %v2604 = vmax.f32 %v2279, 0.0
    %v2605 = vmax.f32 %v2281, 0.0
    %v2606 = vmax.f32 %v2283, 0.0
    %v2607 = vmax.f32 %v2287, 0.0
    %v2608 = vmax.f32 %v2289, 0.0
    %v2609 = vmax.f32 %v2291, 0.0
    %v2610 = vmax.f32 %v2293, 0.0
    %v2611 = vmax.f32 %v2297, 0.0
    %v2612 = vmax.f32 %v2299, 0.0
    %v2613 = vmax.f32 %v2301, 0.0
    %v2614 = vmax.f32 %v2303, 0.0
    %v2615 = vmax.f32 %v2307, 0.0
    %v2616 = vmax.f32 %v2309, 0.0
    %v2617 = vmax.f32 %v2311, 0.0
    %v2618 = vmax.f32 %v2313, 0.0
    %v2619 = vmax.f32 %v2317, 0.0
    %v2620 = vmax.f32 %v2319, 0.0
    %v2621 = vmax.f32 %v2321, 0.0
    %v2622 = vmax.f32 %v2323, 0.0
    %v2623 = vmax.f32 %v2327, 0.0
    %v2624 = vmax.f32 %v2329, 0.0
    %v2625 = vmax.f32 %v2331, 0.0
    %v2626 = vmax.f32 %v2333, 0.0
    %v2627 = vmax.f32 %v2337, 0.0
    %v2628 = vmax.f32 %v2339, 0.0
    %v2629 = vmax.f32 %v2341, 0.0
    %v2630 = vmax.f32 %v2343, 0.0
    %v2631 = vmax.f32 %v2347, 0.0
    %v2632 = vmax.f32 %v2349, 0.0
    %v2633 = vmax.f32 %v2351, 0.0
    %v2634 = vmax.f32 %v2353, 0.0
    %v2635 = vmax.f32 %v2357, 0.0
    %v2636 = vmax.f32 %v2359, 0.0
    %v2637 = vmax.f32 %v2361, 0.0
    %v2638 = vmax.f32 %v2363, 0.0
    %v2639 = vmax.f32 %v2367, 0.0
    %v2640 = vmax.f32 %v2369, 0.0
    %v2641 = vmax.f32 %v2371, 0.0
    %v2642 = vmax.f32 %v2373, 0.0
    %v2643 = vmax.f32 %v2377, 0.0
    %v2644 = vmax.f32 %v2379, 0.0
    %v2645 = vmax.f32 %v2381, 0.0
    %v2646 = vmax.f32 %v2383, 0.0
    %v2647 = vmax.f32 %v2387, 0.0
    %v2648 = vmax.f32 %v2389, 0.0
    %v2649 = vmax.f32 %v2391, 0.0
    %v2650 = vmax.f32 %v2393, 0.0
    %v2651 = vpack.c.bf16 %v2397, %v2395
    %v2652 = vpack.c.bf16 %v2398, %v2396
    %v2653 = vpack.c.bf16 %v2401, %v2399
    %v2654 = vpack.c.bf16 %v2402, %v2400
    %v2655 = vpack.c.bf16 %v2405, %v2403
    %v2656 = vpack.c.bf16 %v2406, %v2404
    %v2657 = vpack.c.bf16 %v2409, %v2407
    %v2658 = vpack.c.bf16 %v2410, %v2408
    %v2659 = vpack.c.bf16 %v2413, %v2411
    %v2660 = vpack.c.bf16 %v2414, %v2412
    %v2661 = vpack.c.bf16 %v2417, %v2415
    %v2662 = vpack.c.bf16 %v2418, %v2416
    %v2663 = vpack.c.bf16 %v2421, %v2419
    %v2664 = vpack.c.bf16 %v2422, %v2420
    %v2665 = vpack.c.bf16 %v2425, %v2423
    %v2666 = vpack.c.bf16 %v2426, %v2424
    %v2667 = vpack.c.bf16 %v2429, %v2427
    %v2668 = vpack.c.bf16 %v2430, %v2428
    %v2669 = vpack.c.bf16 %v2433, %v2431
    %v2670 = vpack.c.bf16 %v2434, %v2432
    %v2671 = vpack.c.bf16 %v2437, %v2435
    %v2672 = vpack.c.bf16 %v2438, %v2436
    %v2673 = vpack.c.bf16 %v2441, %v2439
    %v2674 = vpack.c.bf16 %v2442, %v2440
    %v2675 = vpack.c.bf16 %v2445, %v2443
    %v2676 = vpack.c.bf16 %v2446, %v2444
    %v2677 = vpack.c.bf16 %v2449, %v2447
    %v2678 = vpack.c.bf16 %v2450, %v2448
    %v2679 = vpack.c.bf16 %v2453, %v2451
    %v2680 = vpack.c.bf16 %v2454, %v2452
    %v2681 = vpack.c.bf16 %v2457, %v2455
    %v2682 = vpack.c.bf16 %v2458, %v2456
    %v2683 = vpack.c.bf16 %v2461, %v2459
    %v2684 = vpack.c.bf16 %v2462, %v2460
    %v2685 = vpack.c.bf16 %v2465, %v2463
    %v2686 = vpack.c.bf16 %v2466, %v2464
    %v2687 = vpack.c.bf16 %v2469, %v2467
    %v2688 = vpack.c.bf16 %v2470, %v2468
    %v2689 = vpack.c.bf16 %v2473, %v2471
    %v2690 = vpack.c.bf16 %v2474, %v2472
    %v2691 = vpack.c.bf16 %v2477, %v2475
    %v2692 = vpack.c.bf16 %v2478, %v2476
    %v2693 = vpack.c.bf16 %v2481, %v2479
    %v2694 = vpack.c.bf16 %v2482, %v2480
    %v2695 = vpack.c.bf16 %v2485, %v2483
    %v2696 = vpack.c.bf16 %v2486, %v2484
    %v2697 = vpack.c.bf16 %v2489, %v2487
    %v2698 = vpack.c.bf16 %v2490, %v2488
    %v2699 = vpack.c.bf16 %v2493, %v2491
    %v2700 = vpack.c.bf16 %v2494, %v2492
    %v2701 = vpack.c.bf16 %v2497, %v2495
    %v2702 = vpack.c.bf16 %v2498, %v2496
    %v2703 = vpack.c.bf16 %v2501, %v2499
    %v2704 = vpack.c.bf16 %v2502, %v2500
    %v2705 = vpack.c.bf16 %v2505, %v2503
    %v2706 = vpack.c.bf16 %v2506, %v2504
    %v2707 = vpack.c.bf16 %v2509, %v2507
    %v2708 = vpack.c.bf16 %v2510, %v2508
    %v2709 = vpack.c.bf16 %v2513, %v2511
    %v2710 = vpack.c.bf16 %v2514, %v2512
    %v2711 = vpack.c.bf16 %v2517, %v2515
    %v2712 = vpack.c.bf16 %v2518, %v2516
    %v2713 = vpack.c.bf16 %v2521, %v2519
    %v2714 = vpack.c.bf16 %v2522, %v2520
    %v2715 = vpack.c.bf16 %v2525, %v2523
    %v2716 = vpack.c.bf16 %v2526, %v2524
    %v2717 = vpack.c.bf16 %v2529, %v2527
    %v2718 = vpack.c.bf16 %v2530, %v2528
    %v2719 = vpack.c.bf16 %v2533, %v2531
    %v2720 = vpack.c.bf16 %v2534, %v2532
    %v2721 = vpack.c.bf16 %v2537, %v2535
    %v2722 = vpack.c.bf16 %v2538, %v2536
    %v2723 = vpack.c.bf16 %v2541, %v2539
    %v2724 = vpack.c.bf16 %v2542, %v2540
    %v2725 = vpack.c.bf16 %v2545, %v2543
    %v2726 = vpack.c.bf16 %v2546, %v2544
    %v2727 = vpack.c.bf16 %v2549, %v2547
    %v2728 = vpack.c.bf16 %v2550, %v2548
    %v2729 = vpack.c.bf16 %v2553, %v2551
    %v2730 = vpack.c.bf16 %v2554, %v2552
    %v2731 = vpack.c.bf16 %v2557, %v2555
    %v2732 = vpack.c.bf16 %v2558, %v2556
    %v2733 = vpack.c.bf16 %v2561, %v2559
    %v2734 = vpack.c.bf16 %v2562, %v2560
    %v2735 = vpack.c.bf16 %v2565, %v2563
    %v2736 = vpack.c.bf16 %v2566, %v2564
    %v2737 = vpack.c.bf16 %v2569, %v2567
    %v2738 = vpack.c.bf16 %v2570, %v2568
    %v2739 = vpack.c.bf16 %v2573, %v2571
    %v2740 = vpack.c.bf16 %v2574, %v2572
    %v2741 = vpack.c.bf16 %v2577, %v2575
    %v2742 = vpack.c.bf16 %v2578, %v2576
    %v2743 = vpack.c.bf16 %v2581, %v2579
    %v2744 = vpack.c.bf16 %v2582, %v2580
    %v2745 = vpack.c.bf16 %v2585, %v2583
    %v2746 = vpack.c.bf16 %v2586, %v2584
    %v2747 = vpack.c.bf16 %v2589, %v2587
    %v2748 = vpack.c.bf16 %v2590, %v2588
    %v2749 = vpack.c.bf16 %v2593, %v2591
    %v2750 = vpack.c.bf16 %v2594, %v2592
    %v2751 = vpack.c.bf16 %v2597, %v2595
    %v2752 = vpack.c.bf16 %v2598, %v2596
    %v2753 = vpack.c.bf16 %v2601, %v2599
    %v2754 = vpack.c.bf16 %v2602, %v2600
    %v2755 = vpack.c.bf16 %v2605, %v2603
    %v2756 = vpack.c.bf16 %v2606, %v2604
    %v2757 = vpack.c.bf16 %v2609, %v2607
    %v2758 = vpack.c.bf16 %v2610, %v2608
    %v2759 = vpack.c.bf16 %v2613, %v2611
    %v2760 = vpack.c.bf16 %v2614, %v2612
    %v2761 = vpack.c.bf16 %v2617, %v2615
    %v2762 = vpack.c.bf16 %v2618, %v2616
    %v2763 = vpack.c.bf16 %v2621, %v2619
    %v2764 = vpack.c.bf16 %v2622, %v2620
    %v2765 = vpack.c.bf16 %v2625, %v2623
    %v2766 = vpack.c.bf16 %v2626, %v2624
    %v2767 = vpack.c.bf16 %v2629, %v2627
    %v2768 = vpack.c.bf16 %v2630, %v2628
    %v2769 = vpack.c.bf16 %v2633, %v2631
    %v2770 = vpack.c.bf16 %v2634, %v2632
    %v2771 = vpack.c.bf16 %v2637, %v2635
    %v2772 = vpack.c.bf16 %v2638, %v2636
    %v2773 = vpack.c.bf16 %v2641, %v2639
    %v2774 = vpack.c.bf16 %v2642, %v2640
    %v2775 = vpack.c.bf16 %v2645, %v2643
    %v2776 = vpack.c.bf16 %v2646, %v2644
    %v2777 = vpack.c.bf16 %v2649, %v2647
    %v2778 = vpack.c.bf16 %v2650, %v2648
    %v2779 = vld [vmem:[%s5] sm:$0xf]
    %v2780 = vld [vmem:[%s5 + $0x4] sm:$0xf]
    %v2781 = vld [vmem:[%s5 + $0x8] sm:$0xf]
    %v2782 = vld [vmem:[%s5 + $0xc] sm:$0xf]
    %v2783 = vld [vmem:[%s5 + $0x10] sm:$0xf]
    %v2784 = vld [vmem:[%s5 + $0x14] sm:$0xf]
    %v2785 = vld [vmem:[%s5 + $0x18] sm:$0xf]
    %v2786 = vld [vmem:[%s5 + $0x1c] sm:$0xf]
    %v2787 = vld [vmem:[%s5 + $0x20] sm:$0xf]
    %v2788 = vld [vmem:[%s5 + $0x24] sm:$0xf]
    %v2789 = vld [vmem:[%s5 + $0x28] sm:$0xf]
    %v2790 = vld [vmem:[%s5 + $0x2c] sm:$0xf]
    %v2791 = vld [vmem:[%s5 + $0x30] sm:$0xf]
    %v2792 = vld [vmem:[%s5 + $0x34] sm:$0xf]
    %v2793 = vld [vmem:[%s5 + $0x38] sm:$0xf]
    %v2794 = vld [vmem:[%s5 + $0x3c] sm:$0xf]
    %v2795 = vld [vmem:[%s5 + $0x40] sm:$0xf]
    %v2796 = vld [vmem:[%s5 + $0x44] sm:$0xf]
    %v2797 = vld [vmem:[%s5 + $0x48] sm:$0xf]
    %v2798 = vld [vmem:[%s5 + $0x4c] sm:$0xf]
    %v2799 = vld [vmem:[%s5 + $0x50] sm:$0xf]
    %v2800 = vld [vmem:[%s5 + $0x54] sm:$0xf]
    %v2801 = vld [vmem:[%s5 + $0x58] sm:$0xf]
    %v2802 = vld [vmem:[%s5 + $0x5c] sm:$0xf]
    %v2803 = vld [vmem:[%s5 + $0x60] sm:$0xf]
    %v2804 = vld [vmem:[%s5 + $0x64] sm:$0xf]
    %v2805 = vld [vmem:[%s5 + $0x68] sm:$0xf]
    %v2806 = vld [vmem:[%s5 + $0x6c] sm:$0xf]
    %v2807 = vld [vmem:[%s5 + $0x70] sm:$0xf]
    %v2808 = vld [vmem:[%s5 + $0x74] sm:$0xf]
    %v2809 = vld [vmem:[%s5 + $0x78] sm:$0xf]
    %v2810 = vld [vmem:[%s5 + $0x7c] sm:$0xf]
    %v2811 = vld [vmem:[%s6] sm:$0x1]
    %v2813 = vlaneseq
    %v2814 = vshrl.u32 %v2813, 7
    %v2815 = vsub.s32 0, %v2814
    %v2816 = vrot.slane %v2811, %v2815
    %v2850 = vunpack.c.l.b16 %v2779
    %v2851 = vunpack.c.l.b16 %v2780
    %v2852 = vunpack.c.l.b16 %v2781
    %v2853 = vunpack.c.l.b16 %v2782
    %v2854 = vunpack.c.l.b16 %v2783
    %v2855 = vunpack.c.l.b16 %v2784
    %v2856 = vunpack.c.l.b16 %v2785
    %v2857 = vunpack.c.l.b16 %v2786
    %v2858 = vunpack.c.l.b16 %v2787
    %v2859 = vunpack.c.l.b16 %v2788
    %v2860 = vunpack.c.l.b16 %v2789
    %v2861 = vunpack.c.l.b16 %v2790
    %v2862 = vunpack.c.l.b16 %v2791
    %v2863 = vunpack.c.l.b16 %v2792
    %v2864 = vunpack.c.l.b16 %v2793
    %v2865 = vunpack.c.l.b16 %v2794
    %v2866 = vunpack.c.l.b16 %v2795
    %v2867 = vunpack.c.l.b16 %v2796
    %v2868 = vunpack.c.l.b16 %v2797
    %v2869 = vunpack.c.l.b16 %v2798
    %v2870 = vunpack.c.l.b16 %v2799
    %v2871 = vunpack.c.l.b16 %v2800
    %v2872 = vunpack.c.l.b16 %v2801
    %v2873 = vunpack.c.l.b16 %v2802
    %v2874 = vunpack.c.l.b16 %v2803
    %v2875 = vunpack.c.l.b16 %v2804
    %v2876 = vunpack.c.l.b16 %v2805
    %v2877 = vunpack.c.l.b16 %v2806
    %v2878 = vunpack.c.l.b16 %v2807
    %v2879 = vunpack.c.l.b16 %v2808
    %v2880 = vunpack.c.l.b16 %v2809
    %v2881 = vunpack.c.l.b16 %v2810
    %v2882 = vpack.c.b16 %v2851, %v2850
    %v2883 = vpack.c.b16 %v2853, %v2852
    %v2884 = vpack.c.b16 %v2855, %v2854
    %v2885 = vpack.c.b16 %v2857, %v2856
    %v2886 = vpack.c.b16 %v2859, %v2858
    %v2887 = vpack.c.b16 %v2861, %v2860
    %v2888 = vpack.c.b16 %v2863, %v2862
    %v2889 = vpack.c.b16 %v2865, %v2864
    %v2890 = vpack.c.b16 %v2867, %v2866
    %v2891 = vpack.c.b16 %v2869, %v2868
    %v2892 = vpack.c.b16 %v2871, %v2870
    %v2893 = vpack.c.b16 %v2873, %v2872
    %v2894 = vpack.c.b16 %v2875, %v2874
    %v2895 = vpack.c.b16 %v2877, %v2876
    %v2896 = vpack.c.b16 %v2879, %v2878
    %v2897 = vpack.c.b16 %v2881, %v2880
    %2914 = vmatprep.subr.bf16.mxu0 0
    %2915 = vmatpush1.bf16.msra.mxu0 %v2882
    %2916 = vmatprep.subr.bf16.mxu0 0
    %2917 = vmatpush1.bf16.msra.mxu0 %v2883
    %2918 = vmatprep.subr.bf16.mxu0 0
    %2919 = vmatpush1.bf16.msra.mxu0 %v2884
    %2920 = vmatprep.subr.bf16.mxu0 0
    %2921 = vmatpush1.bf16.msra.mxu0 %v2885
    %2922 = vmatprep.subr.bf16.mxu0 0
    %2923 = vmatpush1.bf16.msra.mxu0 %v2886
    %2924 = vmatprep.subr.bf16.mxu0 0
    %2925 = vmatpush1.bf16.msra.mxu0 %v2887
    %2926 = vmatprep.subr.bf16.mxu0 0
    %2927 = vmatpush1.bf16.msra.mxu0 %v2888
    %2928 = vmatprep.subr.bf16.mxu0 0
    %2929 = vmatpush1.bf16.msra.mxu0 %v2889
    %2930 = vmatprep.subr.bf16.mxu0 0
    %2931 = vmatpush1.bf16.msra.mxu0 %v2890
    %2932 = vmatprep.subr.bf16.mxu0 0
    %2933 = vmatpush1.bf16.msra.mxu0 %v2891
    %2934 = vmatprep.subr.bf16.mxu0 0
    %2935 = vmatpush1.bf16.msra.mxu0 %v2892
    %2936 = vmatprep.subr.bf16.mxu0 0
    %2937 = vmatpush1.bf16.msra.mxu0 %v2893
    %2938 = vmatprep.subr.bf16.mxu0 0
    %2939 = vmatpush1.bf16.msra.mxu0 %v2894
    %2940 = vmatprep.subr.bf16.mxu0 0
    %2941 = vmatpush1.bf16.msra.mxu0 %v2895
    %2942 = vmatprep.subr.bf16.mxu0 0
    %2943 = vmatpush1.bf16.msra.mxu0 %v2896
    %2944 = vmatprep.subr.bf16.mxu0 0
    %2945 = vmatpush1.bf16.msra.mxu0 %v2897
    %2946 = vmatprep.mubr.bf16.mxu0 %v2652
    %2947 = vmatmul.mubr.bf16.gmra.mrb[0].mxu0 %v2651
    %v2948 = vpop.f32.mrb[0].mxu0
    %v2949 = vadd.f32 %v2816, %v2948
    %v2950 = vpop.f32.mrb[0].mxu0
    %v2951 = vpop.f32.mrb[0].mxu0
    %v2952 = vadd.f32 %v2816, %v2951
    %v2953 = vpop.f32.mrb[0].mxu0
    %2954 = vmatprep.mubr.bf16.mxu0 %v2654
    %2955 = vmatmul.mubr.bf16.gmra.mrb[0].mxu0 %v2653
    %v2956 = vpop.f32.mrb[0].mxu0
    %v2957 = vadd.f32 %v2816, %v2956
    %v2958 = vpop.f32.mrb[0].mxu0
    %v2959 = vpop.f32.mrb[0].mxu0
    %v2960 = vadd.f32 %v2816, %v2959
    %v2961 = vpop.f32.mrb[0].mxu0
    %2962 = vmatprep.mubr.bf16.mxu0 %v2656
    %2963 = vmatmul.mubr.bf16.gmra.mrb[0].mxu0 %v2655
    %v2964 = vpop.f32.mrb[0].mxu0
    %v2965 = vadd.f32 %v2816, %v2964
    %v2966 = vpop.f32.mrb[0].mxu0
    %v2967 = vpop.f32.mrb[0].mxu0
    %v2968 = vadd.f32 %v2816, %v2967
    %v2969 = vpop.f32.mrb[0].mxu0
    %2970 = vmatprep.mubr.bf16.mxu0 %v2658
    %2971 = vmatmul.mubr.bf16.gmra.mrb[0].mxu0 %v2657
    %v2972 = vpop.f32.mrb[0].mxu0
    %v2973 = vadd.f32 %v2816, %v2972
    %v2974 = vpop.f32.mrb[0].mxu0
    %v2975 = vpop.f32.mrb[0].mxu0
    %v2976 = vadd.f32 %v2816, %v2975
    %v2977 = vpop.f32.mrb[0].mxu0
    %2978 = vmatprep.mubr.bf16.mxu0 %v2660
    %2979 = vmatmul.mubr.bf16.gmra.mrb[0].mxu0 %v2659
    %v2980 = vpop.f32.mrb[0].mxu0
    %v2981 = vadd.f32 %v2816, %v2980
    %v2982 = vpop.f32.mrb[0].mxu0
    %v2983 = vpop.f32.mrb[0].mxu0
    %v2984 = vadd.f32 %v2816, %v2983
    %v2985 = vpop.f32.mrb[0].mxu0
    %2986 = vmatprep.mubr.bf16.mxu0 %v2662
    %2987 = vmatmul.mubr.bf16.gmra.mrb[0].mxu0 %v2661
    %v2988 = vpop.f32.mrb[0].mxu0
    %v2989 = vadd.f32 %v2816, %v2988
    %v2990 = vpop.f32.mrb[0].mxu0
    %v2991 = vpop.f32.mrb[0].mxu0
    %v2992 = vadd.f32 %v2816, %v2991
    %v2993 = vpop.f32.mrb[0].mxu0
    %2994 = vmatprep.mubr.bf16.mxu0 %v2664
    %2995 = vmatmul.mubr.bf16.gmra.mrb[0].mxu0 %v2663
    %v2996 = vpop.f32.mrb[0].mxu0
    %v2997 = vadd.f32 %v2816, %v2996
    %v2998 = vpop.f32.mrb[0].mxu0
    %v2999 = vpop.f32.mrb[0].mxu0
    %v3000 = vadd.f32 %v2816, %v2999
    %v3001 = vpop.f32.mrb[0].mxu0
    %3002 = vmatprep.mubr.bf16.mxu0 %v2666
    %3003 = vmatmul.mubr.bf16.gmra.mrb[0].mxu0 %v2665
    %v3004 = vpop.f32.mrb[0].mxu0
    %v3005 = vadd.f32 %v2816, %v3004
    %v3006 = vpop.f32.mrb[0].mxu0
    %v3007 = vpop.f32.mrb[0].mxu0
    %v3008 = vadd.f32 %v2816, %v3007
    %v3009 = vpop.f32.mrb[0].mxu0
    %3010 = vmatprep.mubr.bf16.mxu0 %v2668
    %3011 = vmatmul.mubr.bf16.gmra.mrb[0].mxu0 %v2667
    %v3012 = vpop.f32.mrb[0].mxu0
    %v3013 = vadd.f32 %v2816, %v3012
    %v3014 = vpop.f32.mrb[0].mxu0
    %v3015 = vpop.f32.mrb[0].mxu0
    %v3016 = vadd.f32 %v2816, %v3015
    %v3017 = vpop.f32.mrb[0].mxu0
    %3018 = vmatprep.mubr.bf16.mxu0 %v2670
    %3019 = vmatmul.mubr.bf16.gmra.mrb[0].mxu0 %v2669
    %v3020 = vpop.f32.mrb[0].mxu0
    %v3021 = vadd.f32 %v2816, %v3020
    %v3022 = vpop.f32.mrb[0].mxu0
    %v3023 = vpop.f32.mrb[0].mxu0
    %v3024 = vadd.f32 %v2816, %v3023
    %v3025 = vpop.f32.mrb[0].mxu0
    %3026 = vmatprep.mubr.bf16.mxu0 %v2672
    %3027 = vmatmul.mubr.bf16.gmra.mrb[0].mxu0 %v2671
    %v3028 = vpop.f32.mrb[0].mxu0
    %v3029 = vadd.f32 %v2816, %v3028
    %v3030 = vpop.f32.mrb[0].mxu0
    %v3031 = vpop.f32.mrb[0].mxu0
    %v3032 = vadd.f32 %v2816, %v3031
    %v3033 = vpop.f32.mrb[0].mxu0
    %3034 = vmatprep.mubr.bf16.mxu0 %v2674
    %3035 = vmatmul.mubr.bf16.gmra.mrb[0].mxu0 %v2673
    %v3036 = vpop.f32.mrb[0].mxu0
    %v3037 = vadd.f32 %v2816, %v3036
    %v3038 = vpop.f32.mrb[0].mxu0
    %v3039 = vpop.f32.mrb[0].mxu0
    %v3040 = vadd.f32 %v2816, %v3039
    %v3041 = vpop.f32.mrb[0].mxu0
    %3042 = vmatprep.mubr.bf16.mxu0 %v2676
    %3043 = vmatmul.mubr.bf16.gmra.mrb[0].mxu0 %v2675
    %v3044 = vpop.f32.mrb[0].mxu0
    %v3045 = vadd.f32 %v2816, %v3044
    %v3046 = vpop.f32.mrb[0].mxu0
    %v3047 = vpop.f32.mrb[0].mxu0
    %v3048 = vadd.f32 %v2816, %v3047
    %v3049 = vpop.f32.mrb[0].mxu0
    %3050 = vmatprep.mubr.bf16.mxu0 %v2678
    %3051 = vmatmul.mubr.bf16.gmra.mrb[0].mxu0 %v2677
    %v3052 = vpop.f32.mrb[0].mxu0
    %v3053 = vadd.f32 %v2816, %v3052
    %v3054 = vpop.f32.mrb[0].mxu0
    %v3055 = vpop.f32.mrb[0].mxu0
    %v3056 = vadd.f32 %v2816, %v3055
    %v3057 = vpop.f32.mrb[0].mxu0
    %3058 = vmatprep.mubr.bf16.mxu0 %v2680
    %3059 = vmatmul.mubr.bf16.gmra.mrb[0].mxu0 %v2679
    %v3060 = vpop.f32.mrb[0].mxu0
    %v3061 = vadd.f32 %v2816, %v3060
    %v3062 = vpop.f32.mrb[0].mxu0
    %v3063 = vpop.f32.mrb[0].mxu0
    %v3064 = vadd.f32 %v2816, %v3063
    %v3065 = vpop.f32.mrb[0].mxu0
    %3066 = vmatprep.mubr.bf16.mxu0 %v2682
    %3067 = vmatmul.mubr.bf16.gmra.mrb[0].mxu0 %v2681
    %v3068 = vpop.f32.mrb[0].mxu0
    %v3069 = vadd.f32 %v2816, %v3068
    %v3070 = vpop.f32.mrb[0].mxu0
    %v3071 = vpop.f32.mrb[0].mxu0
    %v3072 = vadd.f32 %v2816, %v3071
    %v3073 = vpop.f32.mrb[0].mxu0
    %3074 = vmatprep.mubr.bf16.mxu0 %v2684
    %3075 = vmatmul.mubr.bf16.gmra.mrb[0].mxu0 %v2683
    %v3076 = vpop.f32.mrb[0].mxu0
    %v3077 = vadd.f32 %v2816, %v3076
    %v3078 = vpop.f32.mrb[0].mxu0
    %v3079 = vpop.f32.mrb[0].mxu0
    %v3080 = vadd.f32 %v2816, %v3079
    %v3081 = vpop.f32.mrb[0].mxu0
    %3082 = vmatprep.mubr.bf16.mxu0 %v2686
    %3083 = vmatmul.mubr.bf16.gmra.mrb[0].mxu0 %v2685
    %v3084 = vpop.f32.mrb[0].mxu0
    %v3085 = vadd.f32 %v2816, %v3084
    %v3086 = vpop.f32.mrb[0].mxu0
    %v3087 = vpop.f32.mrb[0].mxu0
    %v3088 = vadd.f32 %v2816, %v3087
    %v3089 = vpop.f32.mrb[0].mxu0
    %3090 = vmatprep.mubr.bf16.mxu0 %v2688
    %3091 = vmatmul.mubr.bf16.gmra.mrb[0].mxu0 %v2687
    %v3092 = vpop.f32.mrb[0].mxu0
    %v3093 = vadd.f32 %v2816, %v3092
    %v3094 = vpop.f32.mrb[0].mxu0
    %v3095 = vpop.f32.mrb[0].mxu0
    %v3096 = vadd.f32 %v2816, %v3095
    %v3097 = vpop.f32.mrb[0].mxu0
    %3098 = vmatprep.mubr.bf16.mxu0 %v2690
    %3099 = vmatmul.mubr.bf16.gmra.mrb[0].mxu0 %v2689
    %v3100 = vpop.f32.mrb[0].mxu0
    %v3101 = vadd.f32 %v2816, %v3100
    %v3102 = vpop.f32.mrb[0].mxu0
    %v3103 = vpop.f32.mrb[0].mxu0
    %v3104 = vadd.f32 %v2816, %v3103
    %v3105 = vpop.f32.mrb[0].mxu0
    %3106 = vmatprep.mubr.bf16.mxu0 %v2692
    %3107 = vmatmul.mubr.bf16.gmra.mrb[0].mxu0 %v2691
    %v3108 = vpop.f32.mrb[0].mxu0
    %v3109 = vadd.f32 %v2816, %v3108
    %v3110 = vpop.f32.mrb[0].mxu0
    %v3111 = vpop.f32.mrb[0].mxu0
    %v3112 = vadd.f32 %v2816, %v3111
    %v3113 = vpop.f32.mrb[0].mxu0
    %3114 = vmatprep.mubr.bf16.mxu0 %v2694
    %3115 = vmatmul.mubr.bf16.gmra.mrb[0].mxu0 %v2693
    %v3116 = vpop.f32.mrb[0].mxu0
    %v3117 = vadd.f32 %v2816, %v3116
    %v3118 = vpop.f32.mrb[0].mxu0
    %v3119 = vpop.f32.mrb[0].mxu0
    %v3120 = vadd.f32 %v2816, %v3119
    %v3121 = vpop.f32.mrb[0].mxu0
    %3122 = vmatprep.mubr.bf16.mxu0 %v2696
    %3123 = vmatmul.mubr.bf16.gmra.mrb[0].mxu0 %v2695
    %v3124 = vpop.f32.mrb[0].mxu0
    %v3125 = vadd.f32 %v2816, %v3124
    %v3126 = vpop.f32.mrb[0].mxu0
    %v3127 = vpop.f32.mrb[0].mxu0
    %v3128 = vadd.f32 %v2816, %v3127
    %v3129 = vpop.f32.mrb[0].mxu0
    %3130 = vmatprep.mubr.bf16.mxu0 %v2698
    %3131 = vmatmul.mubr.bf16.gmra.mrb[0].mxu0 %v2697
    %v3132 = vpop.f32.mrb[0].mxu0
    %v3133 = vadd.f32 %v2816, %v3132
    %v3134 = vpop.f32.mrb[0].mxu0
    %v3135 = vpop.f32.mrb[0].mxu0
    %v3136 = vadd.f32 %v2816, %v3135
    %v3137 = vpop.f32.mrb[0].mxu0
    %3138 = vmatprep.mubr.bf16.mxu0 %v2700
    %3139 = vmatmul.mubr.bf16.gmra.mrb[0].mxu0 %v2699
    %v3140 = vpop.f32.mrb[0].mxu0
    %v3141 = vadd.f32 %v2816, %v3140
    %v3142 = vpop.f32.mrb[0].mxu0
    %v3143 = vpop.f32.mrb[0].mxu0
    %v3144 = vadd.f32 %v2816, %v3143
    %v3145 = vpop.f32.mrb[0].mxu0
    %3146 = vmatprep.mubr.bf16.mxu0 %v2702
    %3147 = vmatmul.mubr.bf16.gmra.mrb[0].mxu0 %v2701
    %v3148 = vpop.f32.mrb[0].mxu0
    %v3149 = vadd.f32 %v2816, %v3148
    %v3150 = vpop.f32.mrb[0].mxu0
    %v3151 = vpop.f32.mrb[0].mxu0
    %v3152 = vadd.f32 %v2816, %v3151
    %v3153 = vpop.f32.mrb[0].mxu0
    %3154 = vmatprep.mubr.bf16.mxu0 %v2704
    %3155 = vmatmul.mubr.bf16.gmra.mrb[0].mxu0 %v2703
    %v3156 = vpop.f32.mrb[0].mxu0
    %v3157 = vadd.f32 %v2816, %v3156
    %v3158 = vpop.f32.mrb[0].mxu0
    %v3159 = vpop.f32.mrb[0].mxu0
    %v3160 = vadd.f32 %v2816, %v3159
    %v3161 = vpop.f32.mrb[0].mxu0
    %3162 = vmatprep.mubr.bf16.mxu0 %v2706
    %3163 = vmatmul.mubr.bf16.gmra.mrb[0].mxu0 %v2705
    %v3164 = vpop.f32.mrb[0].mxu0
    %v3165 = vadd.f32 %v2816, %v3164
    %v3166 = vpop.f32.mrb[0].mxu0
    %v3167 = vpop.f32.mrb[0].mxu0
    %v3168 = vadd.f32 %v2816, %v3167
    %v3169 = vpop.f32.mrb[0].mxu0
    %3170 = vmatprep.mubr.bf16.mxu0 %v2708
    %3171 = vmatmul.mubr.bf16.gmra.mrb[0].mxu0 %v2707
    %v3172 = vpop.f32.mrb[0].mxu0
    %v3173 = vadd.f32 %v2816, %v3172
    %v3174 = vpop.f32.mrb[0].mxu0
    %v3175 = vpop.f32.mrb[0].mxu0
    %v3176 = vadd.f32 %v2816, %v3175
    %v3177 = vpop.f32.mrb[0].mxu0
    %3178 = vmatprep.mubr.bf16.mxu0 %v2710
    %3179 = vmatmul.mubr.bf16.gmra.mrb[0].mxu0 %v2709
    %v3180 = vpop.f32.mrb[0].mxu0
    %v3181 = vadd.f32 %v2816, %v3180
    %v3182 = vpop.f32.mrb[0].mxu0
    %v3183 = vpop.f32.mrb[0].mxu0
    %v3184 = vadd.f32 %v2816, %v3183
    %v3185 = vpop.f32.mrb[0].mxu0
    %3186 = vmatprep.mubr.bf16.mxu0 %v2712
    %3187 = vmatmul.mubr.bf16.gmra.mrb[0].mxu0 %v2711
    %v3188 = vpop.f32.mrb[0].mxu0
    %v3189 = vadd.f32 %v2816, %v3188
    %v3190 = vpop.f32.mrb[0].mxu0
    %v3191 = vpop.f32.mrb[0].mxu0
    %v3192 = vadd.f32 %v2816, %v3191
    %v3193 = vpop.f32.mrb[0].mxu0
    %3194 = vmatprep.mubr.bf16.mxu0 %v2714
    %3195 = vmatmul.mubr.bf16.gmra.mrb[0].mxu0 %v2713
    %v3196 = vpop.f32.mrb[0].mxu0
    %v3197 = vadd.f32 %v2816, %v3196
    %v3198 = vpop.f32.mrb[0].mxu0
    %v3199 = vpop.f32.mrb[0].mxu0
    %v3200 = vadd.f32 %v2816, %v3199
    %v3201 = vpop.f32.mrb[0].mxu0
    %3202 = vmatprep.mubr.bf16.mxu0 %v2716
    %3203 = vmatmul.mubr.bf16.gmra.mrb[0].mxu0 %v2715
    %v3204 = vpop.f32.mrb[0].mxu0
    %v3205 = vadd.f32 %v2816, %v3204
    %v3206 = vpop.f32.mrb[0].mxu0
    %v3207 = vpop.f32.mrb[0].mxu0
    %v3208 = vadd.f32 %v2816, %v3207
    %v3209 = vpop.f32.mrb[0].mxu0
    %3210 = vmatprep.mubr.bf16.mxu0 %v2718
    %3211 = vmatmul.mubr.bf16.gmra.mrb[0].mxu0 %v2717
    %v3212 = vpop.f32.mrb[0].mxu0
    %v3213 = vadd.f32 %v2816, %v3212
    %v3214 = vpop.f32.mrb[0].mxu0
    %v3215 = vpop.f32.mrb[0].mxu0
    %v3216 = vadd.f32 %v2816, %v3215
    %v3217 = vpop.f32.mrb[0].mxu0
    %3218 = vmatprep.mubr.bf16.mxu0 %v2720
    %3219 = vmatmul.mubr.bf16.gmra.mrb[0].mxu0 %v2719
    %v3220 = vpop.f32.mrb[0].mxu0
    %v3221 = vadd.f32 %v2816, %v3220
    %v3222 = vpop.f32.mrb[0].mxu0
    %v3223 = vpop.f32.mrb[0].mxu0
    %v3224 = vadd.f32 %v2816, %v3223
    %v3225 = vpop.f32.mrb[0].mxu0
    %3226 = vmatprep.mubr.bf16.mxu0 %v2722
    %3227 = vmatmul.mubr.bf16.gmra.mrb[0].mxu0 %v2721
    %v3228 = vpop.f32.mrb[0].mxu0
    %v3229 = vadd.f32 %v2816, %v3228
    %v3230 = vpop.f32.mrb[0].mxu0
    %v3231 = vpop.f32.mrb[0].mxu0
    %v3232 = vadd.f32 %v2816, %v3231
    %v3233 = vpop.f32.mrb[0].mxu0
    %3234 = vmatprep.mubr.bf16.mxu0 %v2724
    %3235 = vmatmul.mubr.bf16.gmra.mrb[0].mxu0 %v2723
    %v3236 = vpop.f32.mrb[0].mxu0
    %v3237 = vadd.f32 %v2816, %v3236
    %v3238 = vpop.f32.mrb[0].mxu0
    %v3239 = vpop.f32.mrb[0].mxu0
    %v3240 = vadd.f32 %v2816, %v3239
    %v3241 = vpop.f32.mrb[0].mxu0
    %3242 = vmatprep.mubr.bf16.mxu0 %v2726
    %3243 = vmatmul.mubr.bf16.gmra.mrb[0].mxu0 %v2725
    %v3244 = vpop.f32.mrb[0].mxu0
    %v3245 = vadd.f32 %v2816, %v3244
    %v3246 = vpop.f32.mrb[0].mxu0
    %v3247 = vpop.f32.mrb[0].mxu0
    %v3248 = vadd.f32 %v2816, %v3247
    %v3249 = vpop.f32.mrb[0].mxu0
    %3250 = vmatprep.mubr.bf16.mxu0 %v2728
    %3251 = vmatmul.mubr.bf16.gmra.mrb[0].mxu0 %v2727
    %v3252 = vpop.f32.mrb[0].mxu0
    %v3253 = vadd.f32 %v2816, %v3252
    %v3254 = vpop.f32.mrb[0].mxu0
    %v3255 = vpop.f32.mrb[0].mxu0
    %v3256 = vadd.f32 %v2816, %v3255
    %v3257 = vpop.f32.mrb[0].mxu0
    %3258 = vmatprep.mubr.bf16.mxu0 %v2730
    %3259 = vmatmul.mubr.bf16.gmra.mrb[0].mxu0 %v2729
    %v3260 = vpop.f32.mrb[0].mxu0
    %v3261 = vadd.f32 %v2816, %v3260
    %v3262 = vpop.f32.mrb[0].mxu0
    %v3263 = vpop.f32.mrb[0].mxu0
    %v3264 = vadd.f32 %v2816, %v3263
    %v3265 = vpop.f32.mrb[0].mxu0
    %3266 = vmatprep.mubr.bf16.mxu0 %v2732
    %3267 = vmatmul.mubr.bf16.gmra.mrb[0].mxu0 %v2731
    %v3268 = vpop.f32.mrb[0].mxu0
    %v3269 = vadd.f32 %v2816, %v3268
    %v3270 = vpop.f32.mrb[0].mxu0
    %v3271 = vpop.f32.mrb[0].mxu0
    %v3272 = vadd.f32 %v2816, %v3271
    %v3273 = vpop.f32.mrb[0].mxu0
    %3274 = vmatprep.mubr.bf16.mxu0 %v2734
    %3275 = vmatmul.mubr.bf16.gmra.mrb[0].mxu0 %v2733
    %v3276 = vpop.f32.mrb[0].mxu0
    %v3277 = vadd.f32 %v2816, %v3276
    %v3278 = vpop.f32.mrb[0].mxu0
    %v3279 = vpop.f32.mrb[0].mxu0
    %v3280 = vadd.f32 %v2816, %v3279
    %v3281 = vpop.f32.mrb[0].mxu0
    %3282 = vmatprep.mubr.bf16.mxu0 %v2736
    %3283 = vmatmul.mubr.bf16.gmra.mrb[0].mxu0 %v2735
    %v3284 = vpop.f32.mrb[0].mxu0
    %v3285 = vadd.f32 %v2816, %v3284
    %v3286 = vpop.f32.mrb[0].mxu0
    %v3287 = vpop.f32.mrb[0].mxu0
    %v3288 = vadd.f32 %v2816, %v3287
    %v3289 = vpop.f32.mrb[0].mxu0
    %3290 = vmatprep.mubr.bf16.mxu0 %v2738
    %3291 = vmatmul.mubr.bf16.gmra.mrb[0].mxu0 %v2737
    %v3292 = vpop.f32.mrb[0].mxu0
    %v3293 = vadd.f32 %v2816, %v3292
    %v3294 = vpop.f32.mrb[0].mxu0
    %v3295 = vpop.f32.mrb[0].mxu0
    %v3296 = vadd.f32 %v2816, %v3295
    %v3297 = vpop.f32.mrb[0].mxu0
    %3298 = vmatprep.mubr.bf16.mxu0 %v2740
    %3299 = vmatmul.mubr.bf16.gmra.mrb[0].mxu0 %v2739
    %v3300 = vpop.f32.mrb[0].mxu0
    %v3301 = vadd.f32 %v2816, %v3300
    %v3302 = vpop.f32.mrb[0].mxu0
    %v3303 = vpop.f32.mrb[0].mxu0
    %v3304 = vadd.f32 %v2816, %v3303
    %v3305 = vpop.f32.mrb[0].mxu0
    %3306 = vmatprep.mubr.bf16.mxu0 %v2742
    %3307 = vmatmul.mubr.bf16.gmra.mrb[0].mxu0 %v2741
    %v3308 = vpop.f32.mrb[0].mxu0
    %v3309 = vadd.f32 %v2816, %v3308
    %v3310 = vpop.f32.mrb[0].mxu0
    %v3311 = vpop.f32.mrb[0].mxu0
    %v3312 = vadd.f32 %v2816, %v3311
    %v3313 = vpop.f32.mrb[0].mxu0
    %3314 = vmatprep.mubr.bf16.mxu0 %v2744
    %3315 = vmatmul.mubr.bf16.gmra.mrb[0].mxu0 %v2743
    %v3316 = vpop.f32.mrb[0].mxu0
    %v3317 = vadd.f32 %v2816, %v3316
    %v3318 = vpop.f32.mrb[0].mxu0
    %v3319 = vpop.f32.mrb[0].mxu0
    %v3320 = vadd.f32 %v2816, %v3319
    %v3321 = vpop.f32.mrb[0].mxu0
    %3322 = vmatprep.mubr.bf16.mxu0 %v2746
    %3323 = vmatmul.mubr.bf16.gmra.mrb[0].mxu0 %v2745
    %v3324 = vpop.f32.mrb[0].mxu0
    %v3325 = vadd.f32 %v2816, %v3324
    %v3326 = vpop.f32.mrb[0].mxu0
    %v3327 = vpop.f32.mrb[0].mxu0
    %v3328 = vadd.f32 %v2816, %v3327
    %v3329 = vpop.f32.mrb[0].mxu0
    %3330 = vmatprep.mubr.bf16.mxu0 %v2748
    %3331 = vmatmul.mubr.bf16.gmra.mrb[0].mxu0 %v2747
    %v3332 = vpop.f32.mrb[0].mxu0
    %v3333 = vadd.f32 %v2816, %v3332
    %v3334 = vpop.f32.mrb[0].mxu0
    %v3335 = vpop.f32.mrb[0].mxu0
    %v3336 = vadd.f32 %v2816, %v3335
    %v3337 = vpop.f32.mrb[0].mxu0
    %3338 = vmatprep.mubr.bf16.mxu0 %v2750
    %3339 = vmatmul.mubr.bf16.gmra.mrb[0].mxu0 %v2749
    %v3340 = vpop.f32.mrb[0].mxu0
    %v3341 = vadd.f32 %v2816, %v3340
    %v3342 = vpop.f32.mrb[0].mxu0
    %v3343 = vpop.f32.mrb[0].mxu0
    %v3344 = vadd.f32 %v2816, %v3343
    %v3345 = vpop.f32.mrb[0].mxu0
    %3346 = vmatprep.mubr.bf16.mxu0 %v2752
    %3347 = vmatmul.mubr.bf16.gmra.mrb[0].mxu0 %v2751
    %v3348 = vpop.f32.mrb[0].mxu0
    %v3349 = vadd.f32 %v2816, %v3348
    %v3350 = vpop.f32.mrb[0].mxu0
    %v3351 = vpop.f32.mrb[0].mxu0
    %v3352 = vadd.f32 %v2816, %v3351
    %v3353 = vpop.f32.mrb[0].mxu0
    %3354 = vmatprep.mubr.bf16.mxu0 %v2754
    %3355 = vmatmul.mubr.bf16.gmra.mrb[0].mxu0 %v2753
    %v3356 = vpop.f32.mrb[0].mxu0
    %v3357 = vadd.f32 %v2816, %v3356
    %v3358 = vpop.f32.mrb[0].mxu0
    %v3359 = vpop.f32.mrb[0].mxu0
    %v3360 = vadd.f32 %v2816, %v3359
    %v3361 = vpop.f32.mrb[0].mxu0
    %3362 = vmatprep.mubr.bf16.mxu0 %v2756
    %3363 = vmatmul.mubr.bf16.gmra.mrb[0].mxu0 %v2755
    %v3364 = vpop.f32.mrb[0].mxu0
    %v3365 = vadd.f32 %v2816, %v3364
    %v3366 = vpop.f32.mrb[0].mxu0
    %v3367 = vpop.f32.mrb[0].mxu0
    %v3368 = vadd.f32 %v2816, %v3367
    %v3369 = vpop.f32.mrb[0].mxu0
    %3370 = vmatprep.mubr.bf16.mxu0 %v2758
    %3371 = vmatmul.mubr.bf16.gmra.mrb[0].mxu0 %v2757
    %v3372 = vpop.f32.mrb[0].mxu0
    %v3373 = vadd.f32 %v2816, %v3372
    %v3374 = vpop.f32.mrb[0].mxu0
    %v3375 = vpop.f32.mrb[0].mxu0
    %v3376 = vadd.f32 %v2816, %v3375
    %v3377 = vpop.f32.mrb[0].mxu0
    %3378 = vmatprep.mubr.bf16.mxu0 %v2760
    %3379 = vmatmul.mubr.bf16.gmra.mrb[0].mxu0 %v2759
    %v3380 = vpop.f32.mrb[0].mxu0
    %v3381 = vadd.f32 %v2816, %v3380
    %v3382 = vpop.f32.mrb[0].mxu0
    %v3383 = vpop.f32.mrb[0].mxu0
    %v3384 = vadd.f32 %v2816, %v3383
    %v3385 = vpop.f32.mrb[0].mxu0
    %3386 = vmatprep.mubr.bf16.mxu0 %v2762
    %3387 = vmatmul.mubr.bf16.gmra.mrb[0].mxu0 %v2761
    %v3388 = vpop.f32.mrb[0].mxu0
    %v3389 = vadd.f32 %v2816, %v3388
    %v3390 = vpop.f32.mrb[0].mxu0
    %v3391 = vpop.f32.mrb[0].mxu0
    %v3392 = vadd.f32 %v2816, %v3391
    %v3393 = vpop.f32.mrb[0].mxu0
    %3394 = vmatprep.mubr.bf16.mxu0 %v2764
    %3395 = vmatmul.mubr.bf16.gmra.mrb[0].mxu0 %v2763
    %v3396 = vpop.f32.mrb[0].mxu0
    %v3397 = vadd.f32 %v2816, %v3396
    %v3398 = vpop.f32.mrb[0].mxu0
    %v3399 = vpop.f32.mrb[0].mxu0
    %v3400 = vadd.f32 %v2816, %v3399
    %v3401 = vpop.f32.mrb[0].mxu0
    %3402 = vmatprep.mubr.bf16.mxu0 %v2766
    %3403 = vmatmul.mubr.bf16.gmra.mrb[0].mxu0 %v2765
    %v3404 = vpop.f32.mrb[0].mxu0
    %v3405 = vadd.f32 %v2816, %v3404
    %v3406 = vpop.f32.mrb[0].mxu0
    %v3407 = vpop.f32.mrb[0].mxu0
    %v3408 = vadd.f32 %v2816, %v3407
    %v3409 = vpop.f32.mrb[0].mxu0
    %3410 = vmatprep.mubr.bf16.mxu0 %v2768
    %3411 = vmatmul.mubr.bf16.gmra.mrb[0].mxu0 %v2767
    %v3412 = vpop.f32.mrb[0].mxu0
    %v3413 = vadd.f32 %v2816, %v3412
    %v3414 = vpop.f32.mrb[0].mxu0
    %v3415 = vpop.f32.mrb[0].mxu0
    %v3416 = vadd.f32 %v2816, %v3415
    %v3417 = vpop.f32.mrb[0].mxu0
    %3418 = vmatprep.mubr.bf16.mxu0 %v2770
    %3419 = vmatmul.mubr.bf16.gmra.mrb[0].mxu0 %v2769
    %v3420 = vpop.f32.mrb[0].mxu0
    %v3421 = vadd.f32 %v2816, %v3420
    %v3422 = vpop.f32.mrb[0].mxu0
    %v3423 = vpop.f32.mrb[0].mxu0
    %v3424 = vadd.f32 %v2816, %v3423
    %v3425 = vpop.f32.mrb[0].mxu0
    %3426 = vmatprep.mubr.bf16.mxu0 %v2772
    %3427 = vmatmul.mubr.bf16.gmra.mrb[0].mxu0 %v2771
    %v3428 = vpop.f32.mrb[0].mxu0
    %v3429 = vadd.f32 %v2816, %v3428
    %v3430 = vpop.f32.mrb[0].mxu0
    %v3431 = vpop.f32.mrb[0].mxu0
    %v3432 = vadd.f32 %v2816, %v3431
    %v3433 = vpop.f32.mrb[0].mxu0
    %3434 = vmatprep.mubr.bf16.mxu0 %v2774
    %3435 = vmatmul.mubr.bf16.gmra.mrb[0].mxu0 %v2773
    %v3436 = vpop.f32.mrb[0].mxu0
    %v3437 = vadd.f32 %v2816, %v3436
    %v3438 = vpop.f32.mrb[0].mxu0
    %v3439 = vpop.f32.mrb[0].mxu0
    %v3440 = vadd.f32 %v2816, %v3439
    %v3441 = vpop.f32.mrb[0].mxu0
    %3442 = vmatprep.mubr.bf16.mxu0 %v2776
    %3443 = vmatmul.mubr.bf16.gmra.mrb[0].mxu0 %v2775
    %v3444 = vpop.f32.mrb[0].mxu0
    %v3445 = vadd.f32 %v2816, %v3444
    %v3446 = vpop.f32.mrb[0].mxu0
    %v3447 = vpop.f32.mrb[0].mxu0
    %v3448 = vadd.f32 %v2816, %v3447
    %v3449 = vpop.f32.mrb[0].mxu0
    %3450 = vmatprep.mubr.bf16.mxu0 %v2778
    %3451 = vmatmul.mubr.bf16.gmra.mrb[0].mxu0 %v2777
    %v3452 = vpop.f32.mrb[0].mxu0
    %v3453 = vadd.f32 %v2816, %v3452
    %v3454 = vpop.f32.mrb[0].mxu0
    %v3455 = vpop.f32.mrb[0].mxu0
    %v3456 = vadd.f32 %v2816, %v3455
    %v3457 = vpop.f32.mrb[0].mxu0
    %3458 = vdwg.mxu0
    %v3459 = vmax.f32 %v2949, 0.0
    %v3460 = vmax.f32 %v2952, 0.0
    %v3461 = vmax.f32 %v2957, 0.0
    %v3462 = vmax.f32 %v2960, 0.0
    %v3463 = vmax.f32 %v2965, 0.0
    %v3464 = vmax.f32 %v2968, 0.0
    %v3465 = vmax.f32 %v2973, 0.0
    %v3466 = vmax.f32 %v2976, 0.0
    %v3467 = vmax.f32 %v2981, 0.0
    %v3468 = vmax.f32 %v2984, 0.0
    %v3469 = vmax.f32 %v2989, 0.0
    %v3470 = vmax.f32 %v2992, 0.0
    %v3471 = vmax.f32 %v2997, 0.0
    %v3472 = vmax.f32 %v3000, 0.0
    %v3473 = vmax.f32 %v3005, 0.0
    %v3474 = vmax.f32 %v3008, 0.0
    %v3475 = vmax.f32 %v3013, 0.0
    %v3476 = vmax.f32 %v3016, 0.0
    %v3477 = vmax.f32 %v3021, 0.0
    %v3478 = vmax.f32 %v3024, 0.0
    %v3479 = vmax.f32 %v3029, 0.0
    %v3480 = vmax.f32 %v3032, 0.0
    %v3481 = vmax.f32 %v3037, 0.0
    %v3482 = vmax.f32 %v3040, 0.0
    %v3483 = vmax.f32 %v3045, 0.0
    %v3484 = vmax.f32 %v3048, 0.0
    %v3485 = vmax.f32 %v3053, 0.0
    %v3486 = vmax.f32 %v3056, 0.0
    %v3487 = vmax.f32 %v3061, 0.0
    %v3488 = vmax.f32 %v3064, 0.0
    %v3489 = vmax.f32 %v3069, 0.0
    %v3490 = vmax.f32 %v3072, 0.0
    %v3491 = vmax.f32 %v3077, 0.0
    %v3492 = vmax.f32 %v3080, 0.0
    %v3493 = vmax.f32 %v3085, 0.0
    %v3494 = vmax.f32 %v3088, 0.0
    %v3495 = vmax.f32 %v3093, 0.0
    %v3496 = vmax.f32 %v3096, 0.0
    %v3497 = vmax.f32 %v3101, 0.0
    %v3498 = vmax.f32 %v3104, 0.0
    %v3499 = vmax.f32 %v3109, 0.0
    %v3500 = vmax.f32 %v3112, 0.0
    %v3501 = vmax.f32 %v3117, 0.0
    %v3502 = vmax.f32 %v3120, 0.0
    %v3503 = vmax.f32 %v3125, 0.0
    %v3504 = vmax.f32 %v3128, 0.0
    %v3505 = vmax.f32 %v3133, 0.0
    %v3506 = vmax.f32 %v3136, 0.0
    %v3507 = vmax.f32 %v3141, 0.0
    %v3508 = vmax.f32 %v3144, 0.0
    %v3509 = vmax.f32 %v3149, 0.0
    %v3510 = vmax.f32 %v3152, 0.0
    %v3511 = vmax.f32 %v3157, 0.0
    %v3512 = vmax.f32 %v3160, 0.0
    %v3513 = vmax.f32 %v3165, 0.0
    %v3514 = vmax.f32 %v3168, 0.0
    %v3515 = vmax.f32 %v3173, 0.0
    %v3516 = vmax.f32 %v3176, 0.0
    %v3517 = vmax.f32 %v3181, 0.0
    %v3518 = vmax.f32 %v3184, 0.0
    %v3519 = vmax.f32 %v3189, 0.0
    %v3520 = vmax.f32 %v3192, 0.0
    %v3521 = vmax.f32 %v3197, 0.0
    %v3522 = vmax.f32 %v3200, 0.0
    %v3523 = vmax.f32 %v3205, 0.0
    %v3524 = vmax.f32 %v3208, 0.0
    %v3525 = vmax.f32 %v3213, 0.0
    %v3526 = vmax.f32 %v3216, 0.0
    %v3527 = vmax.f32 %v3221, 0.0
    %v3528 = vmax.f32 %v3224, 0.0
    %v3529 = vmax.f32 %v3229, 0.0
    %v3530 = vmax.f32 %v3232, 0.0
    %v3531 = vmax.f32 %v3237, 0.0
    %v3532 = vmax.f32 %v3240, 0.0
    %v3533 = vmax.f32 %v3245, 0.0
    %v3534 = vmax.f32 %v3248, 0.0
    %v3535 = vmax.f32 %v3253, 0.0
    %v3536 = vmax.f32 %v3256, 0.0
    %v3537 = vmax.f32 %v3261, 0.0
    %v3538 = vmax.f32 %v3264, 0.0
    %v3539 = vmax.f32 %v3269, 0.0
    %v3540 = vmax.f32 %v3272, 0.0
    %v3541 = vmax.f32 %v3277, 0.0
    %v3542 = vmax.f32 %v3280, 0.0
    %v3543 = vmax.f32 %v3285, 0.0
    %v3544 = vmax.f32 %v3288, 0.0
    %v3545 = vmax.f32 %v3293, 0.0
    %v3546 = vmax.f32 %v3296, 0.0
    %v3547 = vmax.f32 %v3301, 0.0
    %v3548 = vmax.f32 %v3304, 0.0
    %v3549 = vmax.f32 %v3309, 0.0
    %v3550 = vmax.f32 %v3312, 0.0
    %v3551 = vmax.f32 %v3317, 0.0
    %v3552 = vmax.f32 %v3320, 0.0
    %v3553 = vmax.f32 %v3325, 0.0
    %v3554 = vmax.f32 %v3328, 0.0
    %v3555 = vmax.f32 %v3333, 0.0
    %v3556 = vmax.f32 %v3336, 0.0
    %v3557 = vmax.f32 %v3341, 0.0
    %v3558 = vmax.f32 %v3344, 0.0
    %v3559 = vmax.f32 %v3349, 0.0
    %v3560 = vmax.f32 %v3352, 0.0
    %v3561 = vmax.f32 %v3357, 0.0
    %v3562 = vmax.f32 %v3360, 0.0
    %v3563 = vmax.f32 %v3365, 0.0
    %v3564 = vmax.f32 %v3368, 0.0
    %v3565 = vmax.f32 %v3373, 0.0
    %v3566 = vmax.f32 %v3376, 0.0
    %v3567 = vmax.f32 %v3381, 0.0
    %v3568 = vmax.f32 %v3384, 0.0
    %v3569 = vmax.f32 %v3389, 0.0
    %v3570 = vmax.f32 %v3392, 0.0
    %v3571 = vmax.f32 %v3397, 0.0
    %v3572 = vmax.f32 %v3400, 0.0
    %v3573 = vmax.f32 %v3405, 0.0
    %v3574 = vmax.f32 %v3408, 0.0
    %v3575 = vmax.f32 %v3413, 0.0
    %v3576 = vmax.f32 %v3416, 0.0
    %v3577 = vmax.f32 %v3421, 0.0
    %v3578 = vmax.f32 %v3424, 0.0
    %v3579 = vmax.f32 %v3429, 0.0
    %v3580 = vmax.f32 %v3432, 0.0
    %v3581 = vmax.f32 %v3437, 0.0
    %v3582 = vmax.f32 %v3440, 0.0
    %v3583 = vmax.f32 %v3445, 0.0
    %v3584 = vmax.f32 %v3448, 0.0
    %v3585 = vmax.f32 %v3453, 0.0
    %v3586 = vmax.f32 %v3456, 0.0
    %v3587 = vpack.c.bf16 %v3460, %v3459
    %v3588 = vpack.c.bf16 %v3462, %v3461
    %v3589 = vpack.c.bf16 %v3464, %v3463
    %v3590 = vpack.c.bf16 %v3466, %v3465
    %v3591 = vpack.c.bf16 %v3468, %v3467
    %v3592 = vpack.c.bf16 %v3470, %v3469
    %v3593 = vpack.c.bf16 %v3472, %v3471
    %v3594 = vpack.c.bf16 %v3474, %v3473
    %v3595 = vpack.c.bf16 %v3476, %v3475
    %v3596 = vpack.c.bf16 %v3478, %v3477
    %v3597 = vpack.c.bf16 %v3480, %v3479
    %v3598 = vpack.c.bf16 %v3482, %v3481
    %v3599 = vpack.c.bf16 %v3484, %v3483
    %v3600 = vpack.c.bf16 %v3486, %v3485
    %v3601 = vpack.c.bf16 %v3488, %v3487
    %v3602 = vpack.c.bf16 %v3490, %v3489
    %v3603 = vpack.c.bf16 %v3492, %v3491
    %v3604 = vpack.c.bf16 %v3494, %v3493
    %v3605 = vpack.c.bf16 %v3496, %v3495
    %v3606 = vpack.c.bf16 %v3498, %v3497
    %v3607 = vpack.c.bf16 %v3500, %v3499
    %v3608 = vpack.c.bf16 %v3502, %v3501
    %v3609 = vpack.c.bf16 %v3504, %v3503
    %v3610 = vpack.c.bf16 %v3506, %v3505
    %v3611 = vpack.c.bf16 %v3508, %v3507
    %v3612 = vpack.c.bf16 %v3510, %v3509
    %v3613 = vpack.c.bf16 %v3512, %v3511
    %v3614 = vpack.c.bf16 %v3514, %v3513
    %v3615 = vpack.c.bf16 %v3516, %v3515
    %v3616 = vpack.c.bf16 %v3518, %v3517
    %v3617 = vpack.c.bf16 %v3520, %v3519
    %v3618 = vpack.c.bf16 %v3522, %v3521
    %v3619 = vpack.c.bf16 %v3524, %v3523
    %v3620 = vpack.c.bf16 %v3526, %v3525
    %v3621 = vpack.c.bf16 %v3528, %v3527
    %v3622 = vpack.c.bf16 %v3530, %v3529
    %v3623 = vpack.c.bf16 %v3532, %v3531
    %v3624 = vpack.c.bf16 %v3534, %v3533
    %v3625 = vpack.c.bf16 %v3536, %v3535
    %v3626 = vpack.c.bf16 %v3538, %v3537
    %v3627 = vpack.c.bf16 %v3540, %v3539
    %v3628 = vpack.c.bf16 %v3542, %v3541
    %v3629 = vpack.c.bf16 %v3544, %v3543
    %v3630 = vpack.c.bf16 %v3546, %v3545
    %v3631 = vpack.c.bf16 %v3548, %v3547
    %v3632 = vpack.c.bf16 %v3550, %v3549
    %v3633 = vpack.c.bf16 %v3552, %v3551
    %v3634 = vpack.c.bf16 %v3554, %v3553
    %v3635 = vpack.c.bf16 %v3556, %v3555
    %v3636 = vpack.c.bf16 %v3558, %v3557
    %v3637 = vpack.c.bf16 %v3560, %v3559
    %v3638 = vpack.c.bf16 %v3562, %v3561
    %v3639 = vpack.c.bf16 %v3564, %v3563
    %v3640 = vpack.c.bf16 %v3566, %v3565
    %v3641 = vpack.c.bf16 %v3568, %v3567
    %v3642 = vpack.c.bf16 %v3570, %v3569
    %v3643 = vpack.c.bf16 %v3572, %v3571
    %v3644 = vpack.c.bf16 %v3574, %v3573
    %v3645 = vpack.c.bf16 %v3576, %v3575
    %v3646 = vpack.c.bf16 %v3578, %v3577
    %v3647 = vpack.c.bf16 %v3580, %v3579
    %v3648 = vpack.c.bf16 %v3582, %v3581
    %v3649 = vpack.c.bf16 %v3584, %v3583
    %v3650 = vpack.c.bf16 %v3586, %v3585
    %v3651 = vld [vmem:[%s7] sm:$0x1]
    %v3652 = vld [vmem:[#allocation2] sm:$0x1]
    %3654 = vset.pattern.permute.xlu0 0
    %3655 = vperm.xlu0 %3654, %v3652
    %v3656 = vpop.permute.xlu0 %3655
    %v3658 = vlaneseq
    %v3659 = vshrl.u32 %v3658, 7
    %v3660 = vsub.s32 0, %v3659
    %v3661 = vrot.slane %v3656, %v3660
    %3662 = vmatprep.subr.bf16.mxu0 0
    %3663 = vmatpush1.bf16.xpose.msra.mxu0 %v3587
    %3664 = vmatprep.subr.bf16.mxu0 0
    %3665 = vmatpush1.bf16.xpose.msra.mxu0 %v3588
    %3666 = vmatprep.subr.bf16.mxu0 0
    %3667 = vmatpush1.bf16.xpose.msra.mxu0 %v3589
    %3668 = vmatprep.subr.bf16.mxu0 0
    %3669 = vmatpush1.bf16.xpose.msra.mxu0 %v3590
    %3670 = vmatprep.subr.bf16.mxu0 0
    %3671 = vmatpush1.bf16.xpose.msra.mxu0 %v3591
    %3672 = vmatprep.subr.bf16.mxu0 0
    %3673 = vmatpush1.bf16.xpose.msra.mxu0 %v3592
    %3674 = vmatprep.subr.bf16.mxu0 0
    %3675 = vmatpush1.bf16.xpose.msra.mxu0 %v3593
    %3676 = vmatprep.subr.bf16.mxu0 0
    %3677 = vmatpush1.bf16.xpose.msra.mxu0 %v3594
    %3678 = vmatprep.subr.bf16.mxu0 0
    %3679 = vmatpush1.bf16.xpose.msra.mxu0 %v3595
    %3680 = vmatprep.subr.bf16.mxu0 0
    %3681 = vmatpush1.bf16.xpose.msra.mxu0 %v3596
    %3682 = vmatprep.subr.bf16.mxu0 0
    %3683 = vmatpush1.bf16.xpose.msra.mxu0 %v3597
    %3684 = vmatprep.subr.bf16.mxu0 0
    %3685 = vmatpush1.bf16.xpose.msra.mxu0 %v3598
    %3686 = vmatprep.subr.bf16.mxu0 0
    %3687 = vmatpush1.bf16.xpose.msra.mxu0 %v3599
    %3688 = vmatprep.subr.bf16.mxu0 0
    %3689 = vmatpush1.bf16.xpose.msra.mxu0 %v3600
    %3690 = vmatprep.subr.bf16.mxu0 0
    %3691 = vmatpush1.bf16.xpose.msra.mxu0 %v3601
    %3692 = vmatprep.subr.bf16.mxu0 0
    %3693 = vmatpush1.bf16.xpose.msra.mxu0 %v3602
    %3694 = vmatprep.mubr.bf16.mxu0 0
    %3695 = vmatmul.mubr.bf16.gmra.mrb[0].mxu0 %v3651
    %v3696 = vpop.f32.mrb[0].mxu0
    %v3697 = vadd.f32 %v3661, %v3696
    %v3698 = vpop.f32.mrb[0].mxu0
    %v3699 = vadd.f32 %v3661, %v3698
    %v3700 = vpop.f32.mrb[0].mxu0
    %v3701 = vpop.f32.mrb[0].mxu0
    %3702 = vdwg.mxu0
    %3703 = vmatprep.subr.bf16.mxu0 0
    %3704 = vmatpush1.bf16.xpose.msra.mxu0 %v3603
    %3705 = vmatprep.subr.bf16.mxu0 0
    %3706 = vmatpush1.bf16.xpose.msra.mxu0 %v3604
    %3707 = vmatprep.subr.bf16.mxu0 0
    %3708 = vmatpush1.bf16.xpose.msra.mxu0 %v3605
    %3709 = vmatprep.subr.bf16.mxu0 0
    %3710 = vmatpush1.bf16.xpose.msra.mxu0 %v3606
    %3711 = vmatprep.subr.bf16.mxu0 0
    %3712 = vmatpush1.bf16.xpose.msra.mxu0 %v3607
    %3713 = vmatprep.subr.bf16.mxu0 0
    %3714 = vmatpush1.bf16.xpose.msra.mxu0 %v3608
    %3715 = vmatprep.subr.bf16.mxu0 0
    %3716 = vmatpush1.bf16.xpose.msra.mxu0 %v3609
    %3717 = vmatprep.subr.bf16.mxu0 0
    %3718 = vmatpush1.bf16.xpose.msra.mxu0 %v3610
    %3719 = vmatprep.subr.bf16.mxu0 0
    %3720 = vmatpush1.bf16.xpose.msra.mxu0 %v3611
    %3721 = vmatprep.subr.bf16.mxu0 0
    %3722 = vmatpush1.bf16.xpose.msra.mxu0 %v3612
    %3723 = vmatprep.subr.bf16.mxu0 0
    %3724 = vmatpush1.bf16.xpose.msra.mxu0 %v3613
    %3725 = vmatprep.subr.bf16.mxu0 0
    %3726 = vmatpush1.bf16.xpose.msra.mxu0 %v3614
    %3727 = vmatprep.subr.bf16.mxu0 0
    %3728 = vmatpush1.bf16.xpose.msra.mxu0 %v3615
    %3729 = vmatprep.subr.bf16.mxu0 0
    %3730 = vmatpush1.bf16.xpose.msra.mxu0 %v3616
    %3731 = vmatprep.subr.bf16.mxu0 0
    %3732 = vmatpush1.bf16.xpose.msra.mxu0 %v3617
    %3733 = vmatprep.subr.bf16.mxu0 0
    %3734 = vmatpush1.bf16.xpose.msra.mxu0 %v3618
    %3735 = vmatprep.mubr.bf16.mxu0 0
    %3736 = vmatmul.mubr.bf16.gmra.mrb[0].mxu0 %v3651
    %v3737 = vpop.f32.mrb[0].mxu0
    %v3738 = vadd.f32 %v3661, %v3737
    %v3739 = vpop.f32.mrb[0].mxu0
    %v3740 = vadd.f32 %v3661, %v3739
    %v3741 = vpop.f32.mrb[0].mxu0
    %v3742 = vpop.f32.mrb[0].mxu0
    %3743 = vdwg.mxu0
    %3744 = vmatprep.subr.bf16.mxu0 0
    %3745 = vmatpush1.bf16.xpose.msra.mxu0 %v3619
    %3746 = vmatprep.subr.bf16.mxu0 0
    %3747 = vmatpush1.bf16.xpose.msra.mxu0 %v3620
    %3748 = vmatprep.subr.bf16.mxu0 0
    %3749 = vmatpush1.bf16.xpose.msra.mxu0 %v3621
    %3750 = vmatprep.subr.bf16.mxu0 0
    %3751 = vmatpush1.bf16.xpose.msra.mxu0 %v3622
    %3752 = vmatprep.subr.bf16.mxu0 0
    %3753 = vmatpush1.bf16.xpose.msra.mxu0 %v3623
    %3754 = vmatprep.subr.bf16.mxu0 0
    %3755 = vmatpush1.bf16.xpose.msra.mxu0 %v3624
    %3756 = vmatprep.subr.bf16.mxu0 0
    %3757 = vmatpush1.bf16.xpose.msra.mxu0 %v3625
    %3758 = vmatprep.subr.bf16.mxu0 0
    %3759 = vmatpush1.bf16.xpose.msra.mxu0 %v3626
    %3760 = vmatprep.subr.bf16.mxu0 0
    %3761 = vmatpush1.bf16.xpose.msra.mxu0 %v3627
    %3762 = vmatprep.subr.bf16.mxu0 0
    %3763 = vmatpush1.bf16.xpose.msra.mxu0 %v3628
    %3764 = vmatprep.subr.bf16.mxu0 0
    %3765 = vmatpush1.bf16.xpose.msra.mxu0 %v3629
    %3766 = vmatprep.subr.bf16.mxu0 0
    %3767 = vmatpush1.bf16.xpose.msra.mxu0 %v3630
    %3768 = vmatprep.subr.bf16.mxu0 0
    %3769 = vmatpush1.bf16.xpose.msra.mxu0 %v3631
    %3770 = vmatprep.subr.bf16.mxu0 0
    %3771 = vmatpush1.bf16.xpose.msra.mxu0 %v3632
    %3772 = vmatprep.subr.bf16.mxu0 0
    %3773 = vmatpush1.bf16.xpose.msra.mxu0 %v3633
    %3774 = vmatprep.subr.bf16.mxu0 0
    %3775 = vmatpush1.bf16.xpose.msra.mxu0 %v3634
    %3776 = vmatprep.mubr.bf16.mxu0 0
    %3777 = vmatmul.mubr.bf16.gmra.mrb[0].mxu0 %v3651
    %v3778 = vpop.f32.mrb[0].mxu0
    %v3779 = vadd.f32 %v3661, %v3778
    %v3780 = vpop.f32.mrb[0].mxu0
    %v3781 = vadd.f32 %v3661, %v3780
    %v3782 = vpop.f32.mrb[0].mxu0
    %v3783 = vpop.f32.mrb[0].mxu0
    %3784 = vdwg.mxu0
    %3785 = vmatprep.subr.bf16.mxu0 0
    %3786 = vmatpush1.bf16.xpose.msra.mxu0 %v3635
    %3787 = vmatprep.subr.bf16.mxu0 0
    %3788 = vmatpush1.bf16.xpose.msra.mxu0 %v3636
    %3789 = vmatprep.subr.bf16.mxu0 0
    %3790 = vmatpush1.bf16.xpose.msra.mxu0 %v3637
    %3791 = vmatprep.subr.bf16.mxu0 0
    %3792 = vmatpush1.bf16.xpose.msra.mxu0 %v3638
    %3793 = vmatprep.subr.bf16.mxu0 0
    %3794 = vmatpush1.bf16.xpose.msra.mxu0 %v3639
    %3795 = vmatprep.subr.bf16.mxu0 0
    %3796 = vmatpush1.bf16.xpose.msra.mxu0 %v3640
    %3797 = vmatprep.subr.bf16.mxu0 0
    %3798 = vmatpush1.bf16.xpose.msra.mxu0 %v3641
    %3799 = vmatprep.subr.bf16.mxu0 0
    %3800 = vmatpush1.bf16.xpose.msra.mxu0 %v3642
    %3801 = vmatprep.subr.bf16.mxu0 0
    %3802 = vmatpush1.bf16.xpose.msra.mxu0 %v3643
    %3803 = vmatprep.subr.bf16.mxu0 0
    %3804 = vmatpush1.bf16.xpose.msra.mxu0 %v3644
    %3805 = vmatprep.subr.bf16.mxu0 0
    %3806 = vmatpush1.bf16.xpose.msra.mxu0 %v3645
    %3807 = vmatprep.subr.bf16.mxu0 0
    %3808 = vmatpush1.bf16.xpose.msra.mxu0 %v3646
    %3809 = vmatprep.subr.bf16.mxu0 0
    %3810 = vmatpush1.bf16.xpose.msra.mxu0 %v3647
    %3811 = vmatprep.subr.bf16.mxu0 0
    %3812 = vmatpush1.bf16.xpose.msra.mxu0 %v3648
    %3813 = vmatprep.subr.bf16.mxu0 0
    %3814 = vmatpush1.bf16.xpose.msra.mxu0 %v3649
    %3815 = vmatprep.subr.bf16.mxu0 0
    %3816 = vmatpush1.bf16.xpose.msra.mxu0 %v3650
    %3817 = vmatprep.mubr.bf16.mxu0 0
    %3818 = vmatmul.mubr.bf16.gmra.mrb[0].mxu0 %v3651
    %v3819 = vpop.f32.mrb[0].mxu0
    %v3820 = vadd.f32 %v3661, %v3819
    %v3821 = vpop.f32.mrb[0].mxu0
    %v3822 = vadd.f32 %v3661, %v3821
    %v3823 = vpop.f32.mrb[0].mxu0
    %v3824 = vpop.f32.mrb[0].mxu0
    %3825 = vdwg.mxu0
    %v3834 = vcombine.low %v3697, %v3699
    %v3835 = vcombine.low %v3738, %v3740
    %v3836 = vcombine.low %v3779, %v3781
    %v3837 = vcombine.low %v3820, %v3822
    %v3839 = vunpack.c.l.s4 1966171168
    %v3840 = vunpack.c.0.s8 %v3839
    %v3841 = vlaneseq
    %v3842 = vshrl.u32 %v3841, 7
    %v3843 = vsub.s32 %v3840, %v3842
    %v3844 = vrot.slane %v3834, %v3843
    %v3846 = vunpack.c.l.s4 1966171168
    %v3847 = vunpack.c.0.s8 %v3846
    %v3848 = vlaneseq
    %v3849 = vshrl.u32 %v3848, 7
    %v3850 = vsub.s32 %v3847, %v3849
    %v3851 = vrot.slane %v3835, %v3850
    %v3853 = vunpack.c.l.s4 1966171168
    %v3854 = vunpack.c.0.s8 %v3853
    %v3855 = vlaneseq
    %v3856 = vshrl.u32 %v3855, 7
    %v3857 = vsub.s32 %v3854, %v3856
    %v3858 = vrot.slane %v3836, %v3857
    %v3860 = vunpack.c.l.s4 1966171168
    %v3861 = vunpack.c.0.s8 %v3860
    %v3862 = vlaneseq
    %v3863 = vshrl.u32 %v3862, 7
    %v3864 = vsub.s32 %v3861, %v3863
    %v3865 = vrot.slane %v3837, %v3864
    %v3866 = vcombine.low %v3844, %v3851
    %v3867 = vcombine.low %v3858, %v3865
    %v3869 = vunpack.c.l.s4 1966171168
    %v3870 = vunpack.c.0.s8 %v3869
    %v3871 = vlaneseq
    %v3872 = vshrl.u32 %v3871, 7
    %v3873 = vsub.s32 %v3870, %v3872
    %v3874 = vrot.slane %v3866, %v3873
    %v3876 = vunpack.c.l.s4 1966171168
    %v3877 = vunpack.c.0.s8 %v3876
    %v3878 = vlaneseq
    %v3879 = vshrl.u32 %v3878, 7
    %v3880 = vsub.s32 %v3877, %v3879
    %v3881 = vrot.slane %v3867, %v3880
    %v3882 = vcombine.low %v3874, %v3881
    %3884 = vst [vmem:[#allocation3] sm:$0xff] %v3882
    // Predicated region
    $region38: #{mlp_forward.1} parent=1 // pred_check
      _
    $region39: #{mlp_forward.1} parent=1 // pred_check_branch
      %3886 = sbr.rel (0) target = $region41
    $region40: #{mlp_forward.1} parent=1 // pred_region
      %s3888 = ssub.s32 128, 128
      %3889 = vsyncadd [#allocation4], %s3888
      %s3891 = sshll.u32 [#allocation3], 4
      %s3892 = int_to_ptr.vmem [resolvable:$true] %s3891
      %3894 = dma.vmem_to_hbm [thread:$0]  %s3892, 128, %s9, [#allocation4]
    $region41: #{mlp_forward.1} parent=1 // pred_fallthru
      _
    // Predicated region
    $region42: #{mlp_forward.1} parent=1 // pred_check
      _
    $region43: #{mlp_forward.1} parent=1 // pred_check_branch
      %3896 = sbr.rel (0) target = $region45
    $region44: #{mlp_forward.1} parent=1 // pred_region
      %3897 = dma.done [#allocation4], 128
    $region45: #{mlp_forward.1} parent=1 // pred_fallthru
      _
    %3898 = vsyncpa [#allocation4], 1

</llo_original>
